<compile_context>
chip_gen: v7x
topology: tpu7x:2x2x1
jax: 0.10.0
libtpu: 0.0.40
codegen_flags: <defaults>
</compile_context>

<pallas_src>
import functools

import jax
import jax.numpy as jnp
from jax.experimental import pallas as pl
from jax.experimental.pallas import tpu as pltpu

LANE = 128
MAX_WIDTH = 512  # widest hidden layer


def _round_up(n, m):
    return ((n + m - 1) // m) * m


def _fused_mlp_kernel(dims, offsets, n_layers, x_ref, *refs):
    """Fused 14-layer MLP on one batch tile.

    refs = (w_0, ..., w_{L-1}, packed_bias, out, h_scratch).
    `dims` is the static ((f_in, f_out), ...) per layer; `offsets` are the
    static lane offsets of each layer's bias inside the packed bias row.
    """
    w_refs = refs[:n_layers]
    b_ref = refs[n_layers]
    o_ref = refs[n_layers + 1]
    h_vmem = refs[n_layers + 2]

    h = x_ref[...].astype(jnp.float32)
    for i, (_, f_out) in enumerate(dims):
        w = w_refs[i][...]
        # Cast activations to the weight dtype for the MXU pass (bf16 weights
        # -> bf16 matmul); accumulate in f32.  Bias add + ReLU stay f32 so the
        # VPU epilogue is native on v5e as well.
        lhs = h.astype(w.dtype) if h.dtype != w.dtype else h
        acc = jnp.dot(lhs, w, preferred_element_type=jnp.float32)
        acc = acc + b_ref[:, offsets[i]:offsets[i] + f_out].astype(jnp.float32)
        if i < n_layers - 1:
            # TODO(synk): Dropout(p=0.1) sits right before this ReLU when
            # i == n_layers - 2; it is identity in eval/inference mode.
            # Training-mode stochastic masking (pltpu.prng_seed /
            # pltpu.prng_random_bits) is not implemented here.
            acc = jnp.maximum(acc, 0.0)
            # Stage the inter-layer activation through VMEM scratch so large
            # batch tiles (>= 128 rows) don't rely on regalloc to spill the
            # unrolled 14-layer chain.
            h_vmem[:, :f_out] = acc
            h = h_vmem[:, :f_out]
        else:
            o_ref[...] = acc.astype(o_ref.dtype)


@functools.partial(jax.jit, static_argnums=(3, 4))
def net_forward(x, weights, bias_packed, n_out, tile_b):
    """Fused forward pass.

    x: (B, n_in) f32.  weights: tuple of 14 (F_in, F_out) arrays (last layer
    fan_out already zero-padded to 128).  bias_packed: (1, sum_Fout).
    Returns (B, n_out) f32.
    """
    B, n_in = x.shape
    dims = tuple((int(w.shape[0]), int(w.shape[1])) for w in weights)
    n_layers = len(weights)
    out_pad = dims[-1][1]

    # Static lane offsets of each layer's bias in the packed bias row.
    offsets, off = [], 0
    for _, f_out in dims:
        offsets.append(off)
        off += f_out
    offsets = tuple(offsets)

    # Pad the batch up to a multiple of the tile (no-op when it already is).
    B_pad = _round_up(B, tile_b)
    if B_pad != B:
        x = jnp.pad(x, ((0, B_pad - B), (0, 0)))
    grid = (B_pad // tile_b,)

    # x / out tiles follow the grid step; weights & packed bias use a constant
    # block index, so they are fetched once and stay VMEM-resident.
    in_specs = [pl.BlockSpec((tile_b, n_in), lambda i: (i, 0))]
    for w in weights:
        in_specs.append(pl.BlockSpec(w.shape, lambda i: (0, 0)))
    in_specs.append(pl.BlockSpec(bias_packed.shape, lambda i: (0, 0)))

    flops = 2 * B_pad * sum(fi * fo for fi, fo in dims)
    bytes_accessed = (
        sum(w.size * w.dtype.itemsize for w in weights)
        + bias_packed.size * bias_packed.dtype.itemsize
        + x.size * x.dtype.itemsize
        + B_pad * out_pad * 4
    )

    kernel = functools.partial(_fused_mlp_kernel, dims, offsets, n_layers)

    out = pl.pallas_call(
        kernel,
        grid=grid,
        out_shape=jax.ShapeDtypeStruct((B_pad, out_pad), jnp.float32),
        in_specs=in_specs,
        out_specs=pl.BlockSpec((tile_b, out_pad), lambda i: (i, 0)),
        scratch_shapes=[pltpu.VMEM((tile_b, MAX_WIDTH), jnp.float32)],
        compiler_params=pltpu.CompilerParams(
            # Shards batch tiles across both v7x TensorCores; harmless on
            # v5e/v6e (single TC).
            dimension_semantics=("parallel",),
            # bf16 weights (~2.6 MiB) + double-buffered x/out tiles + scratch
            # fit comfortably; 32 MiB is safe even on v7x's 64 MiB VMEM.
            vmem_limit_bytes=32 * 1024 * 1024,
        ),
        cost_estimate=pl.CostEstimate(
            flops=flops, transcendentals=0, bytes_accessed=bytes_accessed),
    )(x, *weights, bias_packed)

    # Drop batch padding and the zero-padded output lanes.
    return out[:B, :n_out]


def init_params(key, n_in, n_out, neurons, dtype=jnp.float32):
    """Deterministic init mimicking PyTorch Linear defaults:
    U(-1/sqrt(fan_in), 1/sqrt(fan_in)) for both weight and bias."""
    dims = [
        (n_in, 128),
        (128, neurons),
        (neurons, neurons),
        (neurons, neurons),
        (neurons, neurons),
        (neurons, 512),
        (512, 512),
        (512, 512),
        (512, neurons),
        (neurons, neurons),
        (neurons, neurons),
        (neurons, neurons),
        (neurons, 128),
        (128, n_out),
    ]
    params = []
    for fan_in, fan_out in dims:
        key, kw, kb = jax.random.split(key, 3)
        bound = 1.0 / (fan_in ** 0.5)
        w = jax.random.uniform(kw, (fan_in, fan_out), dtype, -bound, bound)
        b = jax.random.uniform(kb, (1, fan_out), dtype, -bound, bound)
        params.append((w, b))
    return params


def prepare_params(params, param_dtype=jnp.bfloat16):
    """Pad the last layer's fan_out to a multiple of 128 (zeros, sliced off by
    the wrapper), cast to param_dtype, and pack all biases into one (1, sum)
    row.  Default bf16: halves the weight stream vs f32 with f32 accumulation
    in-kernel.  Pass jnp.float32 for exact PyTorch-eval parity.
    # TODO(synk): optional fp8 (v7x) / int8 (v5e/v6e) weight-only quant path
    # would further shrink the weight DMA; not implemented here."""
    weights, biases = [], []
    n = len(params)
    for i, (w, b) in enumerate(params):
        if i == n - 1 and w.shape[1] % LANE:
            pad = _round_up(w.shape[1], LANE) - w.shape[1]
            w = jnp.pad(w, ((0, 0), (0, pad)))
            b = jnp.pad(b, ((0, 0), (0, pad)))
        weights.append(w.astype(param_dtype))
        biases.append(b.astype(param_dtype))
    bias_packed = jnp.concatenate(biases, axis=1)
    return tuple(weights), bias_packed


def pick_tile_b(B):
    """256-row tiles for v6e/v7x MXU granularity (use 128 on v5e); for small
    batches fall back to the sublane-rounded batch itself."""
    return 256 if B >= 256 else _round_up(max(B, 1), 8)


if __name__ == "__main__":
    key = jax.random.PRNGKey(0)
    k_in, k_params = jax.random.split(key)

    # NOTE: B=8 leaves the MXU M-dim mostly idle; feed >=128 (v5e) / >=256
    # (v6e/v7x) rows per call in throughput workloads -- the batch grid +
    # resident weights above make that regime scale.
    B, n_in, n_out, neurons = 8, 32, 16, 256
    x = jax.random.normal(k_in, (B, n_in), jnp.float32)

    params = init_params(k_params, n_in, n_out, neurons)
    # bf16 weight stream (f32 accumulate in-kernel); pass jnp.float32 for
    # exact PyTorch f32-eval numerics.
    weights, bias_packed = prepare_params(params, jnp.bfloat16)

    out = net_forward(x, weights, bias_packed, n_out, pick_tile_b(B))
    jax.block_until_ready(out)
    assert out.shape == (B, n_out), out.shape
    print("KERNEL_OK")
</pallas_src>

<mosaic_0001>
module attributes {stable_mosaic.version = 11 : i64} {
  func.func @_fused_mlp_kernel(%arg0: i32, %arg1: memref<8x32xf32, #tpu.memory_space<vmem>>, %arg2: memref<32x128xbf16, #tpu.memory_space<vmem>>, %arg3: memref<128x256xbf16, #tpu.memory_space<vmem>>, %arg4: memref<256x256xbf16, #tpu.memory_space<vmem>>, %arg5: memref<256x256xbf16, #tpu.memory_space<vmem>>, %arg6: memref<256x256xbf16, #tpu.memory_space<vmem>>, %arg7: memref<256x512xbf16, #tpu.memory_space<vmem>>, %arg8: memref<512x512xbf16, #tpu.memory_space<vmem>>, %arg9: memref<512x512xbf16, #tpu.memory_space<vmem>>, %arg10: memref<512x256xbf16, #tpu.memory_space<vmem>>, %arg11: memref<256x256xbf16, #tpu.memory_space<vmem>>, %arg12: memref<256x256xbf16, #tpu.memory_space<vmem>>, %arg13: memref<256x256xbf16, #tpu.memory_space<vmem>>, %arg14: memref<256x128xbf16, #tpu.memory_space<vmem>>, %arg15: memref<128x128xbf16, #tpu.memory_space<vmem>>, %arg16: memref<1x3968xbf16, #tpu.memory_space<vmem>>, %arg17: memref<8x128xf32, #tpu.memory_space<vmem>>, %arg18: memref<8x512xf32, #tpu.memory_space<vmem>>) attributes {dimension_semantics = [#tpu.dimension_semantics<parallel>], iteration_bounds = array<i64: 1>, scalar_prefetch = 0 : i64, scratch_operands = 1 : i64, tpu.core_type = #tpu.core_type<tc>, window_params = [{transform_indices = @transform_0, window_bounds = array<i64: 8, 32>}, {pipeline_mode = #tpu.pipeline_mode<synchronous>, transform_indices = @transform_1, window_bounds = array<i64: 32, 128>}, {pipeline_mode = #tpu.pipeline_mode<synchronous>, transform_indices = @transform_2, window_bounds = array<i64: 128, 256>}, {pipeline_mode = #tpu.pipeline_mode<synchronous>, transform_indices = @transform_3, window_bounds = array<i64: 256, 256>}, {pipeline_mode = #tpu.pipeline_mode<synchronous>, transform_indices = @transform_4, window_bounds = array<i64: 256, 256>}, {pipeline_mode = #tpu.pipeline_mode<synchronous>, transform_indices = @transform_5, window_bounds = array<i64: 256, 256>}, {pipeline_mode = #tpu.pipeline_mode<synchronous>, transform_indices = @transform_6, window_bounds = array<i64: 256, 512>}, {pipeline_mode = #tpu.pipeline_mode<synchronous>, transform_indices = @transform_7, window_bounds = array<i64: 512, 512>}, {pipeline_mode = #tpu.pipeline_mode<synchronous>, transform_indices = @transform_8, window_bounds = array<i64: 512, 512>}, {pipeline_mode = #tpu.pipeline_mode<synchronous>, transform_indices = @transform_9, window_bounds = array<i64: 512, 256>}, {pipeline_mode = #tpu.pipeline_mode<synchronous>, transform_indices = @transform_10, window_bounds = array<i64: 256, 256>}, {pipeline_mode = #tpu.pipeline_mode<synchronous>, transform_indices = @transform_11, window_bounds = array<i64: 256, 256>}, {pipeline_mode = #tpu.pipeline_mode<synchronous>, transform_indices = @transform_12, window_bounds = array<i64: 256, 256>}, {pipeline_mode = #tpu.pipeline_mode<synchronous>, transform_indices = @transform_13, window_bounds = array<i64: 256, 128>}, {pipeline_mode = #tpu.pipeline_mode<synchronous>, transform_indices = @transform_14, window_bounds = array<i64: 128, 128>}, {pipeline_mode = #tpu.pipeline_mode<synchronous>, transform_indices = @transform_15, window_bounds = array<i64: 1, 3968>}, {transform_indices = @transform_16, window_bounds = array<i64: 8, 128>}]} {
    %c0 = arith.constant 0 : index
    %c0_0 = arith.constant 0 : index
    %0 = vector.load %arg1[%c0, %c0_0] : memref<8x32xf32, #tpu.memory_space<vmem>>, vector<8x32xf32>
    %c0_1 = arith.constant 0 : index
    %c0_2 = arith.constant 0 : index
    %1 = vector.load %arg2[%c0_1, %c0_2] : memref<32x128xbf16, #tpu.memory_space<vmem>>, vector<32x128xbf16>
    %2 = arith.truncf %0 : vector<8x32xf32> to vector<8x32xbf16>
    %cst = arith.constant dense<0.000000e+00> : vector<8x128xf32>
    %3 = tpu.matmul %2, %1, %cst {dimension_numbers = #tpu.dot_dimension_numbers<[1], [0], [0], [1], [0, 0, 1, 1], [], []>} : vector<8x32xbf16>, vector<32x128xbf16>, vector<8x128xf32> -> vector<8x128xf32>
    %c0_3 = arith.constant 0 : index
    %c0_4 = arith.constant 0 : index
    %4 = vector.load %arg16[%c0_3, %c0_4] : memref<1x3968xbf16, #tpu.memory_space<vmem>>, vector<1x128xbf16>
    %5 = arith.extf %4 : vector<1x128xbf16> to vector<1x128xf32>
    %6 = vector.broadcast %5 : vector<1x128xf32> to vector<8x128xf32>
    %7 = arith.addf %3, %6 : vector<8x128xf32>
    %cst_5 = arith.constant 0.000000e+00 : f32
    %8 = vector.broadcast %cst_5 : f32 to vector<8x128xf32>
    %9 = arith.maximumf %7, %8 : vector<8x128xf32>
    %c0_6 = arith.constant 0 : index
    %c0_7 = arith.constant 0 : index
    %10 = vector.load %arg18[%c0_6, %c0_7] : memref<8x512xf32, #tpu.memory_space<vmem>>, vector<8x128xf32>
    tpu.vector_store %arg18[%c0_6, %c0_7], %9 {strides = array<i32>} : memref<8x512xf32, #tpu.memory_space<vmem>>, vector<8x128xf32>,
    %c0_8 = arith.constant 0 : index
    %c0_9 = arith.constant 0 : index
    %11 = vector.load %arg18[%c0_8, %c0_9] : memref<8x512xf32, #tpu.memory_space<vmem>>, vector<8x128xf32>
    %c0_10 = arith.constant 0 : index
    %c0_11 = arith.constant 0 : index
    %12 = vector.load %arg3[%c0_10, %c0_11] : memref<128x256xbf16, #tpu.memory_space<vmem>>, vector<128x256xbf16>
    %13 = arith.truncf %11 : vector<8x128xf32> to vector<8x128xbf16>
    %cst_12 = arith.constant dense<0.000000e+00> : vector<8x256xf32>
    %14 = tpu.matmul %13, %12, %cst_12 {dimension_numbers = #tpu.dot_dimension_numbers<[1], [0], [0], [1], [0, 0, 1, 1], [], []>} : vector<8x128xbf16>, vector<128x256xbf16>, vector<8x256xf32> -> vector<8x256xf32>
    %c0_13 = arith.constant 0 : index
    %c128 = arith.constant 128 : index
    %15 = vector.load %arg16[%c0_13, %c128] : memref<1x3968xbf16, #tpu.memory_space<vmem>>, vector<1x256xbf16>
    %16 = arith.extf %15 : vector<1x256xbf16> to vector<1x256xf32>
    %17 = vector.broadcast %16 : vector<1x256xf32> to vector<8x256xf32>
    %18 = arith.addf %14, %17 : vector<8x256xf32>
    %cst_14 = arith.constant 0.000000e+00 : f32
    %19 = vector.broadcast %cst_14 : f32 to vector<8x256xf32>
    %20 = arith.maximumf %18, %19 : vector<8x256xf32>
    %c0_15 = arith.constant 0 : index
    %c0_16 = arith.constant 0 : index
    %21 = vector.load %arg18[%c0_15, %c0_16] : memref<8x512xf32, #tpu.memory_space<vmem>>, vector<8x256xf32>
    tpu.vector_store %arg18[%c0_15, %c0_16], %20 {strides = array<i32>} : memref<8x512xf32, #tpu.memory_space<vmem>>, vector<8x256xf32>,
    %c0_17 = arith.constant 0 : index
    %c0_18 = arith.constant 0 : index
    %22 = vector.load %arg18[%c0_17, %c0_18] : memref<8x512xf32, #tpu.memory_space<vmem>>, vector<8x256xf32>
    %c0_19 = arith.constant 0 : index
    %c0_20 = arith.constant 0 : index
    %23 = vector.load %arg4[%c0_19, %c0_20] : memref<256x256xbf16, #tpu.memory_space<vmem>>, vector<256x256xbf16>
    %24 = arith.truncf %22 : vector<8x256xf32> to vector<8x256xbf16>
    %cst_21 = arith.constant dense<0.000000e+00> : vector<8x256xf32>
    %25 = tpu.matmul %24, %23, %cst_21 {dimension_numbers = #tpu.dot_dimension_numbers<[1], [0], [0], [1], [0, 0, 1, 1], [], []>} : vector<8x256xbf16>, vector<256x256xbf16>, vector<8x256xf32> -> vector<8x256xf32>
    %c0_22 = arith.constant 0 : index
    %c384 = arith.constant 384 : index
    %26 = vector.load %arg16[%c0_22, %c384] : memref<1x3968xbf16, #tpu.memory_space<vmem>>, vector<1x256xbf16>
    %27 = arith.extf %26 : vector<1x256xbf16> to vector<1x256xf32>
    %28 = vector.broadcast %27 : vector<1x256xf32> to vector<8x256xf32>
    %29 = arith.addf %25, %28 : vector<8x256xf32>
    %cst_23 = arith.constant 0.000000e+00 : f32
    %30 = vector.broadcast %cst_23 : f32 to vector<8x256xf32>
    %31 = arith.maximumf %29, %30 : vector<8x256xf32>
    %c0_24 = arith.constant 0 : index
    %c0_25 = arith.constant 0 : index
    %32 = vector.load %arg18[%c0_24, %c0_25] : memref<8x512xf32, #tpu.memory_space<vmem>>, vector<8x256xf32>
    tpu.vector_store %arg18[%c0_24, %c0_25], %31 {strides = array<i32>} : memref<8x512xf32, #tpu.memory_space<vmem>>, vector<8x256xf32>,
    %c0_26 = arith.constant 0 : index
    %c0_27 = arith.constant 0 : index
    %33 = vector.load %arg18[%c0_26, %c0_27] : memref<8x512xf32, #tpu.memory_space<vmem>>, vector<8x256xf32>
    %c0_28 = arith.constant 0 : index
    %c0_29 = arith.constant 0 : index
    %34 = vector.load %arg5[%c0_28, %c0_29] : memref<256x256xbf16, #tpu.memory_space<vmem>>, vector<256x256xbf16>
    %35 = arith.truncf %33 : vector<8x256xf32> to vector<8x256xbf16>
    %cst_30 = arith.constant dense<0.000000e+00> : vector<8x256xf32>
    %36 = tpu.matmul %35, %34, %cst_30 {dimension_numbers = #tpu.dot_dimension_numbers<[1], [0], [0], [1], [0, 0, 1, 1], [], []>} : vector<8x256xbf16>, vector<256x256xbf16>, vector<8x256xf32> -> vector<8x256xf32>
    %c0_31 = arith.constant 0 : index
    %c640 = arith.constant 640 : index
    %37 = vector.load %arg16[%c0_31, %c640] : memref<1x3968xbf16, #tpu.memory_space<vmem>>, vector<1x256xbf16>
    %38 = arith.extf %37 : vector<1x256xbf16> to vector<1x256xf32>
    %39 = vector.broadcast %38 : vector<1x256xf32> to vector<8x256xf32>
    %40 = arith.addf %36, %39 : vector<8x256xf32>
    %cst_32 = arith.constant 0.000000e+00 : f32
    %41 = vector.broadcast %cst_32 : f32 to vector<8x256xf32>
    %42 = arith.maximumf %40, %41 : vector<8x256xf32>
    %c0_33 = arith.constant 0 : index
    %c0_34 = arith.constant 0 : index
    %43 = vector.load %arg18[%c0_33, %c0_34] : memref<8x512xf32, #tpu.memory_space<vmem>>, vector<8x256xf32>
    tpu.vector_store %arg18[%c0_33, %c0_34], %42 {strides = array<i32>} : memref<8x512xf32, #tpu.memory_space<vmem>>, vector<8x256xf32>,
    %c0_35 = arith.constant 0 : index
    %c0_36 = arith.constant 0 : index
    %44 = vector.load %arg18[%c0_35, %c0_36] : memref<8x512xf32, #tpu.memory_space<vmem>>, vector<8x256xf32>
    %c0_37 = arith.constant 0 : index
    %c0_38 = arith.constant 0 : index
    %45 = vector.load %arg6[%c0_37, %c0_38] : memref<256x256xbf16, #tpu.memory_space<vmem>>, vector<256x256xbf16>
    %46 = arith.truncf %44 : vector<8x256xf32> to vector<8x256xbf16>
    %cst_39 = arith.constant dense<0.000000e+00> : vector<8x256xf32>
    %47 = tpu.matmul %46, %45, %cst_39 {dimension_numbers = #tpu.dot_dimension_numbers<[1], [0], [0], [1], [0, 0, 1, 1], [], []>} : vector<8x256xbf16>, vector<256x256xbf16>, vector<8x256xf32> -> vector<8x256xf32>
    %c0_40 = arith.constant 0 : index
    %c896 = arith.constant 896 : index
    %48 = vector.load %arg16[%c0_40, %c896] : memref<1x3968xbf16, #tpu.memory_space<vmem>>, vector<1x256xbf16>
    %49 = arith.extf %48 : vector<1x256xbf16> to vector<1x256xf32>
    %50 = vector.broadcast %49 : vector<1x256xf32> to vector<8x256xf32>
    %51 = arith.addf %47, %50 : vector<8x256xf32>
    %cst_41 = arith.constant 0.000000e+00 : f32
    %52 = vector.broadcast %cst_41 : f32 to vector<8x256xf32>
    %53 = arith.maximumf %51, %52 : vector<8x256xf32>
    %c0_42 = arith.constant 0 : index
    %c0_43 = arith.constant 0 : index
    %54 = vector.load %arg18[%c0_42, %c0_43] : memref<8x512xf32, #tpu.memory_space<vmem>>, vector<8x256xf32>
    tpu.vector_store %arg18[%c0_42, %c0_43], %53 {strides = array<i32>} : memref<8x512xf32, #tpu.memory_space<vmem>>, vector<8x256xf32>,
    %c0_44 = arith.constant 0 : index
    %c0_45 = arith.constant 0 : index
    %55 = vector.load %arg18[%c0_44, %c0_45] : memref<8x512xf32, #tpu.memory_space<vmem>>, vector<8x256xf32>
    %c0_46 = arith.constant 0 : index
    %c0_47 = arith.constant 0 : index
    %56 = vector.load %arg7[%c0_46, %c0_47] : memref<256x512xbf16, #tpu.memory_space<vmem>>, vector<256x512xbf16>
    %57 = arith.truncf %55 : vector<8x256xf32> to vector<8x256xbf16>
    %cst_48 = arith.constant dense<0.000000e+00> : vector<8x512xf32>
    %58 = tpu.matmul %57, %56, %cst_48 {dimension_numbers = #tpu.dot_dimension_numbers<[1], [0], [0], [1], [0, 0, 1, 1], [], []>} : vector<8x256xbf16>, vector<256x512xbf16>, vector<8x512xf32> -> vector<8x512xf32>
    %c0_49 = arith.constant 0 : index
    %c1152 = arith.constant 1152 : index
    %59 = vector.load %arg16[%c0_49, %c1152] : memref<1x3968xbf16, #tpu.memory_space<vmem>>, vector<1x512xbf16>
    %60 = arith.extf %59 : vector<1x512xbf16> to vector<1x512xf32>
    %61 = vector.broadcast %60 : vector<1x512xf32> to vector<8x512xf32>
    %62 = arith.addf %58, %61 : vector<8x512xf32>
    %cst_50 = arith.constant 0.000000e+00 : f32
    %63 = vector.broadcast %cst_50 : f32 to vector<8x512xf32>
    %64 = arith.maximumf %62, %63 : vector<8x512xf32>
    %c0_51 = arith.constant 0 : index
    %c0_52 = arith.constant 0 : index
    %65 = vector.load %arg18[%c0_51, %c0_52] : memref<8x512xf32, #tpu.memory_space<vmem>>, vector<8x512xf32>
    tpu.vector_store %arg18[%c0_51, %c0_52], %64 {strides = array<i32>} : memref<8x512xf32, #tpu.memory_space<vmem>>, vector<8x512xf32>,
    %c0_53 = arith.constant 0 : index
    %c0_54 = arith.constant 0 : index
    %66 = vector.load %arg18[%c0_53, %c0_54] : memref<8x512xf32, #tpu.memory_space<vmem>>, vector<8x512xf32>
    %c0_55 = arith.constant 0 : index
    %c0_56 = arith.constant 0 : index
    %67 = vector.load %arg8[%c0_55, %c0_56] : memref<512x512xbf16, #tpu.memory_space<vmem>>, vector<512x512xbf16>
    %68 = arith.truncf %66 : vector<8x512xf32> to vector<8x512xbf16>
    %cst_57 = arith.constant dense<0.000000e+00> : vector<8x512xf32>
    %69 = tpu.matmul %68, %67, %cst_57 {dimension_numbers = #tpu.dot_dimension_numbers<[1], [0], [0], [1], [0, 0, 1, 1], [], []>} : vector<8x512xbf16>, vector<512x512xbf16>, vector<8x512xf32> -> vector<8x512xf32>
    %c0_58 = arith.constant 0 : index
    %c1664 = arith.constant 1664 : index
    %70 = vector.load %arg16[%c0_58, %c1664] : memref<1x3968xbf16, #tpu.memory_space<vmem>>, vector<1x512xbf16>
    %71 = arith.extf %70 : vector<1x512xbf16> to vector<1x512xf32>
    %72 = vector.broadcast %71 : vector<1x512xf32> to vector<8x512xf32>
    %73 = arith.addf %69, %72 : vector<8x512xf32>
    %cst_59 = arith.constant 0.000000e+00 : f32
    %74 = vector.broadcast %cst_59 : f32 to vector<8x512xf32>
    %75 = arith.maximumf %73, %74 : vector<8x512xf32>
    %c0_60 = arith.constant 0 : index
    %c0_61 = arith.constant 0 : index
    %76 = vector.load %arg18[%c0_60, %c0_61] : memref<8x512xf32, #tpu.memory_space<vmem>>, vector<8x512xf32>
    tpu.vector_store %arg18[%c0_60, %c0_61], %75 {strides = array<i32>} : memref<8x512xf32, #tpu.memory_space<vmem>>, vector<8x512xf32>,
    %c0_62 = arith.constant 0 : index
    %c0_63 = arith.constant 0 : index
    %77 = vector.load %arg18[%c0_62, %c0_63] : memref<8x512xf32, #tpu.memory_space<vmem>>, vector<8x512xf32>
    %c0_64 = arith.constant 0 : index
    %c0_65 = arith.constant 0 : index
    %78 = vector.load %arg9[%c0_64, %c0_65] : memref<512x512xbf16, #tpu.memory_space<vmem>>, vector<512x512xbf16>
    %79 = arith.truncf %77 : vector<8x512xf32> to vector<8x512xbf16>
    %cst_66 = arith.constant dense<0.000000e+00> : vector<8x512xf32>
    %80 = tpu.matmul %79, %78, %cst_66 {dimension_numbers = #tpu.dot_dimension_numbers<[1], [0], [0], [1], [0, 0, 1, 1], [], []>} : vector<8x512xbf16>, vector<512x512xbf16>, vector<8x512xf32> -> vector<8x512xf32>
    %c0_67 = arith.constant 0 : index
    %c2176 = arith.constant 2176 : index
    %81 = vector.load %arg16[%c0_67, %c2176] : memref<1x3968xbf16, #tpu.memory_space<vmem>>, vector<1x512xbf16>
    %82 = arith.extf %81 : vector<1x512xbf16> to vector<1x512xf32>
    %83 = vector.broadcast %82 : vector<1x512xf32> to vector<8x512xf32>
    %84 = arith.addf %80, %83 : vector<8x512xf32>
    %cst_68 = arith.constant 0.000000e+00 : f32
    %85 = vector.broadcast %cst_68 : f32 to vector<8x512xf32>
    %86 = arith.maximumf %84, %85 : vector<8x512xf32>
    %c0_69 = arith.constant 0 : index
    %c0_70 = arith.constant 0 : index
    %87 = vector.load %arg18[%c0_69, %c0_70] : memref<8x512xf32, #tpu.memory_space<vmem>>, vector<8x512xf32>
    tpu.vector_store %arg18[%c0_69, %c0_70], %86 {strides = array<i32>} : memref<8x512xf32, #tpu.memory_space<vmem>>, vector<8x512xf32>,
    %c0_71 = arith.constant 0 : index
    %c0_72 = arith.constant 0 : index
    %88 = vector.load %arg18[%c0_71, %c0_72] : memref<8x512xf32, #tpu.memory_space<vmem>>, vector<8x512xf32>
    %c0_73 = arith.constant 0 : index
    %c0_74 = arith.constant 0 : index
    %89 = vector.load %arg10[%c0_73, %c0_74] : memref<512x256xbf16, #tpu.memory_space<vmem>>, vector<512x256xbf16>
    %90 = arith.truncf %88 : vector<8x512xf32> to vector<8x512xbf16>
    %cst_75 = arith.constant dense<0.000000e+00> : vector<8x256xf32>
    %91 = tpu.matmul %90, %89, %cst_75 {dimension_numbers = #tpu.dot_dimension_numbers<[1], [0], [0], [1], [0, 0, 1, 1], [], []>} : vector<8x512xbf16>, vector<512x256xbf16>, vector<8x256xf32> -> vector<8x256xf32>
    %c0_76 = arith.constant 0 : index
    %c2688 = arith.constant 2688 : index
    %92 = vector.load %arg16[%c0_76, %c2688] : memref<1x3968xbf16, #tpu.memory_space<vmem>>, vector<1x256xbf16>
    %93 = arith.extf %92 : vector<1x256xbf16> to vector<1x256xf32>
    %94 = vector.broadcast %93 : vector<1x256xf32> to vector<8x256xf32>
    %95 = arith.addf %91, %94 : vector<8x256xf32>
    %cst_77 = arith.constant 0.000000e+00 : f32
    %96 = vector.broadcast %cst_77 : f32 to vector<8x256xf32>
    %97 = arith.maximumf %95, %96 : vector<8x256xf32>
    %c0_78 = arith.constant 0 : index
    %c0_79 = arith.constant 0 : index
    %98 = vector.load %arg18[%c0_78, %c0_79] : memref<8x512xf32, #tpu.memory_space<vmem>>, vector<8x256xf32>
    tpu.vector_store %arg18[%c0_78, %c0_79], %97 {strides = array<i32>} : memref<8x512xf32, #tpu.memory_space<vmem>>, vector<8x256xf32>,
    %c0_80 = arith.constant 0 : index
    %c0_81 = arith.constant 0 : index
    %99 = vector.load %arg18[%c0_80, %c0_81] : memref<8x512xf32, #tpu.memory_space<vmem>>, vector<8x256xf32>
    %c0_82 = arith.constant 0 : index
    %c0_83 = arith.constant 0 : index
    %100 = vector.load %arg11[%c0_82, %c0_83] : memref<256x256xbf16, #tpu.memory_space<vmem>>, vector<256x256xbf16>
    %101 = arith.truncf %99 : vector<8x256xf32> to vector<8x256xbf16>
    %cst_84 = arith.constant dense<0.000000e+00> : vector<8x256xf32>
    %102 = tpu.matmul %101, %100, %cst_84 {dimension_numbers = #tpu.dot_dimension_numbers<[1], [0], [0], [1], [0, 0, 1, 1], [], []>} : vector<8x256xbf16>, vector<256x256xbf16>, vector<8x256xf32> -> vector<8x256xf32>
    %c0_85 = arith.constant 0 : index
    %c2944 = arith.constant 2944 : index
    %103 = vector.load %arg16[%c0_85, %c2944] : memref<1x3968xbf16, #tpu.memory_space<vmem>>, vector<1x256xbf16>
    %104 = arith.extf %103 : vector<1x256xbf16> to vector<1x256xf32>
    %105 = vector.broadcast %104 : vector<1x256xf32> to vector<8x256xf32>
    %106 = arith.addf %102, %105 : vector<8x256xf32>
    %cst_86 = arith.constant 0.000000e+00 : f32
    %107 = vector.broadcast %cst_86 : f32 to vector<8x256xf32>
    %108 = arith.maximumf %106, %107 : vector<8x256xf32>
    %c0_87 = arith.constant 0 : index
    %c0_88 = arith.constant 0 : index
    %109 = vector.load %arg18[%c0_87, %c0_88] : memref<8x512xf32, #tpu.memory_space<vmem>>, vector<8x256xf32>
    tpu.vector_store %arg18[%c0_87, %c0_88], %108 {strides = array<i32>} : memref<8x512xf32, #tpu.memory_space<vmem>>, vector<8x256xf32>,
    %c0_89 = arith.constant 0 : index
    %c0_90 = arith.constant 0 : index
    %110 = vector.load %arg18[%c0_89, %c0_90] : memref<8x512xf32, #tpu.memory_space<vmem>>, vector<8x256xf32>
    %c0_91 = arith.constant 0 : index
    %c0_92 = arith.constant 0 : index
    %111 = vector.load %arg12[%c0_91, %c0_92] : memref<256x256xbf16, #tpu.memory_space<vmem>>, vector<256x256xbf16>
    %112 = arith.truncf %110 : vector<8x256xf32> to vector<8x256xbf16>
    %cst_93 = arith.constant dense<0.000000e+00> : vector<8x256xf32>
    %113 = tpu.matmul %112, %111, %cst_93 {dimension_numbers = #tpu.dot_dimension_numbers<[1], [0], [0], [1], [0, 0, 1, 1], [], []>} : vector<8x256xbf16>, vector<256x256xbf16>, vector<8x256xf32> -> vector<8x256xf32>
    %c0_94 = arith.constant 0 : index
    %c3200 = arith.constant 3200 : index
    %114 = vector.load %arg16[%c0_94, %c3200] : memref<1x3968xbf16, #tpu.memory_space<vmem>>, vector<1x256xbf16>
    %115 = arith.extf %114 : vector<1x256xbf16> to vector<1x256xf32>
    %116 = vector.broadcast %115 : vector<1x256xf32> to vector<8x256xf32>
    %117 = arith.addf %113, %116 : vector<8x256xf32>
    %cst_95 = arith.constant 0.000000e+00 : f32
    %118 = vector.broadcast %cst_95 : f32 to vector<8x256xf32>
    %119 = arith.maximumf %117, %118 : vector<8x256xf32>
    %c0_96 = arith.constant 0 : index
    %c0_97 = arith.constant 0 : index
    %120 = vector.load %arg18[%c0_96, %c0_97] : memref<8x512xf32, #tpu.memory_space<vmem>>, vector<8x256xf32>
    tpu.vector_store %arg18[%c0_96, %c0_97], %119 {strides = array<i32>} : memref<8x512xf32, #tpu.memory_space<vmem>>, vector<8x256xf32>,
    %c0_98 = arith.constant 0 : index
    %c0_99 = arith.constant 0 : index
    %121 = vector.load %arg18[%c0_98, %c0_99] : memref<8x512xf32, #tpu.memory_space<vmem>>, vector<8x256xf32>
    %c0_100 = arith.constant 0 : index
    %c0_101 = arith.constant 0 : index
    %122 = vector.load %arg13[%c0_100, %c0_101] : memref<256x256xbf16, #tpu.memory_space<vmem>>, vector<256x256xbf16>
    %123 = arith.truncf %121 : vector<8x256xf32> to vector<8x256xbf16>
    %cst_102 = arith.constant dense<0.000000e+00> : vector<8x256xf32>
    %124 = tpu.matmul %123, %122, %cst_102 {dimension_numbers = #tpu.dot_dimension_numbers<[1], [0], [0], [1], [0, 0, 1, 1], [], []>} : vector<8x256xbf16>, vector<256x256xbf16>, vector<8x256xf32> -> vector<8x256xf32>
    %c0_103 = arith.constant 0 : index
    %c3456 = arith.constant 3456 : index
    %125 = vector.load %arg16[%c0_103, %c3456] : memref<1x3968xbf16, #tpu.memory_space<vmem>>, vector<1x256xbf16>
    %126 = arith.extf %125 : vector<1x256xbf16> to vector<1x256xf32>
    %127 = vector.broadcast %126 : vector<1x256xf32> to vector<8x256xf32>
    %128 = arith.addf %124, %127 : vector<8x256xf32>
    %cst_104 = arith.constant 0.000000e+00 : f32
    %129 = vector.broadcast %cst_104 : f32 to vector<8x256xf32>
    %130 = arith.maximumf %128, %129 : vector<8x256xf32>
    %c0_105 = arith.constant 0 : index
    %c0_106 = arith.constant 0 : index
    %131 = vector.load %arg18[%c0_105, %c0_106] : memref<8x512xf32, #tpu.memory_space<vmem>>, vector<8x256xf32>
    tpu.vector_store %arg18[%c0_105, %c0_106], %130 {strides = array<i32>} : memref<8x512xf32, #tpu.memory_space<vmem>>, vector<8x256xf32>,
    %c0_107 = arith.constant 0 : index
    %c0_108 = arith.constant 0 : index
    %132 = vector.load %arg18[%c0_107, %c0_108] : memref<8x512xf32, #tpu.memory_space<vmem>>, vector<8x256xf32>
    %c0_109 = arith.constant 0 : index
    %c0_110 = arith.constant 0 : index
    %133 = vector.load %arg14[%c0_109, %c0_110] : memref<256x128xbf16, #tpu.memory_space<vmem>>, vector<256x128xbf16>
    %134 = arith.truncf %132 : vector<8x256xf32> to vector<8x256xbf16>
    %cst_111 = arith.constant dense<0.000000e+00> : vector<8x128xf32>
    %135 = tpu.matmul %134, %133, %cst_111 {dimension_numbers = #tpu.dot_dimension_numbers<[1], [0], [0], [1], [0, 0, 1, 1], [], []>} : vector<8x256xbf16>, vector<256x128xbf16>, vector<8x128xf32> -> vector<8x128xf32>
    %c0_112 = arith.constant 0 : index
    %c3712 = arith.constant 3712 : index
    %136 = vector.load %arg16[%c0_112, %c3712] : memref<1x3968xbf16, #tpu.memory_space<vmem>>, vector<1x128xbf16>
    %137 = arith.extf %136 : vector<1x128xbf16> to vector<1x128xf32>
    %138 = vector.broadcast %137 : vector<1x128xf32> to vector<8x128xf32>
    %139 = arith.addf %135, %138 : vector<8x128xf32>
    %cst_113 = arith.constant 0.000000e+00 : f32
    %140 = vector.broadcast %cst_113 : f32 to vector<8x128xf32>
    %141 = arith.maximumf %139, %140 : vector<8x128xf32>
    %c0_114 = arith.constant 0 : index
    %c0_115 = arith.constant 0 : index
    %142 = vector.load %arg18[%c0_114, %c0_115] : memref<8x512xf32, #tpu.memory_space<vmem>>, vector<8x128xf32>
    tpu.vector_store %arg18[%c0_114, %c0_115], %141 {strides = array<i32>} : memref<8x512xf32, #tpu.memory_space<vmem>>, vector<8x128xf32>,
    %c0_116 = arith.constant 0 : index
    %c0_117 = arith.constant 0 : index
    %143 = vector.load %arg18[%c0_116, %c0_117] : memref<8x512xf32, #tpu.memory_space<vmem>>, vector<8x128xf32>
    %c0_118 = arith.constant 0 : index
    %c0_119 = arith.constant 0 : index
    %144 = vector.load %arg15[%c0_118, %c0_119] : memref<128x128xbf16, #tpu.memory_space<vmem>>, vector<128x128xbf16>
    %145 = arith.truncf %143 : vector<8x128xf32> to vector<8x128xbf16>
    %cst_120 = arith.constant dense<0.000000e+00> : vector<8x128xf32>
    %146 = tpu.matmul %145, %144, %cst_120 {dimension_numbers = #tpu.dot_dimension_numbers<[1], [0], [0], [1], [0, 0, 1, 1], [], []>} : vector<8x128xbf16>, vector<128x128xbf16>, vector<8x128xf32> -> vector<8x128xf32>
    %c0_121 = arith.constant 0 : index
    %c3840 = arith.constant 3840 : index
    %147 = vector.load %arg16[%c0_121, %c3840] : memref<1x3968xbf16, #tpu.memory_space<vmem>>, vector<1x128xbf16>
    %148 = arith.extf %147 : vector<1x128xbf16> to vector<1x128xf32>
    %149 = vector.broadcast %148 : vector<1x128xf32> to vector<8x128xf32>
    %150 = arith.addf %146, %149 : vector<8x128xf32>
    %c0_122 = arith.constant 0 : index
    %c0_123 = arith.constant 0 : index
    %151 = vector.load %arg17[%c0_122, %c0_123] : memref<8x128xf32, #tpu.memory_space<vmem>>, vector<8x128xf32>
    tpu.vector_store %arg17[%c0_122, %c0_123], %150 {strides = array<i32>} : memref<8x128xf32, #tpu.memory_space<vmem>>, vector<8x128xf32>,
    return
  }
  func.func @transform_0(%arg0: i32) -> (i32, i32) {
    %c0_i32 = arith.constant 0 : i32
    %c0_i32_0 = arith.constant 0 : i32
    return %arg0, %c0_i32 : i32, i32
  }
  func.func @transform_1(%arg0: i32) -> (i32, i32) {
    %c0_i32 = arith.constant 0 : i32
    %c0_i32_0 = arith.constant 0 : i32
    %c0_i32_1 = arith.constant 0 : i32
    return %c0_i32, %c0_i32_0 : i32, i32
  }
  func.func @transform_2(%arg0: i32) -> (i32, i32) {
    %c0_i32 = arith.constant 0 : i32
    %c0_i32_0 = arith.constant 0 : i32
    %c0_i32_1 = arith.constant 0 : i32
    return %c0_i32, %c0_i32_0 : i32, i32
  }
  func.func @transform_3(%arg0: i32) -> (i32, i32) {
    %c0_i32 = arith.constant 0 : i32
    %c0_i32_0 = arith.constant 0 : i32
    %c0_i32_1 = arith.constant 0 : i32
    return %c0_i32, %c0_i32_0 : i32, i32
  }
  func.func @transform_4(%arg0: i32) -> (i32, i32) {
    %c0_i32 = arith.constant 0 : i32
    %c0_i32_0 = arith.constant 0 : i32
    %c0_i32_1 = arith.constant 0 : i32
    return %c0_i32, %c0_i32_0 : i32, i32
  }
  func.func @transform_5(%arg0: i32) -> (i32, i32) {
    %c0_i32 = arith.constant 0 : i32
    %c0_i32_0 = arith.constant 0 : i32
    %c0_i32_1 = arith.constant 0 : i32
    return %c0_i32, %c0_i32_0 : i32, i32
  }
  func.func @transform_6(%arg0: i32) -> (i32, i32) {
    %c0_i32 = arith.constant 0 : i32
    %c0_i32_0 = arith.constant 0 : i32
    %c0_i32_1 = arith.constant 0 : i32
    return %c0_i32, %c0_i32_0 : i32, i32
  }
  func.func @transform_7(%arg0: i32) -> (i32, i32) {
    %c0_i32 = arith.constant 0 : i32
    %c0_i32_0 = arith.constant 0 : i32
    %c0_i32_1 = arith.constant 0 : i32
    return %c0_i32, %c0_i32_0 : i32, i32
  }
  func.func @transform_8(%arg0: i32) -> (i32, i32) {
    %c0_i32 = arith.constant 0 : i32
    %c0_i32_0 = arith.constant 0 : i32
    %c0_i32_1 = arith.constant 0 : i32
    return %c0_i32, %c0_i32_0 : i32, i32
  }
  func.func @transform_9(%arg0: i32) -> (i32, i32) {
    %c0_i32 = arith.constant 0 : i32
    %c0_i32_0 = arith.constant 0 : i32
    %c0_i32_1 = arith.constant 0 : i32
    return %c0_i32, %c0_i32_0 : i32, i32
  }
  func.func @transform_10(%arg0: i32) -> (i32, i32) {
    %c0_i32 = arith.constant 0 : i32
    %c0_i32_0 = arith.constant 0 : i32
    %c0_i32_1 = arith.constant 0 : i32
    return %c0_i32, %c0_i32_0 : i32, i32
  }
  func.func @transform_11(%arg0: i32) -> (i32, i32) {
    %c0_i32 = arith.constant 0 : i32
    %c0_i32_0 = arith.constant 0 : i32
    %c0_i32_1 = arith.constant 0 : i32
    return %c0_i32, %c0_i32_0 : i32, i32
  }
  func.func @transform_12(%arg0: i32) -> (i32, i32) {
    %c0_i32 = arith.constant 0 : i32
    %c0_i32_0 = arith.constant 0 : i32
    %c0_i32_1 = arith.constant 0 : i32
    return %c0_i32, %c0_i32_0 : i32, i32
  }
  func.func @transform_13(%arg0: i32) -> (i32, i32) {
    %c0_i32 = arith.constant 0 : i32
    %c0_i32_0 = arith.constant 0 : i32
    %c0_i32_1 = arith.constant 0 : i32
    return %c0_i32, %c0_i32_0 : i32, i32
  }
  func.func @transform_14(%arg0: i32) -> (i32, i32) {
    %c0_i32 = arith.constant 0 : i32
    %c0_i32_0 = arith.constant 0 : i32
    %c0_i32_1 = arith.constant 0 : i32
    return %c0_i32, %c0_i32_0 : i32, i32
  }
  func.func @transform_15(%arg0: i32) -> (i32, i32) {
    %c0_i32 = arith.constant 0 : i32
    %c0_i32_0 = arith.constant 0 : i32
    %c0_i32_1 = arith.constant 0 : i32
    return %c0_i32, %c0_i32_0 : i32, i32
  }
  func.func @transform_16(%arg0: i32) -> (i32, i32) {
    %c0_i32 = arith.constant 0 : i32
    %c0_i32_0 = arith.constant 0 : i32
    return %arg0, %c0_i32 : i32, i32
  }
}

</mosaic_0001>

<llo_original>
// kernel: net_forward.1
$region0: #{net_forward.1}
  #allocation0 [shape = 'u32[]', space=smem, size = 0x4, offset = 0x4, fixed_abs, tag = 'smem constant byte address 0x4 - core index']
  #allocation1 [shape = 'u32[144,128]{1,0:T(1,128)}', space=vmem, size = 0x12000, scoped, tag = 'internal scratch']
  #allocation2 [shape = 'f32[8,512]{1,0:T(8,128)}', space=vmem, size = 0x4000, scoped, tag = 'scratch operand']
  %s0 = inlined_call_operand.hbm [shape: f32[8,32], index: 0, kind: input, shape index: {}]
  %s1 = inlined_call_operand.hbm [shape: bf16[32,128], index: 1, kind: input, shape index: {}]
  %s2 = inlined_call_operand.hbm [shape: bf16[128,256], index: 2, kind: input, shape index: {}]
  %s3 = inlined_call_operand.hbm [shape: bf16[256,256], index: 3, kind: input, shape index: {}]
  %s4 = inlined_call_operand.hbm [shape: bf16[256,256], index: 4, kind: input, shape index: {}]
  %s5 = inlined_call_operand.hbm [shape: bf16[256,256], index: 5, kind: input, shape index: {}]
  %s6 = inlined_call_operand.hbm [shape: bf16[256,512], index: 6, kind: input, shape index: {}]
  %s7 = inlined_call_operand.hbm [shape: bf16[512,512], index: 7, kind: input, shape index: {}]
  %s8 = inlined_call_operand.hbm [shape: bf16[512,512], index: 8, kind: input, shape index: {}]
  %s9 = inlined_call_operand.hbm [shape: bf16[512,256], index: 9, kind: input, shape index: {}]
  %s10 = inlined_call_operand.hbm [shape: bf16[256,256], index: 10, kind: input, shape index: {}]
  %s11 = inlined_call_operand.hbm [shape: bf16[256,256], index: 11, kind: input, shape index: {}]
  %s12 = inlined_call_operand.hbm [shape: bf16[256,256], index: 12, kind: input, shape index: {}]
  %s13 = inlined_call_operand.hbm [shape: bf16[256,128], index: 13, kind: input, shape index: {}]
  %s14 = inlined_call_operand.hbm [shape: bf16[128,128], index: 14, kind: input, shape index: {}]
  %s15 = inlined_call_operand.vmem [shape: bf16[1,3968], index: 15, kind: input, shape index: {}]
  %s16 = inlined_call_operand.hbm [shape: f32[8,128], index: 16, kind: output, shape index: {}]
  %s17 = sld [smem:[#allocation0]]
  $region134: #{net_forward.1} parent=0
    _
  %s19 = ssub.s32 1, %s17
  %s20 = scalar_select 0, %s19, %s17
  $region1: #{net_forward.1} parent=0
    #allocation3 [shape = 'u8[4096]{0}', space=vmem, size = 0x1000, scoped, tag = 'input window, operand 0, single buffered']
    #allocation4 [shape = 's32[1]{0}', space=sflag, size = 0x4, scoped, tag = 'scoped memory for net_forward.1']
    #allocation5 [shape = 's32[1]{0}', space=sflag, size = 0x4, scoped, tag = 'scoped memory for net_forward.1']
    #allocation6 [shape = 'u8[8192]{0}', space=vmem, size = 0x2000, scoped, tag = 'input window, operand 1, single buffered']
    #allocation7 [shape = 's32[1]{0}', space=sflag, size = 0x4, scoped, tag = 'scoped memory for net_forward.1']
    #allocation8 [shape = 'u8[65536]{0}', space=vmem, size = 0x10000, scoped, tag = 'input window, operand 2, single buffered']
    #allocation9 [shape = 'u8[131072]{0}', space=vmem, size = 0x20000, scoped, tag = 'input window, operand 3, single buffered']
    #allocation10 [shape = 's32[1]{0}', space=sflag, size = 0x4, scoped, tag = 'scoped memory for net_forward.1']
    #allocation11 [shape = 'u8[131072]{0}', space=vmem, size = 0x20000, scoped, tag = 'input window, operand 4, single buffered']
    #allocation12 [shape = 'u8[131072]{0}', space=vmem, size = 0x20000, scoped, tag = 'input window, operand 5, single buffered']
    #allocation13 [shape = 's32[1]{0}', space=sflag, size = 0x4, scoped, tag = 'scoped memory for net_forward.1']
    #allocation14 [shape = 'u8[262144]{0}', space=vmem, size = 0x40000, scoped, tag = 'input window, operand 6, single buffered']
    #allocation15 [shape = 'u8[524288]{0}', space=vmem, size = 0x80000, scoped, tag = 'input window, operand 7, single buffered']
    #allocation16 [shape = 's32[1]{0}', space=sflag, size = 0x4, scoped, tag = 'scoped memory for net_forward.1']
    #allocation17 [shape = 'u8[524288]{0}', space=vmem, size = 0x80000, scoped, tag = 'input window, operand 8, single buffered']
    #allocation18 [shape = 'u8[262144]{0}', space=vmem, size = 0x40000, scoped, tag = 'input window, operand 9, single buffered']
    #allocation19 [shape = 's32[1]{0}', space=sflag, size = 0x4, scoped, tag = 'scoped memory for net_forward.1']
    #allocation20 [shape = 'u8[131072]{0}', space=vmem, size = 0x20000, scoped, tag = 'input window, operand 10, single buffered']
    #allocation21 [shape = 'u8[131072]{0}', space=vmem, size = 0x20000, scoped, tag = 'input window, operand 11, single buffered']
    #allocation22 [shape = 's32[1]{0}', space=sflag, size = 0x4, scoped, tag = 'scoped memory for net_forward.1']
    #allocation23 [shape = 'u8[131072]{0}', space=vmem, size = 0x20000, scoped, tag = 'input window, operand 12, single buffered']
    #allocation24 [shape = 'u8[65536]{0}', space=vmem, size = 0x10000, scoped, tag = 'input window, operand 13, single buffered']
    #allocation25 [shape = 's32[1]{0}', space=sflag, size = 0x4, scoped, tag = 'scoped memory for net_forward.1']
    #allocation26 [shape = 'u8[32768]{0}', space=vmem, size = 0x8000, scoped, tag = 'input window, operand 14, single buffered']
    #allocation27 [shape = 'u8[4096]{0}', space=vmem, size = 0x1000, scoped, tag = 'output window, operand 0, single buffered']
    %21 = vsyncpa [#allocation4], 0
    %22 = vsyncpa [#allocation7], 0
    %23 = vsyncpa [#allocation10], 0
    %24 = vsyncpa [#allocation13], 0
    %25 = vsyncpa [#allocation16], 0
    %26 = vsyncpa [#allocation19], 0
    %27 = vsyncpa [#allocation22], 0
    %28 = vsyncpa [#allocation25], 0
    %29 = vsyncpa [#allocation5], 0
    // Predicated region
    $region2: #{net_forward.1} parent=1 // pred_check
      _
    $region3: #{net_forward.1} parent=1 // pred_check_branch
      %31 = sbr.rel (0) target = $region5
    $region4: #{net_forward.1} parent=1 // pred_region
      %s33 = ssub.s32 128, 128
      %34 = vsyncadd [#allocation4], %s33
      %s36 = sshll.u32 [#allocation3], 4
      %s37 = int_to_ptr.vmem [resolvable:$true] %s36
      %39 = dma.hbm_to_vmem [thread:$0]  %s0, 128, %s37, [#allocation4]
    $region5: #{net_forward.1} parent=1 // pred_fallthru
      _
    // Predicated region
    $region6: #{net_forward.1} parent=1 // pred_check
      _
    $region7: #{net_forward.1} parent=1 // pred_check_branch
      %41 = sbr.rel (0) target = $region9
    $region8: #{net_forward.1} parent=1 // pred_region
      %s43 = ssub.s32 256, 256
      %44 = vsyncadd [#allocation7], %s43
      %s45 = sshll.u32 [#allocation6], 4
      %s46 = int_to_ptr.vmem [resolvable:$true] %s45
      %51 = dma.hbm_to_vmem [thread:$0]  %s1, 256, %s46, [#allocation7], 64, 64, 4
    $region9: #{net_forward.1} parent=1 // pred_fallthru
      _
    // Predicated region
    $region10: #{net_forward.1} parent=1 // pred_check
      _
    $region11: #{net_forward.1} parent=1 // pred_check_branch
      %53 = sbr.rel (0) target = $region13
    $region12: #{net_forward.1} parent=1 // pred_region
      %s55 = ssub.s32 2048, 2048
      %56 = vsyncadd [#allocation7], %s55
      %s57 = sshll.u32 [#allocation8], 4
      %s58 = int_to_ptr.vmem [resolvable:$true] %s57
      %63 = dma.hbm_to_vmem [thread:$0]  %s2, 2048, %s58, [#allocation7], 128, 128, 8
    $region13: #{net_forward.1} parent=1 // pred_fallthru
      _
    // Predicated region
    $region14: #{net_forward.1} parent=1 // pred_check
      _
    $region15: #{net_forward.1} parent=1 // pred_check_branch
      %65 = sbr.rel (0) target = $region17
    $region16: #{net_forward.1} parent=1 // pred_region
      %s67 = ssub.s32 4096, 4096
      %68 = vsyncadd [#allocation10], %s67
      %s69 = sshll.u32 [#allocation9], 4
      %s70 = int_to_ptr.vmem [resolvable:$true] %s69
      %75 = dma.hbm_to_vmem [thread:$0]  %s3, 4096, %s70, [#allocation10], 128, 128, 8
    $region17: #{net_forward.1} parent=1 // pred_fallthru
      _
    // Predicated region
    $region18: #{net_forward.1} parent=1 // pred_check
      _
    $region19: #{net_forward.1} parent=1 // pred_check_branch
      %77 = sbr.rel (0) target = $region21
    $region20: #{net_forward.1} parent=1 // pred_region
      %s79 = ssub.s32 4096, 4096
      %80 = vsyncadd [#allocation10], %s79
      %s81 = sshll.u32 [#allocation11], 4
      %s82 = int_to_ptr.vmem [resolvable:$true] %s81
      %87 = dma.hbm_to_vmem [thread:$0]  %s4, 4096, %s82, [#allocation10], 128, 128, 8
    $region21: #{net_forward.1} parent=1 // pred_fallthru
      _
    // Predicated region
    $region22: #{net_forward.1} parent=1 // pred_check
      _
    $region23: #{net_forward.1} parent=1 // pred_check_branch
      %89 = sbr.rel (0) target = $region25
    $region24: #{net_forward.1} parent=1 // pred_region
      %s91 = ssub.s32 4096, 4096
      %92 = vsyncadd [#allocation13], %s91
      %s93 = sshll.u32 [#allocation12], 4
      %s94 = int_to_ptr.vmem [resolvable:$true] %s93
      %99 = dma.hbm_to_vmem [thread:$0]  %s5, 4096, %s94, [#allocation13], 128, 128, 8
    $region25: #{net_forward.1} parent=1 // pred_fallthru
      _
    // Predicated region
    $region26: #{net_forward.1} parent=1 // pred_check
      _
    $region27: #{net_forward.1} parent=1 // pred_check_branch
      %101 = sbr.rel (0) target = $region29
    $region28: #{net_forward.1} parent=1 // pred_region
      %s103 = ssub.s32 8192, 8192
      %104 = vsyncadd [#allocation13], %s103
      %s105 = sshll.u32 [#allocation14], 4
      %s106 = int_to_ptr.vmem [resolvable:$true] %s105
      %111 = dma.hbm_to_vmem [thread:$0]  %s6, 8192, %s106, [#allocation13], 256, 256, 16
    $region29: #{net_forward.1} parent=1 // pred_fallthru
      _
    // Predicated region
    $region30: #{net_forward.1} parent=1 // pred_check
      _
    $region31: #{net_forward.1} parent=1 // pred_check_branch
      %113 = sbr.rel (0) target = $region33
    $region32: #{net_forward.1} parent=1 // pred_region
      %s115 = ssub.s32 16384, 16384
      %116 = vsyncadd [#allocation16], %s115
      %s117 = sshll.u32 [#allocation15], 4
      %s118 = int_to_ptr.vmem [resolvable:$true] %s117
      %123 = dma.hbm_to_vmem [thread:$0]  %s7, 16384, %s118, [#allocation16], 256, 256, 16
    $region33: #{net_forward.1} parent=1 // pred_fallthru
      _
    // Predicated region
    $region34: #{net_forward.1} parent=1 // pred_check
      _
    $region35: #{net_forward.1} parent=1 // pred_check_branch
      %125 = sbr.rel (0) target = $region37
    $region36: #{net_forward.1} parent=1 // pred_region
      %s127 = ssub.s32 16384, 16384
      %128 = vsyncadd [#allocation16], %s127
      %s129 = sshll.u32 [#allocation17], 4
      %s130 = int_to_ptr.vmem [resolvable:$true] %s129
      %135 = dma.hbm_to_vmem [thread:$0]  %s8, 16384, %s130, [#allocation16], 256, 256, 16
    $region37: #{net_forward.1} parent=1 // pred_fallthru
      _
    // Predicated region
    $region38: #{net_forward.1} parent=1 // pred_check
      _
    $region39: #{net_forward.1} parent=1 // pred_check_branch
      %137 = sbr.rel (0) target = $region41
    $region40: #{net_forward.1} parent=1 // pred_region
      %s139 = ssub.s32 8192, 8192
      %140 = vsyncadd [#allocation19], %s139
      %s141 = sshll.u32 [#allocation18], 4
      %s142 = int_to_ptr.vmem [resolvable:$true] %s141
      %147 = dma.hbm_to_vmem [thread:$0]  %s9, 8192, %s142, [#allocation19], 128, 128, 8
    $region41: #{net_forward.1} parent=1 // pred_fallthru
      _
    // Predicated region
    $region42: #{net_forward.1} parent=1 // pred_check
      _
    $region43: #{net_forward.1} parent=1 // pred_check_branch
      %149 = sbr.rel (0) target = $region45
    $region44: #{net_forward.1} parent=1 // pred_region
      %s151 = ssub.s32 4096, 4096
      %152 = vsyncadd [#allocation19], %s151
      %s153 = sshll.u32 [#allocation20], 4
      %s154 = int_to_ptr.vmem [resolvable:$true] %s153
      %159 = dma.hbm_to_vmem [thread:$0]  %s10, 4096, %s154, [#allocation19], 128, 128, 8
    $region45: #{net_forward.1} parent=1 // pred_fallthru
      _
    // Predicated region
    $region46: #{net_forward.1} parent=1 // pred_check
      _
    $region47: #{net_forward.1} parent=1 // pred_check_branch
      %161 = sbr.rel (0) target = $region49
    $region48: #{net_forward.1} parent=1 // pred_region
      %s163 = ssub.s32 4096, 4096
      %164 = vsyncadd [#allocation22], %s163
      %s165 = sshll.u32 [#allocation21], 4
      %s166 = int_to_ptr.vmem [resolvable:$true] %s165
      %171 = dma.hbm_to_vmem [thread:$0]  %s11, 4096, %s166, [#allocation22], 128, 128, 8
    $region49: #{net_forward.1} parent=1 // pred_fallthru
      _
    // Predicated region
    $region50: #{net_forward.1} parent=1 // pred_check
      _
    $region51: #{net_forward.1} parent=1 // pred_check_branch
      %173 = sbr.rel (0) target = $region53
    $region52: #{net_forward.1} parent=1 // pred_region
      %s175 = ssub.s32 4096, 4096
      %176 = vsyncadd [#allocation22], %s175
      %s177 = sshll.u32 [#allocation23], 4
      %s178 = int_to_ptr.vmem [resolvable:$true] %s177
      %183 = dma.hbm_to_vmem [thread:$0]  %s12, 4096, %s178, [#allocation22], 128, 128, 8
    $region53: #{net_forward.1} parent=1 // pred_fallthru
      _
    // Predicated region
    $region54: #{net_forward.1} parent=1 // pred_check
      _
    $region55: #{net_forward.1} parent=1 // pred_check_branch
      %185 = sbr.rel (0) target = $region57
    $region56: #{net_forward.1} parent=1 // pred_region
      %s187 = ssub.s32 2048, 2048
      %188 = vsyncadd [#allocation25], %s187
      %s189 = sshll.u32 [#allocation24], 4
      %s190 = int_to_ptr.vmem [resolvable:$true] %s189
      %195 = dma.hbm_to_vmem [thread:$0]  %s13, 2048, %s190, [#allocation25], 64, 64, 4
    $region57: #{net_forward.1} parent=1 // pred_fallthru
      _
    // Predicated region
    $region58: #{net_forward.1} parent=1 // pred_check
      _
    $region59: #{net_forward.1} parent=1 // pred_check_branch
      %197 = sbr.rel (0) target = $region61
    $region60: #{net_forward.1} parent=1 // pred_region
      %s199 = ssub.s32 1024, 1024
      %200 = vsyncadd [#allocation25], %s199
      %s201 = sshll.u32 [#allocation26], 4
      %s202 = int_to_ptr.vmem [resolvable:$true] %s201
      %207 = dma.hbm_to_vmem [thread:$0]  %s14, 1024, %s202, [#allocation25], 64, 64, 4
    $region61: #{net_forward.1} parent=1 // pred_fallthru
      _
    // Predicated region
    $region62: #{net_forward.1} parent=1 // pred_check
      _
    $region63: #{net_forward.1} parent=1 // pred_check_branch
      %209 = sbr.rel (0) target = $region65
    $region64: #{net_forward.1} parent=1 // pred_region
      _
    $region65: #{net_forward.1} parent=1 // pred_fallthru
      _
    // Predicated region
    $region66: #{net_forward.1} parent=1 // pred_check
      _
    $region67: #{net_forward.1} parent=1 // pred_check_branch
      %211 = sbr.rel (0) target = $region69
    $region68: #{net_forward.1} parent=1 // pred_region
      %212 = dma.done [#allocation4], 128
    $region69: #{net_forward.1} parent=1 // pred_fallthru
      _
    // Predicated region
    $region70: #{net_forward.1} parent=1 // pred_check
      _
    $region71: #{net_forward.1} parent=1 // pred_check_branch
      %214 = sbr.rel (0) target = $region73
    $region72: #{net_forward.1} parent=1 // pred_region
      %215 = dma.done [#allocation7], 256
    $region73: #{net_forward.1} parent=1 // pred_fallthru
      _
    // Predicated region
    $region74: #{net_forward.1} parent=1 // pred_check
      _
    $region75: #{net_forward.1} parent=1 // pred_check_branch
      %217 = sbr.rel (0) target = $region77
    $region76: #{net_forward.1} parent=1 // pred_region
      %218 = dma.done [#allocation7], 2048
    $region77: #{net_forward.1} parent=1 // pred_fallthru
      _
    // Predicated region
    $region78: #{net_forward.1} parent=1 // pred_check
      _
    $region79: #{net_forward.1} parent=1 // pred_check_branch
      %220 = sbr.rel (0) target = $region81
    $region80: #{net_forward.1} parent=1 // pred_region
      %221 = dma.done [#allocation10], 4096
    $region81: #{net_forward.1} parent=1 // pred_fallthru
      _
    // Predicated region
    $region82: #{net_forward.1} parent=1 // pred_check
      _
    $region83: #{net_forward.1} parent=1 // pred_check_branch
      %223 = sbr.rel (0) target = $region85
    $region84: #{net_forward.1} parent=1 // pred_region
      %224 = dma.done [#allocation10], 4096
    $region85: #{net_forward.1} parent=1 // pred_fallthru
      _
    // Predicated region
    $region86: #{net_forward.1} parent=1 // pred_check
      _
    $region87: #{net_forward.1} parent=1 // pred_check_branch
      %226 = sbr.rel (0) target = $region89
    $region88: #{net_forward.1} parent=1 // pred_region
      %227 = dma.done [#allocation13], 4096
    $region89: #{net_forward.1} parent=1 // pred_fallthru
      _
    // Predicated region
    $region90: #{net_forward.1} parent=1 // pred_check
      _
    $region91: #{net_forward.1} parent=1 // pred_check_branch
      %229 = sbr.rel (0) target = $region93
    $region92: #{net_forward.1} parent=1 // pred_region
      %230 = dma.done [#allocation13], 8192
    $region93: #{net_forward.1} parent=1 // pred_fallthru
      _
    // Predicated region
    $region94: #{net_forward.1} parent=1 // pred_check
      _
    $region95: #{net_forward.1} parent=1 // pred_check_branch
      %232 = sbr.rel (0) target = $region97
    $region96: #{net_forward.1} parent=1 // pred_region
      %233 = dma.done [#allocation16], 16384
    $region97: #{net_forward.1} parent=1 // pred_fallthru
      _
    // Predicated region
    $region98: #{net_forward.1} parent=1 // pred_check
      _
    $region99: #{net_forward.1} parent=1 // pred_check_branch
      %235 = sbr.rel (0) target = $region101
    $region100: #{net_forward.1} parent=1 // pred_region
      %236 = dma.done [#allocation16], 16384
    $region101: #{net_forward.1} parent=1 // pred_fallthru
      _
    // Predicated region
    $region102: #{net_forward.1} parent=1 // pred_check
      _
    $region103: #{net_forward.1} parent=1 // pred_check_branch
      %238 = sbr.rel (0) target = $region105
    $region104: #{net_forward.1} parent=1 // pred_region
      %239 = dma.done [#allocation19], 8192
    $region105: #{net_forward.1} parent=1 // pred_fallthru
      _
    // Predicated region
    $region106: #{net_forward.1} parent=1 // pred_check
      _
    $region107: #{net_forward.1} parent=1 // pred_check_branch
      %241 = sbr.rel (0) target = $region109
    $region108: #{net_forward.1} parent=1 // pred_region
      %242 = dma.done [#allocation19], 4096
    $region109: #{net_forward.1} parent=1 // pred_fallthru
      _
    // Predicated region
    $region110: #{net_forward.1} parent=1 // pred_check
      _
    $region111: #{net_forward.1} parent=1 // pred_check_branch
      %244 = sbr.rel (0) target = $region113
    $region112: #{net_forward.1} parent=1 // pred_region
      %245 = dma.done [#allocation22], 4096
    $region113: #{net_forward.1} parent=1 // pred_fallthru
      _
    // Predicated region
    $region114: #{net_forward.1} parent=1 // pred_check
      _
    $region115: #{net_forward.1} parent=1 // pred_check_branch
      %247 = sbr.rel (0) target = $region117
    $region116: #{net_forward.1} parent=1 // pred_region
      %248 = dma.done [#allocation22], 4096
    $region117: #{net_forward.1} parent=1 // pred_fallthru
      _
    // Predicated region
    $region118: #{net_forward.1} parent=1 // pred_check
      _
    $region119: #{net_forward.1} parent=1 // pred_check_branch
      %250 = sbr.rel (0) target = $region121
    $region120: #{net_forward.1} parent=1 // pred_region
      %251 = dma.done [#allocation25], 2048
    $region121: #{net_forward.1} parent=1 // pred_fallthru
      _
    // Predicated region
    $region122: #{net_forward.1} parent=1 // pred_check
      _
    $region123: #{net_forward.1} parent=1 // pred_check_branch
      %253 = sbr.rel (0) target = $region125
    $region124: #{net_forward.1} parent=1 // pred_region
      %254 = dma.done [#allocation25], 1024
    $region125: #{net_forward.1} parent=1 // pred_fallthru
      _
    %v256 = vld [vmem:[#allocation3] sm:$0xff]
    %v257 = vld [vmem:[#allocation6] sm:$0xf]
    %v258 = vld [vmem:[#allocation6 + $0x4] sm:$0xf]
    %v259 = vld [vmem:[#allocation6 + $0x8] sm:$0xf]
    %v260 = vld [vmem:[#allocation6 + $0xc] sm:$0xf]
    %v261 = vpack.c.bf16 %v256, %v256
    %v262 = vld [vmem:[%s15] sm:$0x1]
    %v263 = vunpack.c.l.bf16 %v262
    %v264 = vlaneseq
    %v265 = vshrl.u32 %v264, 7
    %v266 = vsub.s32 0, %v265
    %v267 = vrot.slane %v263, %v266
    %v272 = vunpack.c.l.b16 %v257
    %v273 = vunpack.c.l.b16 %v258
    %v274 = vunpack.c.l.b16 %v259
    %v275 = vunpack.c.l.b16 %v260
    %v276 = vpack.c.b16 %v273, %v272
    %v277 = vpack.c.b16 %v275, %v274
    %vm280 = vcmask 261120
    %v282 = vsel %vm280, %v261, 0
    %284 = vmatprep.subr.bf16.mxu0 0
    %285 = vmatpush1.bf16.msra.mxu0 %v276
    %286 = vmatprep.subr.bf16.mxu0 0
    %287 = vmatpush1.bf16.msra.mxu0 %v277
    %288 = vmatprep.subr.bf16.mxu0 0
    %289 = vmatpush1.bf16.msra.mxu0 0
    %290 = vmatprep.subr.bf16.mxu0 0
    %291 = vmatpush1.bf16.msra.mxu0 0
    %292 = vmatprep.subr.bf16.mxu0 0
    %293 = vmatpush1.bf16.msra.mxu0 0
    %294 = vmatprep.subr.bf16.mxu0 0
    %295 = vmatpush1.bf16.msra.mxu0 0
    %296 = vmatprep.subr.bf16.mxu0 0
    %297 = vmatpush1.bf16.msra.mxu0 0
    %298 = vmatprep.subr.bf16.mxu0 0
    %299 = vmatpush1.bf16.msra.mxu0 0
    %300 = vmatprep.subr.bf16.mxu0 0
    %301 = vmatpush1.bf16.msra.mxu0 0
    %302 = vmatprep.subr.bf16.mxu0 0
    %303 = vmatpush1.bf16.msra.mxu0 0
    %304 = vmatprep.subr.bf16.mxu0 0
    %305 = vmatpush1.bf16.msra.mxu0 0
    %306 = vmatprep.subr.bf16.mxu0 0
    %307 = vmatpush1.bf16.msra.mxu0 0
    %308 = vmatprep.subr.bf16.mxu0 0
    %309 = vmatpush1.bf16.msra.mxu0 0
    %310 = vmatprep.subr.bf16.mxu0 0
    %311 = vmatpush1.bf16.msra.mxu0 0
    %312 = vmatprep.subr.bf16.mxu0 0
    %313 = vmatpush1.bf16.msra.mxu0 0
    %314 = vmatprep.subr.bf16.mxu0 0
    %315 = vmatpush1.bf16.msra.mxu0 0
    %316 = vmatprep.mubr.bf16.mxu0 0
    %317 = vmatmul.mubr.bf16.gmra.mrb[0].mxu0 %v282
    %v318 = vpop.f32.mrb[0].mxu0
    %v319 = vadd.f32 %v267, %v318
    %v320 = vpop.f32.mrb[0].mxu0
    %v321 = vpop.f32.mrb[0].mxu0
    %v322 = vpop.f32.mrb[0].mxu0
    %323 = vdwg.mxu0
    %v324 = vmax.f32 %v319, 0.0
    %325 = vst [vmem:[#allocation2] sm:$0xff] %v324
    %v326 = vld [vmem:[#allocation2] sm:$0xff]
    %v327 = vld [vmem:[#allocation8] sm:$0xff]
    %v328 = vld [vmem:[#allocation8 + $0x8] sm:$0xff]
    %v329 = vld [vmem:[#allocation8 + $0x10] sm:$0xff]
    %v330 = vld [vmem:[#allocation8 + $0x18] sm:$0xff]
    %v331 = vld [vmem:[#allocation8 + $0x20] sm:$0xff]
    %v332 = vld [vmem:[#allocation8 + $0x28] sm:$0xff]
    %v333 = vld [vmem:[#allocation8 + $0x30] sm:$0xff]
    %v334 = vld [vmem:[#allocation8 + $0x38] sm:$0xff]
    %v335 = vld [vmem:[#allocation8 + $0x40] sm:$0xff]
    %v336 = vld [vmem:[#allocation8 + $0x48] sm:$0xff]
    %v337 = vld [vmem:[#allocation8 + $0x50] sm:$0xff]
    %v338 = vld [vmem:[#allocation8 + $0x58] sm:$0xff]
    %v339 = vld [vmem:[#allocation8 + $0x60] sm:$0xff]
    %v340 = vld [vmem:[#allocation8 + $0x68] sm:$0xff]
    %v341 = vld [vmem:[#allocation8 + $0x70] sm:$0xff]
    %v342 = vld [vmem:[#allocation8 + $0x78] sm:$0xff]
    %v343 = vpack.c.bf16 %v326, %v326
    %v344 = vld [vmem:[%s15 + $0x1] sm:$0x3]
    %v345 = vunpack.c.l.bf16 %v344
    %v347 = vlaneseq
    %v348 = vshrl.u32 %v347, 7
    %v349 = vsub.s32 0, %v348
    %v350 = vrot.slane %v345, %v349
    %v351 = vlaneseq
    %v352 = vshrl.u32 %v351, 7
    %v353 = vsub.s32 2, %v352
    %v354 = vrot.slane %v345, %v353
    %v357 = vlaneseq
    %v358 = vshrl.u32 %v357, 7
    %v359 = vsub.s32 0, %v358
    %v360 = vrot.slane %v350, %v359
    %v361 = vlaneseq
    %v362 = vshrl.u32 %v361, 7
    %v363 = vsub.s32 0, %v362
    %v364 = vrot.slane %v354, %v363
    %v381 = vunpack.c.l.b16 %v327
    %v382 = vunpack.c.h.b16 %v327
    %v383 = vunpack.c.l.b16 %v328
    %v384 = vunpack.c.h.b16 %v328
    %v385 = vunpack.c.l.b16 %v329
    %v386 = vunpack.c.h.b16 %v329
    %v387 = vunpack.c.l.b16 %v330
    %v388 = vunpack.c.h.b16 %v330
    %v389 = vunpack.c.l.b16 %v331
    %v390 = vunpack.c.h.b16 %v331
    %v391 = vunpack.c.l.b16 %v332
    %v392 = vunpack.c.h.b16 %v332
    %v393 = vunpack.c.l.b16 %v333
    %v394 = vunpack.c.h.b16 %v333
    %v395 = vunpack.c.l.b16 %v334
    %v396 = vunpack.c.h.b16 %v334
    %v397 = vunpack.c.l.b16 %v335
    %v398 = vunpack.c.h.b16 %v335
    %v399 = vunpack.c.l.b16 %v336
    %v400 = vunpack.c.h.b16 %v336
    %v401 = vunpack.c.l.b16 %v337
    %v402 = vunpack.c.h.b16 %v337
    %v403 = vunpack.c.l.b16 %v338
    %v404 = vunpack.c.h.b16 %v338
    %v405 = vunpack.c.l.b16 %v339
    %v406 = vunpack.c.h.b16 %v339
    %v407 = vunpack.c.l.b16 %v340
    %v408 = vunpack.c.h.b16 %v340
    %v409 = vunpack.c.l.b16 %v341
    %v410 = vunpack.c.h.b16 %v341
    %v411 = vunpack.c.l.b16 %v342
    %v412 = vunpack.c.h.b16 %v342
    %v413 = vpack.c.b16 %v383, %v381
    %v414 = vpack.c.b16 %v384, %v382
    %v415 = vpack.c.b16 %v387, %v385
    %v416 = vpack.c.b16 %v388, %v386
    %v417 = vpack.c.b16 %v391, %v389
    %v418 = vpack.c.b16 %v392, %v390
    %v419 = vpack.c.b16 %v395, %v393
    %v420 = vpack.c.b16 %v396, %v394
    %v421 = vpack.c.b16 %v399, %v397
    %v422 = vpack.c.b16 %v400, %v398
    %v423 = vpack.c.b16 %v403, %v401
    %v424 = vpack.c.b16 %v404, %v402
    %v425 = vpack.c.b16 %v407, %v405
    %v426 = vpack.c.b16 %v408, %v406
    %v427 = vpack.c.b16 %v411, %v409
    %v428 = vpack.c.b16 %v412, %v410
    %445 = vmatprep.subr.bf16.mxu0 %v414
    %446 = vmatpush1.bf16.msra.mxu0 %v413
    %447 = vmatprep.subr.bf16.mxu0 %v416
    %448 = vmatpush1.bf16.msra.mxu0 %v415
    %449 = vmatprep.subr.bf16.mxu0 %v418
    %450 = vmatpush1.bf16.msra.mxu0 %v417
    %451 = vmatprep.subr.bf16.mxu0 %v420
    %452 = vmatpush1.bf16.msra.mxu0 %v419
    %453 = vmatprep.subr.bf16.mxu0 %v422
    %454 = vmatpush1.bf16.msra.mxu0 %v421
    %455 = vmatprep.subr.bf16.mxu0 %v424
    %456 = vmatpush1.bf16.msra.mxu0 %v423
    %457 = vmatprep.subr.bf16.mxu0 %v426
    %458 = vmatpush1.bf16.msra.mxu0 %v425
    %459 = vmatprep.subr.bf16.mxu0 %v428
    %460 = vmatpush1.bf16.msra.mxu0 %v427
    %461 = vmatprep.subr.bf16.mxu0 0
    %462 = vmatpush1.bf16.msra.mxu0 0
    %463 = vmatprep.subr.bf16.mxu0 0
    %464 = vmatpush1.bf16.msra.mxu0 0
    %465 = vmatprep.subr.bf16.mxu0 0
    %466 = vmatpush1.bf16.msra.mxu0 0
    %467 = vmatprep.subr.bf16.mxu0 0
    %468 = vmatpush1.bf16.msra.mxu0 0
    %469 = vmatprep.subr.bf16.mxu0 0
    %470 = vmatpush1.bf16.msra.mxu0 0
    %471 = vmatprep.subr.bf16.mxu0 0
    %472 = vmatpush1.bf16.msra.mxu0 0
    %473 = vmatprep.subr.bf16.mxu0 0
    %474 = vmatpush1.bf16.msra.mxu0 0
    %475 = vmatprep.subr.bf16.mxu0 0
    %476 = vmatpush1.bf16.msra.mxu0 0
    %477 = vmatprep.mubr.bf16.mxu0 0
    %478 = vmatmul.mubr.bf16.gmra.mrb[0].mxu0 %v343
    %v479 = vpop.f32.mrb[0].mxu0
    %v480 = vadd.f32 %v360, %v479
    %v481 = vpop.f32.mrb[0].mxu0
    %v482 = vadd.f32 %v364, %v481
    %v483 = vpop.f32.mrb[0].mxu0
    %v484 = vpop.f32.mrb[0].mxu0
    %485 = vdwg.mxu0
    %v486 = vmax.f32 %v480, 0.0
    %v487 = vmax.f32 %v482, 0.0
    %488 = vst [vmem:[#allocation2] sm:$0xff] %v486
    %489 = vst [vmem:[#allocation2 + $0x8] sm:$0xff] %v487
    %v490 = vld [vmem:[#allocation2] sm:$0xff]
    %v491 = vld [vmem:[#allocation2 + $0x8] sm:$0xff]
    %v492 = vld [vmem:[#allocation9] sm:$0xff]
    %v493 = vld [vmem:[#allocation9 + $0x8] sm:$0xff]
    %v494 = vld [vmem:[#allocation9 + $0x10] sm:$0xff]
    %v495 = vld [vmem:[#allocation9 + $0x18] sm:$0xff]
    %v496 = vld [vmem:[#allocation9 + $0x20] sm:$0xff]
    %v497 = vld [vmem:[#allocation9 + $0x28] sm:$0xff]
    %v498 = vld [vmem:[#allocation9 + $0x30] sm:$0xff]
    %v499 = vld [vmem:[#allocation9 + $0x38] sm:$0xff]
    %v500 = vld [vmem:[#allocation9 + $0x40] sm:$0xff]
    %v501 = vld [vmem:[#allocation9 + $0x48] sm:$0xff]
    %v502 = vld [vmem:[#allocation9 + $0x50] sm:$0xff]
    %v503 = vld [vmem:[#allocation9 + $0x58] sm:$0xff]
    %v504 = vld [vmem:[#allocation9 + $0x60] sm:$0xff]
    %v505 = vld [vmem:[#allocation9 + $0x68] sm:$0xff]
    %v506 = vld [vmem:[#allocation9 + $0x70] sm:$0xff]
    %v507 = vld [vmem:[#allocation9 + $0x78] sm:$0xff]
    %v508 = vld [vmem:[#allocation9 + $0x80] sm:$0xff]
    %v509 = vld [vmem:[#allocation9 + $0x88] sm:$0xff]
    %v510 = vld [vmem:[#allocation9 + $0x90] sm:$0xff]
    %v511 = vld [vmem:[#allocation9 + $0x98] sm:$0xff]
    %v512 = vld [vmem:[#allocation9 + $0xa0] sm:$0xff]
    %v513 = vld [vmem:[#allocation9 + $0xa8] sm:$0xff]
    %v514 = vld [vmem:[#allocation9 + $0xb0] sm:$0xff]
    %v515 = vld [vmem:[#allocation9 + $0xb8] sm:$0xff]
    %v516 = vld [vmem:[#allocation9 + $0xc0] sm:$0xff]
    %v517 = vld [vmem:[#allocation9 + $0xc8] sm:$0xff]
    %v518 = vld [vmem:[#allocation9 + $0xd0] sm:$0xff]
    %v519 = vld [vmem:[#allocation9 + $0xd8] sm:$0xff]
    %v520 = vld [vmem:[#allocation9 + $0xe0] sm:$0xff]
    %v521 = vld [vmem:[#allocation9 + $0xe8] sm:$0xff]
    %v522 = vld [vmem:[#allocation9 + $0xf0] sm:$0xff]
    %v523 = vld [vmem:[#allocation9 + $0xf8] sm:$0xff]
    %v524 = vpack.c.bf16 %v490, %v490
    %v525 = vpack.c.bf16 %v491, %v491
    %v526 = vld [vmem:[%s15 + $0x3] sm:$0x3]
    %v527 = vunpack.c.l.bf16 %v526
    %v529 = vlaneseq
    %v530 = vshrl.u32 %v529, 7
    %v531 = vsub.s32 0, %v530
    %v532 = vrot.slane %v527, %v531
    %v533 = vlaneseq
    %v534 = vshrl.u32 %v533, 7
    %v535 = vsub.s32 2, %v534
    %v536 = vrot.slane %v527, %v535
    %v539 = vlaneseq
    %v540 = vshrl.u32 %v539, 7
    %v541 = vsub.s32 0, %v540
    %v542 = vrot.slane %v532, %v541
    %v543 = vlaneseq
    %v544 = vshrl.u32 %v543, 7
    %v545 = vsub.s32 0, %v544
    %v546 = vrot.slane %v536, %v545
    %v579 = vunpack.c.l.b16 %v492
    %v580 = vunpack.c.h.b16 %v492
    %v581 = vunpack.c.l.b16 %v493
    %v582 = vunpack.c.h.b16 %v493
    %v583 = vunpack.c.l.b16 %v494
    %v584 = vunpack.c.h.b16 %v494
    %v585 = vunpack.c.l.b16 %v495
    %v586 = vunpack.c.h.b16 %v495
    %v587 = vunpack.c.l.b16 %v496
    %v588 = vunpack.c.h.b16 %v496
    %v589 = vunpack.c.l.b16 %v497
    %v590 = vunpack.c.h.b16 %v497
    %v591 = vunpack.c.l.b16 %v498
    %v592 = vunpack.c.h.b16 %v498
    %v593 = vunpack.c.l.b16 %v499
    %v594 = vunpack.c.h.b16 %v499
    %v595 = vunpack.c.l.b16 %v500
    %v596 = vunpack.c.h.b16 %v500
    %v597 = vunpack.c.l.b16 %v501
    %v598 = vunpack.c.h.b16 %v501
    %v599 = vunpack.c.l.b16 %v502
    %v600 = vunpack.c.h.b16 %v502
    %v601 = vunpack.c.l.b16 %v503
    %v602 = vunpack.c.h.b16 %v503
    %v603 = vunpack.c.l.b16 %v504
    %v604 = vunpack.c.h.b16 %v504
    %v605 = vunpack.c.l.b16 %v505
    %v606 = vunpack.c.h.b16 %v505
    %v607 = vunpack.c.l.b16 %v506
    %v608 = vunpack.c.h.b16 %v506
    %v609 = vunpack.c.l.b16 %v507
    %v610 = vunpack.c.h.b16 %v507
    %v611 = vunpack.c.l.b16 %v508
    %v612 = vunpack.c.h.b16 %v508
    %v613 = vunpack.c.l.b16 %v509
    %v614 = vunpack.c.h.b16 %v509
    %v615 = vunpack.c.l.b16 %v510
    %v616 = vunpack.c.h.b16 %v510
    %v617 = vunpack.c.l.b16 %v511
    %v618 = vunpack.c.h.b16 %v511
    %v619 = vunpack.c.l.b16 %v512
    %v620 = vunpack.c.h.b16 %v512
    %v621 = vunpack.c.l.b16 %v513
    %v622 = vunpack.c.h.b16 %v513
    %v623 = vunpack.c.l.b16 %v514
    %v624 = vunpack.c.h.b16 %v514
    %v625 = vunpack.c.l.b16 %v515
    %v626 = vunpack.c.h.b16 %v515
    %v627 = vunpack.c.l.b16 %v516
    %v628 = vunpack.c.h.b16 %v516
    %v629 = vunpack.c.l.b16 %v517
    %v630 = vunpack.c.h.b16 %v517
    %v631 = vunpack.c.l.b16 %v518
    %v632 = vunpack.c.h.b16 %v518
    %v633 = vunpack.c.l.b16 %v519
    %v634 = vunpack.c.h.b16 %v519
    %v635 = vunpack.c.l.b16 %v520
    %v636 = vunpack.c.h.b16 %v520
    %v637 = vunpack.c.l.b16 %v521
    %v638 = vunpack.c.h.b16 %v521
    %v639 = vunpack.c.l.b16 %v522
    %v640 = vunpack.c.h.b16 %v522
    %v641 = vunpack.c.l.b16 %v523
    %v642 = vunpack.c.h.b16 %v523
    %v643 = vpack.c.b16 %v581, %v579
    %v644 = vpack.c.b16 %v582, %v580
    %v645 = vpack.c.b16 %v585, %v583
    %v646 = vpack.c.b16 %v586, %v584
    %v647 = vpack.c.b16 %v589, %v587
    %v648 = vpack.c.b16 %v590, %v588
    %v649 = vpack.c.b16 %v593, %v591
    %v650 = vpack.c.b16 %v594, %v592
    %v651 = vpack.c.b16 %v597, %v595
    %v652 = vpack.c.b16 %v598, %v596
    %v653 = vpack.c.b16 %v601, %v599
    %v654 = vpack.c.b16 %v602, %v600
    %v655 = vpack.c.b16 %v605, %v603
    %v656 = vpack.c.b16 %v606, %v604
    %v657 = vpack.c.b16 %v609, %v607
    %v658 = vpack.c.b16 %v610, %v608
    %v659 = vpack.c.b16 %v613, %v611
    %v660 = vpack.c.b16 %v614, %v612
    %v661 = vpack.c.b16 %v617, %v615
    %v662 = vpack.c.b16 %v618, %v616
    %v663 = vpack.c.b16 %v621, %v619
    %v664 = vpack.c.b16 %v622, %v620
    %v665 = vpack.c.b16 %v625, %v623
    %v666 = vpack.c.b16 %v626, %v624
    %v667 = vpack.c.b16 %v629, %v627
    %v668 = vpack.c.b16 %v630, %v628
    %v669 = vpack.c.b16 %v633, %v631
    %v670 = vpack.c.b16 %v634, %v632
    %v671 = vpack.c.b16 %v637, %v635
    %v672 = vpack.c.b16 %v638, %v636
    %v673 = vpack.c.b16 %v641, %v639
    %v674 = vpack.c.b16 %v642, %v640
    %707 = vmatprep.subr.bf16.mxu0 %v644
    %708 = vmatpush1.bf16.msra.mxu0 %v643
    %709 = vmatprep.subr.bf16.mxu0 %v646
    %710 = vmatpush1.bf16.msra.mxu0 %v645
    %711 = vmatprep.subr.bf16.mxu0 %v648
    %712 = vmatpush1.bf16.msra.mxu0 %v647
    %713 = vmatprep.subr.bf16.mxu0 %v650
    %714 = vmatpush1.bf16.msra.mxu0 %v649
    %715 = vmatprep.subr.bf16.mxu0 %v652
    %716 = vmatpush1.bf16.msra.mxu0 %v651
    %717 = vmatprep.subr.bf16.mxu0 %v654
    %718 = vmatpush1.bf16.msra.mxu0 %v653
    %719 = vmatprep.subr.bf16.mxu0 %v656
    %720 = vmatpush1.bf16.msra.mxu0 %v655
    %721 = vmatprep.subr.bf16.mxu0 %v658
    %722 = vmatpush1.bf16.msra.mxu0 %v657
    %723 = vmatprep.subr.bf16.mxu0 %v660
    %724 = vmatpush1.bf16.msra.mxu0 %v659
    %725 = vmatprep.subr.bf16.mxu0 %v662
    %726 = vmatpush1.bf16.msra.mxu0 %v661
    %727 = vmatprep.subr.bf16.mxu0 %v664
    %728 = vmatpush1.bf16.msra.mxu0 %v663
    %729 = vmatprep.subr.bf16.mxu0 %v666
    %730 = vmatpush1.bf16.msra.mxu0 %v665
    %731 = vmatprep.subr.bf16.mxu0 %v668
    %732 = vmatpush1.bf16.msra.mxu0 %v667
    %733 = vmatprep.subr.bf16.mxu0 %v670
    %734 = vmatpush1.bf16.msra.mxu0 %v669
    %735 = vmatprep.subr.bf16.mxu0 %v672
    %736 = vmatpush1.bf16.msra.mxu0 %v671
    %737 = vmatprep.subr.bf16.mxu0 %v674
    %738 = vmatpush1.bf16.msra.mxu0 %v673
    %739 = vmatprep.mubr.bf16.mxu0 %v525
    %740 = vmatmul.mubr.bf16.gmra.mrb[0].mxu0 %v524
    %v741 = vpop.f32.mrb[0].mxu0
    %v742 = vadd.f32 %v542, %v741
    %v743 = vpop.f32.mrb[0].mxu0
    %v744 = vadd.f32 %v546, %v743
    %v745 = vpop.f32.mrb[0].mxu0
    %v746 = vpop.f32.mrb[0].mxu0
    %747 = vdwg.mxu0
    %v748 = vmax.f32 %v742, 0.0
    %v749 = vmax.f32 %v744, 0.0
    %750 = vst [vmem:[#allocation2] sm:$0xff] %v748
    %751 = vst [vmem:[#allocation2 + $0x8] sm:$0xff] %v749
    %v752 = vld [vmem:[#allocation2] sm:$0xff]
    %v753 = vld [vmem:[#allocation2 + $0x8] sm:$0xff]
    %v754 = vld [vmem:[#allocation11] sm:$0xff]
    %v755 = vld [vmem:[#allocation11 + $0x8] sm:$0xff]
    %v756 = vld [vmem:[#allocation11 + $0x10] sm:$0xff]
    %v757 = vld [vmem:[#allocation11 + $0x18] sm:$0xff]
    %v758 = vld [vmem:[#allocation11 + $0x20] sm:$0xff]
    %v759 = vld [vmem:[#allocation11 + $0x28] sm:$0xff]
    %v760 = vld [vmem:[#allocation11 + $0x30] sm:$0xff]
    %v761 = vld [vmem:[#allocation11 + $0x38] sm:$0xff]
    %v762 = vld [vmem:[#allocation11 + $0x40] sm:$0xff]
    %v763 = vld [vmem:[#allocation11 + $0x48] sm:$0xff]
    %v764 = vld [vmem:[#allocation11 + $0x50] sm:$0xff]
    %v765 = vld [vmem:[#allocation11 + $0x58] sm:$0xff]
    %v766 = vld [vmem:[#allocation11 + $0x60] sm:$0xff]
    %v767 = vld [vmem:[#allocation11 + $0x68] sm:$0xff]
    %v768 = vld [vmem:[#allocation11 + $0x70] sm:$0xff]
    %v769 = vld [vmem:[#allocation11 + $0x78] sm:$0xff]
    %v770 = vld [vmem:[#allocation11 + $0x80] sm:$0xff]
    %v771 = vld [vmem:[#allocation11 + $0x88] sm:$0xff]
    %v772 = vld [vmem:[#allocation11 + $0x90] sm:$0xff]
    %v773 = vld [vmem:[#allocation11 + $0x98] sm:$0xff]
    %v774 = vld [vmem:[#allocation11 + $0xa0] sm:$0xff]
    %v775 = vld [vmem:[#allocation11 + $0xa8] sm:$0xff]
    %v776 = vld [vmem:[#allocation11 + $0xb0] sm:$0xff]
    %v777 = vld [vmem:[#allocation11 + $0xb8] sm:$0xff]
    %v778 = vld [vmem:[#allocation11 + $0xc0] sm:$0xff]
    %v779 = vld [vmem:[#allocation11 + $0xc8] sm:$0xff]
    %v780 = vld [vmem:[#allocation11 + $0xd0] sm:$0xff]
    %v781 = vld [vmem:[#allocation11 + $0xd8] sm:$0xff]
    %v782 = vld [vmem:[#allocation11 + $0xe0] sm:$0xff]
    %v783 = vld [vmem:[#allocation11 + $0xe8] sm:$0xff]
    %v784 = vld [vmem:[#allocation11 + $0xf0] sm:$0xff]
    %v785 = vld [vmem:[#allocation11 + $0xf8] sm:$0xff]
    %v786 = vpack.c.bf16 %v752, %v752
    %v787 = vpack.c.bf16 %v753, %v753
    %v788 = vld [vmem:[%s15 + $0x5] sm:$0x3]
    %v789 = vunpack.c.l.bf16 %v788
    %v791 = vlaneseq
    %v792 = vshrl.u32 %v791, 7
    %v793 = vsub.s32 0, %v792
    %v794 = vrot.slane %v789, %v793
    %v795 = vlaneseq
    %v796 = vshrl.u32 %v795, 7
    %v797 = vsub.s32 2, %v796
    %v798 = vrot.slane %v789, %v797
    %v801 = vlaneseq
    %v802 = vshrl.u32 %v801, 7
    %v803 = vsub.s32 0, %v802
    %v804 = vrot.slane %v794, %v803
    %v805 = vlaneseq
    %v806 = vshrl.u32 %v805, 7
    %v807 = vsub.s32 0, %v806
    %v808 = vrot.slane %v798, %v807
    %v841 = vunpack.c.l.b16 %v754
    %v842 = vunpack.c.h.b16 %v754
    %v843 = vunpack.c.l.b16 %v755
    %v844 = vunpack.c.h.b16 %v755
    %v845 = vunpack.c.l.b16 %v756
    %v846 = vunpack.c.h.b16 %v756
    %v847 = vunpack.c.l.b16 %v757
    %v848 = vunpack.c.h.b16 %v757
    %v849 = vunpack.c.l.b16 %v758
    %v850 = vunpack.c.h.b16 %v758
    %v851 = vunpack.c.l.b16 %v759
    %v852 = vunpack.c.h.b16 %v759
    %v853 = vunpack.c.l.b16 %v760
    %v854 = vunpack.c.h.b16 %v760
    %v855 = vunpack.c.l.b16 %v761
    %v856 = vunpack.c.h.b16 %v761
    %v857 = vunpack.c.l.b16 %v762
    %v858 = vunpack.c.h.b16 %v762
    %v859 = vunpack.c.l.b16 %v763
    %v860 = vunpack.c.h.b16 %v763
    %v861 = vunpack.c.l.b16 %v764
    %v862 = vunpack.c.h.b16 %v764
    %v863 = vunpack.c.l.b16 %v765
    %v864 = vunpack.c.h.b16 %v765
    %v865 = vunpack.c.l.b16 %v766
    %v866 = vunpack.c.h.b16 %v766
    %v867 = vunpack.c.l.b16 %v767
    %v868 = vunpack.c.h.b16 %v767
    %v869 = vunpack.c.l.b16 %v768
    %v870 = vunpack.c.h.b16 %v768
    %v871 = vunpack.c.l.b16 %v769
    %v872 = vunpack.c.h.b16 %v769
    %v873 = vunpack.c.l.b16 %v770
    %v874 = vunpack.c.h.b16 %v770
    %v875 = vunpack.c.l.b16 %v771
    %v876 = vunpack.c.h.b16 %v771
    %v877 = vunpack.c.l.b16 %v772
    %v878 = vunpack.c.h.b16 %v772
    %v879 = vunpack.c.l.b16 %v773
    %v880 = vunpack.c.h.b16 %v773
    %v881 = vunpack.c.l.b16 %v774
    %v882 = vunpack.c.h.b16 %v774
    %v883 = vunpack.c.l.b16 %v775
    %v884 = vunpack.c.h.b16 %v775
    %v885 = vunpack.c.l.b16 %v776
    %v886 = vunpack.c.h.b16 %v776
    %v887 = vunpack.c.l.b16 %v777
    %v888 = vunpack.c.h.b16 %v777
    %v889 = vunpack.c.l.b16 %v778
    %v890 = vunpack.c.h.b16 %v778
    %v891 = vunpack.c.l.b16 %v779
    %v892 = vunpack.c.h.b16 %v779
    %v893 = vunpack.c.l.b16 %v780
    %v894 = vunpack.c.h.b16 %v780
    %v895 = vunpack.c.l.b16 %v781
    %v896 = vunpack.c.h.b16 %v781
    %v897 = vunpack.c.l.b16 %v782
    %v898 = vunpack.c.h.b16 %v782
    %v899 = vunpack.c.l.b16 %v783
    %v900 = vunpack.c.h.b16 %v783
    %v901 = vunpack.c.l.b16 %v784
    %v902 = vunpack.c.h.b16 %v784
    %v903 = vunpack.c.l.b16 %v785
    %v904 = vunpack.c.h.b16 %v785
    %v905 = vpack.c.b16 %v843, %v841
    %v906 = vpack.c.b16 %v844, %v842
    %v907 = vpack.c.b16 %v847, %v845
    %v908 = vpack.c.b16 %v848, %v846
    %v909 = vpack.c.b16 %v851, %v849
    %v910 = vpack.c.b16 %v852, %v850
    %v911 = vpack.c.b16 %v855, %v853
    %v912 = vpack.c.b16 %v856, %v854
    %v913 = vpack.c.b16 %v859, %v857
    %v914 = vpack.c.b16 %v860, %v858
    %v915 = vpack.c.b16 %v863, %v861
    %v916 = vpack.c.b16 %v864, %v862
    %v917 = vpack.c.b16 %v867, %v865
    %v918 = vpack.c.b16 %v868, %v866
    %v919 = vpack.c.b16 %v871, %v869
    %v920 = vpack.c.b16 %v872, %v870
    %v921 = vpack.c.b16 %v875, %v873
    %v922 = vpack.c.b16 %v876, %v874
    %v923 = vpack.c.b16 %v879, %v877
    %v924 = vpack.c.b16 %v880, %v878
    %v925 = vpack.c.b16 %v883, %v881
    %v926 = vpack.c.b16 %v884, %v882
    %v927 = vpack.c.b16 %v887, %v885
    %v928 = vpack.c.b16 %v888, %v886
    %v929 = vpack.c.b16 %v891, %v889
    %v930 = vpack.c.b16 %v892, %v890
    %v931 = vpack.c.b16 %v895, %v893
    %v932 = vpack.c.b16 %v896, %v894
    %v933 = vpack.c.b16 %v899, %v897
    %v934 = vpack.c.b16 %v900, %v898
    %v935 = vpack.c.b16 %v903, %v901
    %v936 = vpack.c.b16 %v904, %v902
    %969 = vmatprep.subr.bf16.mxu0 %v906
    %970 = vmatpush1.bf16.msra.mxu0 %v905
    %971 = vmatprep.subr.bf16.mxu0 %v908
    %972 = vmatpush1.bf16.msra.mxu0 %v907
    %973 = vmatprep.subr.bf16.mxu0 %v910
    %974 = vmatpush1.bf16.msra.mxu0 %v909
    %975 = vmatprep.subr.bf16.mxu0 %v912
    %976 = vmatpush1.bf16.msra.mxu0 %v911
    %977 = vmatprep.subr.bf16.mxu0 %v914
    %978 = vmatpush1.bf16.msra.mxu0 %v913
    %979 = vmatprep.subr.bf16.mxu0 %v916
    %980 = vmatpush1.bf16.msra.mxu0 %v915
    %981 = vmatprep.subr.bf16.mxu0 %v918
    %982 = vmatpush1.bf16.msra.mxu0 %v917
    %983 = vmatprep.subr.bf16.mxu0 %v920
    %984 = vmatpush1.bf16.msra.mxu0 %v919
    %985 = vmatprep.subr.bf16.mxu0 %v922
    %986 = vmatpush1.bf16.msra.mxu0 %v921
    %987 = vmatprep.subr.bf16.mxu0 %v924
    %988 = vmatpush1.bf16.msra.mxu0 %v923
    %989 = vmatprep.subr.bf16.mxu0 %v926
    %990 = vmatpush1.bf16.msra.mxu0 %v925
    %991 = vmatprep.subr.bf16.mxu0 %v928
    %992 = vmatpush1.bf16.msra.mxu0 %v927
    %993 = vmatprep.subr.bf16.mxu0 %v930
    %994 = vmatpush1.bf16.msra.mxu0 %v929
    %995 = vmatprep.subr.bf16.mxu0 %v932
    %996 = vmatpush1.bf16.msra.mxu0 %v931
    %997 = vmatprep.subr.bf16.mxu0 %v934
    %998 = vmatpush1.bf16.msra.mxu0 %v933
    %999 = vmatprep.subr.bf16.mxu0 %v936
    %1000 = vmatpush1.bf16.msra.mxu0 %v935
    %1001 = vmatprep.mubr.bf16.mxu0 %v787
    %1002 = vmatmul.mubr.bf16.gmra.mrb[0].mxu0 %v786
    %v1003 = vpop.f32.mrb[0].mxu0
    %v1004 = vadd.f32 %v804, %v1003
    %v1005 = vpop.f32.mrb[0].mxu0
    %v1006 = vadd.f32 %v808, %v1005
    %v1007 = vpop.f32.mrb[0].mxu0
    %v1008 = vpop.f32.mrb[0].mxu0
    %1009 = vdwg.mxu0
    %v1010 = vmax.f32 %v1004, 0.0
    %v1011 = vmax.f32 %v1006, 0.0
    %1012 = vst [vmem:[#allocation2] sm:$0xff] %v1010
    %1013 = vst [vmem:[#allocation2 + $0x8] sm:$0xff] %v1011
    %v1014 = vld [vmem:[#allocation2] sm:$0xff]
    %v1015 = vld [vmem:[#allocation2 + $0x8] sm:$0xff]
    %v1016 = vld [vmem:[#allocation12] sm:$0xff]
    %v1017 = vld [vmem:[#allocation12 + $0x8] sm:$0xff]
    %v1018 = vld [vmem:[#allocation12 + $0x10] sm:$0xff]
    %v1019 = vld [vmem:[#allocation12 + $0x18] sm:$0xff]
    %v1020 = vld [vmem:[#allocation12 + $0x20] sm:$0xff]
    %v1021 = vld [vmem:[#allocation12 + $0x28] sm:$0xff]
    %v1022 = vld [vmem:[#allocation12 + $0x30] sm:$0xff]
    %v1023 = vld [vmem:[#allocation12 + $0x38] sm:$0xff]
    %v1024 = vld [vmem:[#allocation12 + $0x40] sm:$0xff]
    %v1025 = vld [vmem:[#allocation12 + $0x48] sm:$0xff]
    %v1026 = vld [vmem:[#allocation12 + $0x50] sm:$0xff]
    %v1027 = vld [vmem:[#allocation12 + $0x58] sm:$0xff]
    %v1028 = vld [vmem:[#allocation12 + $0x60] sm:$0xff]
    %v1029 = vld [vmem:[#allocation12 + $0x68] sm:$0xff]
    %v1030 = vld [vmem:[#allocation12 + $0x70] sm:$0xff]
    %v1031 = vld [vmem:[#allocation12 + $0x78] sm:$0xff]
    %v1032 = vld [vmem:[#allocation12 + $0x80] sm:$0xff]
    %v1033 = vld [vmem:[#allocation12 + $0x88] sm:$0xff]
    %v1034 = vld [vmem:[#allocation12 + $0x90] sm:$0xff]
    %v1035 = vld [vmem:[#allocation12 + $0x98] sm:$0xff]
    %v1036 = vld [vmem:[#allocation12 + $0xa0] sm:$0xff]
    %v1037 = vld [vmem:[#allocation12 + $0xa8] sm:$0xff]
    %v1038 = vld [vmem:[#allocation12 + $0xb0] sm:$0xff]
    %v1039 = vld [vmem:[#allocation12 + $0xb8] sm:$0xff]
    %v1040 = vld [vmem:[#allocation12 + $0xc0] sm:$0xff]
    %v1041 = vld [vmem:[#allocation12 + $0xc8] sm:$0xff]
    %v1042 = vld [vmem:[#allocation12 + $0xd0] sm:$0xff]
    %v1043 = vld [vmem:[#allocation12 + $0xd8] sm:$0xff]
    %v1044 = vld [vmem:[#allocation12 + $0xe0] sm:$0xff]
    %v1045 = vld [vmem:[#allocation12 + $0xe8] sm:$0xff]
    %v1046 = vld [vmem:[#allocation12 + $0xf0] sm:$0xff]
    %v1047 = vld [vmem:[#allocation12 + $0xf8] sm:$0xff]
    %v1048 = vpack.c.bf16 %v1014, %v1014
    %v1049 = vpack.c.bf16 %v1015, %v1015
    %v1050 = vld [vmem:[%s15 + $0x7] sm:$0x3]
    %v1051 = vunpack.c.l.bf16 %v1050
    %v1053 = vlaneseq
    %v1054 = vshrl.u32 %v1053, 7
    %v1055 = vsub.s32 0, %v1054
    %v1056 = vrot.slane %v1051, %v1055
    %v1057 = vlaneseq
    %v1058 = vshrl.u32 %v1057, 7
    %v1059 = vsub.s32 2, %v1058
    %v1060 = vrot.slane %v1051, %v1059
    %v1063 = vlaneseq
    %v1064 = vshrl.u32 %v1063, 7
    %v1065 = vsub.s32 0, %v1064
    %v1066 = vrot.slane %v1056, %v1065
    %v1067 = vlaneseq
    %v1068 = vshrl.u32 %v1067, 7
    %v1069 = vsub.s32 0, %v1068
    %v1070 = vrot.slane %v1060, %v1069
    %v1103 = vunpack.c.l.b16 %v1016
    %v1104 = vunpack.c.h.b16 %v1016
    %v1105 = vunpack.c.l.b16 %v1017
    %v1106 = vunpack.c.h.b16 %v1017
    %v1107 = vunpack.c.l.b16 %v1018
    %v1108 = vunpack.c.h.b16 %v1018
    %v1109 = vunpack.c.l.b16 %v1019
    %v1110 = vunpack.c.h.b16 %v1019
    %v1111 = vunpack.c.l.b16 %v1020
    %v1112 = vunpack.c.h.b16 %v1020
    %v1113 = vunpack.c.l.b16 %v1021
    %v1114 = vunpack.c.h.b16 %v1021
    %v1115 = vunpack.c.l.b16 %v1022
    %v1116 = vunpack.c.h.b16 %v1022
    %v1117 = vunpack.c.l.b16 %v1023
    %v1118 = vunpack.c.h.b16 %v1023
    %v1119 = vunpack.c.l.b16 %v1024
    %v1120 = vunpack.c.h.b16 %v1024
    %v1121 = vunpack.c.l.b16 %v1025
    %v1122 = vunpack.c.h.b16 %v1025
    %v1123 = vunpack.c.l.b16 %v1026
    %v1124 = vunpack.c.h.b16 %v1026
    %v1125 = vunpack.c.l.b16 %v1027
    %v1126 = vunpack.c.h.b16 %v1027
    %v1127 = vunpack.c.l.b16 %v1028
    %v1128 = vunpack.c.h.b16 %v1028
    %v1129 = vunpack.c.l.b16 %v1029
    %v1130 = vunpack.c.h.b16 %v1029
    %v1131 = vunpack.c.l.b16 %v1030
    %v1132 = vunpack.c.h.b16 %v1030
    %v1133 = vunpack.c.l.b16 %v1031
    %v1134 = vunpack.c.h.b16 %v1031
    %v1135 = vunpack.c.l.b16 %v1032
    %v1136 = vunpack.c.h.b16 %v1032
    %v1137 = vunpack.c.l.b16 %v1033
    %v1138 = vunpack.c.h.b16 %v1033
    %v1139 = vunpack.c.l.b16 %v1034
    %v1140 = vunpack.c.h.b16 %v1034
    %v1141 = vunpack.c.l.b16 %v1035
    %v1142 = vunpack.c.h.b16 %v1035
    %v1143 = vunpack.c.l.b16 %v1036
    %v1144 = vunpack.c.h.b16 %v1036
    %v1145 = vunpack.c.l.b16 %v1037
    %v1146 = vunpack.c.h.b16 %v1037
    %v1147 = vunpack.c.l.b16 %v1038
    %v1148 = vunpack.c.h.b16 %v1038
    %v1149 = vunpack.c.l.b16 %v1039
    %v1150 = vunpack.c.h.b16 %v1039
    %v1151 = vunpack.c.l.b16 %v1040
    %v1152 = vunpack.c.h.b16 %v1040
    %v1153 = vunpack.c.l.b16 %v1041
    %v1154 = vunpack.c.h.b16 %v1041
    %v1155 = vunpack.c.l.b16 %v1042
    %v1156 = vunpack.c.h.b16 %v1042
    %v1157 = vunpack.c.l.b16 %v1043
    %v1158 = vunpack.c.h.b16 %v1043
    %v1159 = vunpack.c.l.b16 %v1044
    %v1160 = vunpack.c.h.b16 %v1044
    %v1161 = vunpack.c.l.b16 %v1045
    %v1162 = vunpack.c.h.b16 %v1045
    %v1163 = vunpack.c.l.b16 %v1046
    %v1164 = vunpack.c.h.b16 %v1046
    %v1165 = vunpack.c.l.b16 %v1047
    %v1166 = vunpack.c.h.b16 %v1047
    %v1167 = vpack.c.b16 %v1105, %v1103
    %v1168 = vpack.c.b16 %v1106, %v1104
    %v1169 = vpack.c.b16 %v1109, %v1107
    %v1170 = vpack.c.b16 %v1110, %v1108
    %v1171 = vpack.c.b16 %v1113, %v1111
    %v1172 = vpack.c.b16 %v1114, %v1112
    %v1173 = vpack.c.b16 %v1117, %v1115
    %v1174 = vpack.c.b16 %v1118, %v1116
    %v1175 = vpack.c.b16 %v1121, %v1119
    %v1176 = vpack.c.b16 %v1122, %v1120
    %v1177 = vpack.c.b16 %v1125, %v1123
    %v1178 = vpack.c.b16 %v1126, %v1124
    %v1179 = vpack.c.b16 %v1129, %v1127
    %v1180 = vpack.c.b16 %v1130, %v1128
    %v1181 = vpack.c.b16 %v1133, %v1131
    %v1182 = vpack.c.b16 %v1134, %v1132
    %v1183 = vpack.c.b16 %v1137, %v1135
    %v1184 = vpack.c.b16 %v1138, %v1136
    %v1185 = vpack.c.b16 %v1141, %v1139
    %v1186 = vpack.c.b16 %v1142, %v1140
    %v1187 = vpack.c.b16 %v1145, %v1143
    %v1188 = vpack.c.b16 %v1146, %v1144
    %v1189 = vpack.c.b16 %v1149, %v1147
    %v1190 = vpack.c.b16 %v1150, %v1148
    %v1191 = vpack.c.b16 %v1153, %v1151
    %v1192 = vpack.c.b16 %v1154, %v1152
    %v1193 = vpack.c.b16 %v1157, %v1155
    %v1194 = vpack.c.b16 %v1158, %v1156
    %v1195 = vpack.c.b16 %v1161, %v1159
    %v1196 = vpack.c.b16 %v1162, %v1160
    %v1197 = vpack.c.b16 %v1165, %v1163
    %v1198 = vpack.c.b16 %v1166, %v1164
    %1231 = vmatprep.subr.bf16.mxu0 %v1168
    %1232 = vmatpush1.bf16.msra.mxu0 %v1167
    %1233 = vmatprep.subr.bf16.mxu0 %v1170
    %1234 = vmatpush1.bf16.msra.mxu0 %v1169
    %1235 = vmatprep.subr.bf16.mxu0 %v1172
    %1236 = vmatpush1.bf16.msra.mxu0 %v1171
    %1237 = vmatprep.subr.bf16.mxu0 %v1174
    %1238 = vmatpush1.bf16.msra.mxu0 %v1173
    %1239 = vmatprep.subr.bf16.mxu0 %v1176
    %1240 = vmatpush1.bf16.msra.mxu0 %v1175
    %1241 = vmatprep.subr.bf16.mxu0 %v1178
    %1242 = vmatpush1.bf16.msra.mxu0 %v1177
    %1243 = vmatprep.subr.bf16.mxu0 %v1180
    %1244 = vmatpush1.bf16.msra.mxu0 %v1179
    %1245 = vmatprep.subr.bf16.mxu0 %v1182
    %1246 = vmatpush1.bf16.msra.mxu0 %v1181
    %1247 = vmatprep.subr.bf16.mxu0 %v1184
    %1248 = vmatpush1.bf16.msra.mxu0 %v1183
    %1249 = vmatprep.subr.bf16.mxu0 %v1186
    %1250 = vmatpush1.bf16.msra.mxu0 %v1185
    %1251 = vmatprep.subr.bf16.mxu0 %v1188
    %1252 = vmatpush1.bf16.msra.mxu0 %v1187
    %1253 = vmatprep.subr.bf16.mxu0 %v1190
    %1254 = vmatpush1.bf16.msra.mxu0 %v1189
    %1255 = vmatprep.subr.bf16.mxu0 %v1192
    %1256 = vmatpush1.bf16.msra.mxu0 %v1191
    %1257 = vmatprep.subr.bf16.mxu0 %v1194
    %1258 = vmatpush1.bf16.msra.mxu0 %v1193
    %1259 = vmatprep.subr.bf16.mxu0 %v1196
    %1260 = vmatpush1.bf16.msra.mxu0 %v1195
    %1261 = vmatprep.subr.bf16.mxu0 %v1198
    %1262 = vmatpush1.bf16.msra.mxu0 %v1197
    %1263 = vmatprep.mubr.bf16.mxu0 %v1049
    %1264 = vmatmul.mubr.bf16.gmra.mrb[0].mxu0 %v1048
    %v1265 = vpop.f32.mrb[0].mxu0
    %v1266 = vadd.f32 %v1066, %v1265
    %v1267 = vpop.f32.mrb[0].mxu0
    %v1268 = vadd.f32 %v1070, %v1267
    %v1269 = vpop.f32.mrb[0].mxu0
    %v1270 = vpop.f32.mrb[0].mxu0
    %1271 = vdwg.mxu0
    %v1272 = vmax.f32 %v1266, 0.0
    %v1273 = vmax.f32 %v1268, 0.0
    %1274 = vst [vmem:[#allocation2] sm:$0xff] %v1272
    %1275 = vst [vmem:[#allocation2 + $0x8] sm:$0xff] %v1273
    %v1276 = vld [vmem:[#allocation2] sm:$0xff]
    %v1277 = vld [vmem:[#allocation2 + $0x8] sm:$0xff]
    %v1278 = vld [vmem:[#allocation14] sm:$0xff]
    %v1279 = vld [vmem:[#allocation14 + $0x8] sm:$0xff]
    %v1280 = vld [vmem:[#allocation14 + $0x10] sm:$0xff]
    %v1281 = vld [vmem:[#allocation14 + $0x18] sm:$0xff]
    %v1282 = vld [vmem:[#allocation14 + $0x20] sm:$0xff]
    %v1283 = vld [vmem:[#allocation14 + $0x28] sm:$0xff]
    %v1284 = vld [vmem:[#allocation14 + $0x30] sm:$0xff]
    %v1285 = vld [vmem:[#allocation14 + $0x38] sm:$0xff]
    %v1286 = vld [vmem:[#allocation14 + $0x40] sm:$0xff]
    %v1287 = vld [vmem:[#allocation14 + $0x48] sm:$0xff]
    %v1288 = vld [vmem:[#allocation14 + $0x50] sm:$0xff]
    %v1289 = vld [vmem:[#allocation14 + $0x58] sm:$0xff]
    %v1290 = vld [vmem:[#allocation14 + $0x60] sm:$0xff]
    %v1291 = vld [vmem:[#allocation14 + $0x68] sm:$0xff]
    %v1292 = vld [vmem:[#allocation14 + $0x70] sm:$0xff]
    %v1293 = vld [vmem:[#allocation14 + $0x78] sm:$0xff]
    %v1294 = vld [vmem:[#allocation14 + $0x80] sm:$0xff]
    %v1295 = vld [vmem:[#allocation14 + $0x88] sm:$0xff]
    %v1296 = vld [vmem:[#allocation14 + $0x90] sm:$0xff]
    %v1297 = vld [vmem:[#allocation14 + $0x98] sm:$0xff]
    %v1298 = vld [vmem:[#allocation14 + $0xa0] sm:$0xff]
    %v1299 = vld [vmem:[#allocation14 + $0xa8] sm:$0xff]
    %v1300 = vld [vmem:[#allocation14 + $0xb0] sm:$0xff]
    %v1301 = vld [vmem:[#allocation14 + $0xb8] sm:$0xff]
    %v1302 = vld [vmem:[#allocation14 + $0xc0] sm:$0xff]
    %v1303 = vld [vmem:[#allocation14 + $0xc8] sm:$0xff]
    %v1304 = vld [vmem:[#allocation14 + $0xd0] sm:$0xff]
    %v1305 = vld [vmem:[#allocation14 + $0xd8] sm:$0xff]
    %v1306 = vld [vmem:[#allocation14 + $0xe0] sm:$0xff]
    %v1307 = vld [vmem:[#allocation14 + $0xe8] sm:$0xff]
    %v1308 = vld [vmem:[#allocation14 + $0xf0] sm:$0xff]
    %v1309 = vld [vmem:[#allocation14 + $0xf8] sm:$0xff]
    %v1310 = vld [vmem:[#allocation14 + $0x100] sm:$0xff]
    %v1311 = vld [vmem:[#allocation14 + $0x108] sm:$0xff]
    %v1312 = vld [vmem:[#allocation14 + $0x110] sm:$0xff]
    %v1313 = vld [vmem:[#allocation14 + $0x118] sm:$0xff]
    %v1314 = vld [vmem:[#allocation14 + $0x120] sm:$0xff]
    %v1315 = vld [vmem:[#allocation14 + $0x128] sm:$0xff]
    %v1316 = vld [vmem:[#allocation14 + $0x130] sm:$0xff]
    %v1317 = vld [vmem:[#allocation14 + $0x138] sm:$0xff]
    %v1318 = vld [vmem:[#allocation14 + $0x140] sm:$0xff]
    %v1319 = vld [vmem:[#allocation14 + $0x148] sm:$0xff]
    %v1320 = vld [vmem:[#allocation14 + $0x150] sm:$0xff]
    %v1321 = vld [vmem:[#allocation14 + $0x158] sm:$0xff]
    %v1322 = vld [vmem:[#allocation14 + $0x160] sm:$0xff]
    %v1323 = vld [vmem:[#allocation14 + $0x168] sm:$0xff]
    %v1324 = vld [vmem:[#allocation14 + $0x170] sm:$0xff]
    %v1325 = vld [vmem:[#allocation14 + $0x178] sm:$0xff]
    %v1326 = vld [vmem:[#allocation14 + $0x180] sm:$0xff]
    %v1327 = vld [vmem:[#allocation14 + $0x188] sm:$0xff]
    %v1328 = vld [vmem:[#allocation14 + $0x190] sm:$0xff]
    %v1329 = vld [vmem:[#allocation14 + $0x198] sm:$0xff]
    %v1330 = vld [vmem:[#allocation14 + $0x1a0] sm:$0xff]
    %v1331 = vld [vmem:[#allocation14 + $0x1a8] sm:$0xff]
    %v1332 = vld [vmem:[#allocation14 + $0x1b0] sm:$0xff]
    %v1333 = vld [vmem:[#allocation14 + $0x1b8] sm:$0xff]
    %v1334 = vld [vmem:[#allocation14 + $0x1c0] sm:$0xff]
    %v1335 = vld [vmem:[#allocation14 + $0x1c8] sm:$0xff]
    %v1336 = vld [vmem:[#allocation14 + $0x1d0] sm:$0xff]
    %v1337 = vld [vmem:[#allocation14 + $0x1d8] sm:$0xff]
    %v1338 = vld [vmem:[#allocation14 + $0x1e0] sm:$0xff]
    %v1339 = vld [vmem:[#allocation14 + $0x1e8] sm:$0xff]
    %v1340 = vld [vmem:[#allocation14 + $0x1f0] sm:$0xff]
    %v1341 = vld [vmem:[#allocation14 + $0x1f8] sm:$0xff]
    %v1342 = vpack.c.bf16 %v1276, %v1276
    %v1343 = vpack.c.bf16 %v1277, %v1277
    %v1344 = vld [vmem:[%s15 + $0x9] sm:$0xf]
    %v1345 = vunpack.c.l.bf16 %v1344
    %v1347 = vlaneseq
    %v1348 = vshrl.u32 %v1347, 7
    %v1349 = vsub.s32 0, %v1348
    %v1350 = vrot.slane %v1345, %v1349
    %v1351 = vlaneseq
    %v1352 = vshrl.u32 %v1351, 7
    %v1353 = vsub.s32 2, %v1352
    %v1354 = vrot.slane %v1345, %v1353
    %v1355 = vlaneseq
    %v1356 = vshrl.u32 %v1355, 7
    %v1357 = vsub.s32 4, %v1356
    %v1358 = vrot.slane %v1345, %v1357
    %v1359 = vlaneseq
    %v1360 = vshrl.u32 %v1359, 7
    %v1361 = vsub.s32 6, %v1360
    %v1362 = vrot.slane %v1345, %v1361
    %v1367 = vlaneseq
    %v1368 = vshrl.u32 %v1367, 7
    %v1369 = vsub.s32 0, %v1368
    %v1370 = vrot.slane %v1350, %v1369
    %v1371 = vlaneseq
    %v1372 = vshrl.u32 %v1371, 7
    %v1373 = vsub.s32 0, %v1372
    %v1374 = vrot.slane %v1354, %v1373
    %v1375 = vlaneseq
    %v1376 = vshrl.u32 %v1375, 7
    %v1377 = vsub.s32 0, %v1376
    %v1378 = vrot.slane %v1358, %v1377
    %v1379 = vlaneseq
    %v1380 = vshrl.u32 %v1379, 7
    %v1381 = vsub.s32 0, %v1380
    %v1382 = vrot.slane %v1362, %v1381
    %v1447 = vunpack.c.l.b16 %v1278
    %v1448 = vunpack.c.h.b16 %v1278
    %v1449 = vunpack.c.l.b16 %v1279
    %v1450 = vunpack.c.h.b16 %v1279
    %v1451 = vunpack.c.l.b16 %v1280
    %v1452 = vunpack.c.h.b16 %v1280
    %v1453 = vunpack.c.l.b16 %v1281
    %v1454 = vunpack.c.h.b16 %v1281
    %v1455 = vunpack.c.l.b16 %v1282
    %v1456 = vunpack.c.h.b16 %v1282
    %v1457 = vunpack.c.l.b16 %v1283
    %v1458 = vunpack.c.h.b16 %v1283
    %v1459 = vunpack.c.l.b16 %v1284
    %v1460 = vunpack.c.h.b16 %v1284
    %v1461 = vunpack.c.l.b16 %v1285
    %v1462 = vunpack.c.h.b16 %v1285
    %v1463 = vunpack.c.l.b16 %v1286
    %v1464 = vunpack.c.h.b16 %v1286
    %v1465 = vunpack.c.l.b16 %v1287
    %v1466 = vunpack.c.h.b16 %v1287
    %v1467 = vunpack.c.l.b16 %v1288
    %v1468 = vunpack.c.h.b16 %v1288
    %v1469 = vunpack.c.l.b16 %v1289
    %v1470 = vunpack.c.h.b16 %v1289
    %v1471 = vunpack.c.l.b16 %v1290
    %v1472 = vunpack.c.h.b16 %v1290
    %v1473 = vunpack.c.l.b16 %v1291
    %v1474 = vunpack.c.h.b16 %v1291
    %v1475 = vunpack.c.l.b16 %v1292
    %v1476 = vunpack.c.h.b16 %v1292
    %v1477 = vunpack.c.l.b16 %v1293
    %v1478 = vunpack.c.h.b16 %v1293
    %v1479 = vunpack.c.l.b16 %v1294
    %v1480 = vunpack.c.h.b16 %v1294
    %v1481 = vunpack.c.l.b16 %v1295
    %v1482 = vunpack.c.h.b16 %v1295
    %v1483 = vunpack.c.l.b16 %v1296
    %v1484 = vunpack.c.h.b16 %v1296
    %v1485 = vunpack.c.l.b16 %v1297
    %v1486 = vunpack.c.h.b16 %v1297
    %v1487 = vunpack.c.l.b16 %v1298
    %v1488 = vunpack.c.h.b16 %v1298
    %v1489 = vunpack.c.l.b16 %v1299
    %v1490 = vunpack.c.h.b16 %v1299
    %v1491 = vunpack.c.l.b16 %v1300
    %v1492 = vunpack.c.h.b16 %v1300
    %v1493 = vunpack.c.l.b16 %v1301
    %v1494 = vunpack.c.h.b16 %v1301
    %v1495 = vunpack.c.l.b16 %v1302
    %v1496 = vunpack.c.h.b16 %v1302
    %v1497 = vunpack.c.l.b16 %v1303
    %v1498 = vunpack.c.h.b16 %v1303
    %v1499 = vunpack.c.l.b16 %v1304
    %v1500 = vunpack.c.h.b16 %v1304
    %v1501 = vunpack.c.l.b16 %v1305
    %v1502 = vunpack.c.h.b16 %v1305
    %v1503 = vunpack.c.l.b16 %v1306
    %v1504 = vunpack.c.h.b16 %v1306
    %v1505 = vunpack.c.l.b16 %v1307
    %v1506 = vunpack.c.h.b16 %v1307
    %v1507 = vunpack.c.l.b16 %v1308
    %v1508 = vunpack.c.h.b16 %v1308
    %v1509 = vunpack.c.l.b16 %v1309
    %v1510 = vunpack.c.h.b16 %v1309
    %v1511 = vunpack.c.l.b16 %v1310
    %v1512 = vunpack.c.h.b16 %v1310
    %v1513 = vunpack.c.l.b16 %v1311
    %v1514 = vunpack.c.h.b16 %v1311
    %v1515 = vunpack.c.l.b16 %v1312
    %v1516 = vunpack.c.h.b16 %v1312
    %v1517 = vunpack.c.l.b16 %v1313
    %v1518 = vunpack.c.h.b16 %v1313
    %v1519 = vunpack.c.l.b16 %v1314
    %v1520 = vunpack.c.h.b16 %v1314
    %v1521 = vunpack.c.l.b16 %v1315
    %v1522 = vunpack.c.h.b16 %v1315
    %v1523 = vunpack.c.l.b16 %v1316
    %v1524 = vunpack.c.h.b16 %v1316
    %v1525 = vunpack.c.l.b16 %v1317
    %v1526 = vunpack.c.h.b16 %v1317
    %v1527 = vunpack.c.l.b16 %v1318
    %v1528 = vunpack.c.h.b16 %v1318
    %v1529 = vunpack.c.l.b16 %v1319
    %v1530 = vunpack.c.h.b16 %v1319
    %v1531 = vunpack.c.l.b16 %v1320
    %v1532 = vunpack.c.h.b16 %v1320
    %v1533 = vunpack.c.l.b16 %v1321
    %v1534 = vunpack.c.h.b16 %v1321
    %v1535 = vunpack.c.l.b16 %v1322
    %v1536 = vunpack.c.h.b16 %v1322
    %v1537 = vunpack.c.l.b16 %v1323
    %v1538 = vunpack.c.h.b16 %v1323
    %v1539 = vunpack.c.l.b16 %v1324
    %v1540 = vunpack.c.h.b16 %v1324
    %v1541 = vunpack.c.l.b16 %v1325
    %v1542 = vunpack.c.h.b16 %v1325
    %v1543 = vunpack.c.l.b16 %v1326
    %v1544 = vunpack.c.h.b16 %v1326
    %v1545 = vunpack.c.l.b16 %v1327
    %v1546 = vunpack.c.h.b16 %v1327
    %v1547 = vunpack.c.l.b16 %v1328
    %v1548 = vunpack.c.h.b16 %v1328
    %v1549 = vunpack.c.l.b16 %v1329
    %v1550 = vunpack.c.h.b16 %v1329
    %v1551 = vunpack.c.l.b16 %v1330
    %v1552 = vunpack.c.h.b16 %v1330
    %v1553 = vunpack.c.l.b16 %v1331
    %v1554 = vunpack.c.h.b16 %v1331
    %v1555 = vunpack.c.l.b16 %v1332
    %v1556 = vunpack.c.h.b16 %v1332
    %v1557 = vunpack.c.l.b16 %v1333
    %v1558 = vunpack.c.h.b16 %v1333
    %v1559 = vunpack.c.l.b16 %v1334
    %v1560 = vunpack.c.h.b16 %v1334
    %v1561 = vunpack.c.l.b16 %v1335
    %v1562 = vunpack.c.h.b16 %v1335
    %v1563 = vunpack.c.l.b16 %v1336
    %v1564 = vunpack.c.h.b16 %v1336
    %v1565 = vunpack.c.l.b16 %v1337
    %v1566 = vunpack.c.h.b16 %v1337
    %v1567 = vunpack.c.l.b16 %v1338
    %v1568 = vunpack.c.h.b16 %v1338
    %v1569 = vunpack.c.l.b16 %v1339
    %v1570 = vunpack.c.h.b16 %v1339
    %v1571 = vunpack.c.l.b16 %v1340
    %v1572 = vunpack.c.h.b16 %v1340
    %v1573 = vunpack.c.l.b16 %v1341
    %v1574 = vunpack.c.h.b16 %v1341
    %v1575 = vpack.c.b16 %v1451, %v1447
    %v1576 = vpack.c.b16 %v1452, %v1448
    %v1577 = vpack.c.b16 %v1453, %v1449
    %v1578 = vpack.c.b16 %v1454, %v1450
    %v1579 = vpack.c.b16 %v1459, %v1455
    %v1580 = vpack.c.b16 %v1460, %v1456
    %v1581 = vpack.c.b16 %v1461, %v1457
    %v1582 = vpack.c.b16 %v1462, %v1458
    %v1583 = vpack.c.b16 %v1467, %v1463
    %v1584 = vpack.c.b16 %v1468, %v1464
    %v1585 = vpack.c.b16 %v1469, %v1465
    %v1586 = vpack.c.b16 %v1470, %v1466
    %v1587 = vpack.c.b16 %v1475, %v1471
    %v1588 = vpack.c.b16 %v1476, %v1472
    %v1589 = vpack.c.b16 %v1477, %v1473
    %v1590 = vpack.c.b16 %v1478, %v1474
    %v1591 = vpack.c.b16 %v1483, %v1479
    %v1592 = vpack.c.b16 %v1484, %v1480
    %v1593 = vpack.c.b16 %v1485, %v1481
    %v1594 = vpack.c.b16 %v1486, %v1482
    %v1595 = vpack.c.b16 %v1491, %v1487
    %v1596 = vpack.c.b16 %v1492, %v1488
    %v1597 = vpack.c.b16 %v1493, %v1489
    %v1598 = vpack.c.b16 %v1494, %v1490
    %v1599 = vpack.c.b16 %v1499, %v1495
    %v1600 = vpack.c.b16 %v1500, %v1496
    %v1601 = vpack.c.b16 %v1501, %v1497
    %v1602 = vpack.c.b16 %v1502, %v1498
    %v1603 = vpack.c.b16 %v1507, %v1503
    %v1604 = vpack.c.b16 %v1508, %v1504
    %v1605 = vpack.c.b16 %v1509, %v1505
    %v1606 = vpack.c.b16 %v1510, %v1506
    %v1607 = vpack.c.b16 %v1515, %v1511
    %v1608 = vpack.c.b16 %v1516, %v1512
    %v1609 = vpack.c.b16 %v1517, %v1513
    %v1610 = vpack.c.b16 %v1518, %v1514
    %v1611 = vpack.c.b16 %v1523, %v1519
    %v1612 = vpack.c.b16 %v1524, %v1520
    %v1613 = vpack.c.b16 %v1525, %v1521
    %v1614 = vpack.c.b16 %v1526, %v1522
    %v1615 = vpack.c.b16 %v1531, %v1527
    %v1616 = vpack.c.b16 %v1532, %v1528
    %v1617 = vpack.c.b16 %v1533, %v1529
    %v1618 = vpack.c.b16 %v1534, %v1530
    %v1619 = vpack.c.b16 %v1539, %v1535
    %v1620 = vpack.c.b16 %v1540, %v1536
    %v1621 = vpack.c.b16 %v1541, %v1537
    %v1622 = vpack.c.b16 %v1542, %v1538
    %v1623 = vpack.c.b16 %v1547, %v1543
    %v1624 = vpack.c.b16 %v1548, %v1544
    %v1625 = vpack.c.b16 %v1549, %v1545
    %v1626 = vpack.c.b16 %v1550, %v1546
    %v1627 = vpack.c.b16 %v1555, %v1551
    %v1628 = vpack.c.b16 %v1556, %v1552
    %v1629 = vpack.c.b16 %v1557, %v1553
    %v1630 = vpack.c.b16 %v1558, %v1554
    %v1631 = vpack.c.b16 %v1563, %v1559
    %v1632 = vpack.c.b16 %v1564, %v1560
    %v1633 = vpack.c.b16 %v1565, %v1561
    %v1634 = vpack.c.b16 %v1566, %v1562
    %v1635 = vpack.c.b16 %v1571, %v1567
    %v1636 = vpack.c.b16 %v1572, %v1568
    %v1637 = vpack.c.b16 %v1573, %v1569
    %v1638 = vpack.c.b16 %v1574, %v1570
    %1703 = vmatprep.subr.bf16.mxu0 %v1576
    %1704 = vmatpush1.bf16.msra.mxu0 %v1575
    %1705 = vmatprep.subr.bf16.mxu0 %v1580
    %1706 = vmatpush1.bf16.msra.mxu0 %v1579
    %1707 = vmatprep.subr.bf16.mxu0 %v1584
    %1708 = vmatpush1.bf16.msra.mxu0 %v1583
    %1709 = vmatprep.subr.bf16.mxu0 %v1588
    %1710 = vmatpush1.bf16.msra.mxu0 %v1587
    %1711 = vmatprep.subr.bf16.mxu0 %v1592
    %1712 = vmatpush1.bf16.msra.mxu0 %v1591
    %1713 = vmatprep.subr.bf16.mxu0 %v1596
    %1714 = vmatpush1.bf16.msra.mxu0 %v1595
    %1715 = vmatprep.subr.bf16.mxu0 %v1600
    %1716 = vmatpush1.bf16.msra.mxu0 %v1599
    %1717 = vmatprep.subr.bf16.mxu0 %v1604
    %1718 = vmatpush1.bf16.msra.mxu0 %v1603
    %1719 = vmatprep.subr.bf16.mxu0 %v1608
    %1720 = vmatpush1.bf16.msra.mxu0 %v1607
    %1721 = vmatprep.subr.bf16.mxu0 %v1612
    %1722 = vmatpush1.bf16.msra.mxu0 %v1611
    %1723 = vmatprep.subr.bf16.mxu0 %v1616
    %1724 = vmatpush1.bf16.msra.mxu0 %v1615
    %1725 = vmatprep.subr.bf16.mxu0 %v1620
    %1726 = vmatpush1.bf16.msra.mxu0 %v1619
    %1727 = vmatprep.subr.bf16.mxu0 %v1624
    %1728 = vmatpush1.bf16.msra.mxu0 %v1623
    %1729 = vmatprep.subr.bf16.mxu0 %v1628
    %1730 = vmatpush1.bf16.msra.mxu0 %v1627
    %1731 = vmatprep.subr.bf16.mxu0 %v1632
    %1732 = vmatpush1.bf16.msra.mxu0 %v1631
    %1733 = vmatprep.subr.bf16.mxu0 %v1636
    %1734 = vmatpush1.bf16.msra.mxu0 %v1635
    %1735 = vmatprep.mubr.bf16.mxu0 %v1343
    %1736 = vmatmul.mubr.bf16.gmra.mrb[0].mxu0 %v1342
    %v1737 = vpop.f32.mrb[0].mxu0
    %v1738 = vadd.f32 %v1370, %v1737
    %v1739 = vpop.f32.mrb[0].mxu0
    %v1740 = vadd.f32 %v1374, %v1739
    %v1741 = vpop.f32.mrb[0].mxu0
    %v1742 = vpop.f32.mrb[0].mxu0
    %1743 = vdwg.mxu0
    %1744 = vmatprep.subr.bf16.mxu0 %v1578
    %1745 = vmatpush1.bf16.msra.mxu0 %v1577
    %1746 = vmatprep.subr.bf16.mxu0 %v1582
    %1747 = vmatpush1.bf16.msra.mxu0 %v1581
    %1748 = vmatprep.subr.bf16.mxu0 %v1586
    %1749 = vmatpush1.bf16.msra.mxu0 %v1585
    %1750 = vmatprep.subr.bf16.mxu0 %v1590
    %1751 = vmatpush1.bf16.msra.mxu0 %v1589
    %1752 = vmatprep.subr.bf16.mxu0 %v1594
    %1753 = vmatpush1.bf16.msra.mxu0 %v1593
    %1754 = vmatprep.subr.bf16.mxu0 %v1598
    %1755 = vmatpush1.bf16.msra.mxu0 %v1597
    %1756 = vmatprep.subr.bf16.mxu0 %v1602
    %1757 = vmatpush1.bf16.msra.mxu0 %v1601
    %1758 = vmatprep.subr.bf16.mxu0 %v1606
    %1759 = vmatpush1.bf16.msra.mxu0 %v1605
    %1760 = vmatprep.subr.bf16.mxu0 %v1610
    %1761 = vmatpush1.bf16.msra.mxu0 %v1609
    %1762 = vmatprep.subr.bf16.mxu0 %v1614
    %1763 = vmatpush1.bf16.msra.mxu0 %v1613
    %1764 = vmatprep.subr.bf16.mxu0 %v1618
    %1765 = vmatpush1.bf16.msra.mxu0 %v1617
    %1766 = vmatprep.subr.bf16.mxu0 %v1622
    %1767 = vmatpush1.bf16.msra.mxu0 %v1621
    %1768 = vmatprep.subr.bf16.mxu0 %v1626
    %1769 = vmatpush1.bf16.msra.mxu0 %v1625
    %1770 = vmatprep.subr.bf16.mxu0 %v1630
    %1771 = vmatpush1.bf16.msra.mxu0 %v1629
    %1772 = vmatprep.subr.bf16.mxu0 %v1634
    %1773 = vmatpush1.bf16.msra.mxu0 %v1633
    %1774 = vmatprep.subr.bf16.mxu0 %v1638
    %1775 = vmatpush1.bf16.msra.mxu0 %v1637
    %1776 = vmatprep.mubr.bf16.mxu0 %v1343
    %1777 = vmatmul.mubr.bf16.gmra.mrb[0].mxu0 %v1342
    %v1778 = vpop.f32.mrb[0].mxu0
    %v1779 = vadd.f32 %v1378, %v1778
    %v1780 = vpop.f32.mrb[0].mxu0
    %v1781 = vadd.f32 %v1382, %v1780
    %v1782 = vpop.f32.mrb[0].mxu0
    %v1783 = vpop.f32.mrb[0].mxu0
    %1784 = vdwg.mxu0
    %v1785 = vmax.f32 %v1738, 0.0
    %v1786 = vmax.f32 %v1740, 0.0
    %v1787 = vmax.f32 %v1779, 0.0
    %v1788 = vmax.f32 %v1781, 0.0
    %1789 = vst [vmem:[#allocation2] sm:$0xff] %v1785
    %1790 = vst [vmem:[#allocation2 + $0x8] sm:$0xff] %v1786
    %1791 = vst [vmem:[#allocation2 + $0x10] sm:$0xff] %v1787
    %1792 = vst [vmem:[#allocation2 + $0x18] sm:$0xff] %v1788
    %v1793 = vld [vmem:[#allocation2] sm:$0xff]
    %v1794 = vld [vmem:[#allocation2 + $0x8] sm:$0xff]
    %v1795 = vld [vmem:[#allocation2 + $0x10] sm:$0xff]
    %v1796 = vld [vmem:[#allocation2 + $0x18] sm:$0xff]
    %v1797 = vld [vmem:[#allocation15] sm:$0xff]
    %v1798 = vld [vmem:[#allocation15 + $0x8] sm:$0xff]
    %v1799 = vld [vmem:[#allocation15 + $0x10] sm:$0xff]
    %v1800 = vld [vmem:[#allocation15 + $0x18] sm:$0xff]
    %v1801 = vld [vmem:[#allocation15 + $0x20] sm:$0xff]
    %v1802 = vld [vmem:[#allocation15 + $0x28] sm:$0xff]
    %v1803 = vld [vmem:[#allocation15 + $0x30] sm:$0xff]
    %v1804 = vld [vmem:[#allocation15 + $0x38] sm:$0xff]
    %v1805 = vld [vmem:[#allocation15 + $0x40] sm:$0xff]
    %v1806 = vld [vmem:[#allocation15 + $0x48] sm:$0xff]
    %v1807 = vld [vmem:[#allocation15 + $0x50] sm:$0xff]
    %v1808 = vld [vmem:[#allocation15 + $0x58] sm:$0xff]
    %v1809 = vld [vmem:[#allocation15 + $0x60] sm:$0xff]
    %v1810 = vld [vmem:[#allocation15 + $0x68] sm:$0xff]
    %v1811 = vld [vmem:[#allocation15 + $0x70] sm:$0xff]
    %v1812 = vld [vmem:[#allocation15 + $0x78] sm:$0xff]
    %v1813 = vld [vmem:[#allocation15 + $0x80] sm:$0xff]
    %v1814 = vld [vmem:[#allocation15 + $0x88] sm:$0xff]
    %v1815 = vld [vmem:[#allocation15 + $0x90] sm:$0xff]
    %v1816 = vld [vmem:[#allocation15 + $0x98] sm:$0xff]
    %v1817 = vld [vmem:[#allocation15 + $0xa0] sm:$0xff]
    %v1818 = vld [vmem:[#allocation15 + $0xa8] sm:$0xff]
    %v1819 = vld [vmem:[#allocation15 + $0xb0] sm:$0xff]
    %v1820 = vld [vmem:[#allocation15 + $0xb8] sm:$0xff]
    %v1821 = vld [vmem:[#allocation15 + $0xc0] sm:$0xff]
    %v1822 = vld [vmem:[#allocation15 + $0xc8] sm:$0xff]
    %v1823 = vld [vmem:[#allocation15 + $0xd0] sm:$0xff]
    %v1824 = vld [vmem:[#allocation15 + $0xd8] sm:$0xff]
    %v1825 = vld [vmem:[#allocation15 + $0xe0] sm:$0xff]
    %v1826 = vld [vmem:[#allocation15 + $0xe8] sm:$0xff]
    %v1827 = vld [vmem:[#allocation15 + $0xf0] sm:$0xff]
    %v1828 = vld [vmem:[#allocation15 + $0xf8] sm:$0xff]
    %v1829 = vld [vmem:[#allocation15 + $0x100] sm:$0xff]
    %v1830 = vld [vmem:[#allocation15 + $0x108] sm:$0xff]
    %v1831 = vld [vmem:[#allocation15 + $0x110] sm:$0xff]
    %v1832 = vld [vmem:[#allocation15 + $0x118] sm:$0xff]
    %v1833 = vld [vmem:[#allocation15 + $0x120] sm:$0xff]
    %v1834 = vld [vmem:[#allocation15 + $0x128] sm:$0xff]
    %v1835 = vld [vmem:[#allocation15 + $0x130] sm:$0xff]
    %v1836 = vld [vmem:[#allocation15 + $0x138] sm:$0xff]
    %v1837 = vld [vmem:[#allocation15 + $0x140] sm:$0xff]
    %v1838 = vld [vmem:[#allocation15 + $0x148] sm:$0xff]
    %v1839 = vld [vmem:[#allocation15 + $0x150] sm:$0xff]
    %v1840 = vld [vmem:[#allocation15 + $0x158] sm:$0xff]
    %v1841 = vld [vmem:[#allocation15 + $0x160] sm:$0xff]
    %v1842 = vld [vmem:[#allocation15 + $0x168] sm:$0xff]
    %v1843 = vld [vmem:[#allocation15 + $0x170] sm:$0xff]
    %v1844 = vld [vmem:[#allocation15 + $0x178] sm:$0xff]
    %v1845 = vld [vmem:[#allocation15 + $0x180] sm:$0xff]
    %v1846 = vld [vmem:[#allocation15 + $0x188] sm:$0xff]
    %v1847 = vld [vmem:[#allocation15 + $0x190] sm:$0xff]
    %v1848 = vld [vmem:[#allocation15 + $0x198] sm:$0xff]
    %v1849 = vld [vmem:[#allocation15 + $0x1a0] sm:$0xff]
    %v1850 = vld [vmem:[#allocation15 + $0x1a8] sm:$0xff]
    %v1851 = vld [vmem:[#allocation15 + $0x1b0] sm:$0xff]
    %v1852 = vld [vmem:[#allocation15 + $0x1b8] sm:$0xff]
    %v1853 = vld [vmem:[#allocation15 + $0x1c0] sm:$0xff]
    %v1854 = vld [vmem:[#allocation15 + $0x1c8] sm:$0xff]
    %v1855 = vld [vmem:[#allocation15 + $0x1d0] sm:$0xff]
    %v1856 = vld [vmem:[#allocation15 + $0x1d8] sm:$0xff]
    %v1857 = vld [vmem:[#allocation15 + $0x1e0] sm:$0xff]
    %v1858 = vld [vmem:[#allocation15 + $0x1e8] sm:$0xff]
    %v1859 = vld [vmem:[#allocation15 + $0x1f0] sm:$0xff]
    %v1860 = vld [vmem:[#allocation15 + $0x1f8] sm:$0xff]
    %v1861 = vld [vmem:[#allocation15 + $0x200] sm:$0xff]
    %v1862 = vld [vmem:[#allocation15 + $0x208] sm:$0xff]
    %v1863 = vld [vmem:[#allocation15 + $0x210] sm:$0xff]
    %v1864 = vld [vmem:[#allocation15 + $0x218] sm:$0xff]
    %v1865 = vld [vmem:[#allocation15 + $0x220] sm:$0xff]
    %v1866 = vld [vmem:[#allocation15 + $0x228] sm:$0xff]
    %v1867 = vld [vmem:[#allocation15 + $0x230] sm:$0xff]
    %v1868 = vld [vmem:[#allocation15 + $0x238] sm:$0xff]
    %v1869 = vld [vmem:[#allocation15 + $0x240] sm:$0xff]
    %v1870 = vld [vmem:[#allocation15 + $0x248] sm:$0xff]
    %v1871 = vld [vmem:[#allocation15 + $0x250] sm:$0xff]
    %v1872 = vld [vmem:[#allocation15 + $0x258] sm:$0xff]
    %v1873 = vld [vmem:[#allocation15 + $0x260] sm:$0xff]
    %v1874 = vld [vmem:[#allocation15 + $0x268] sm:$0xff]
    %v1875 = vld [vmem:[#allocation15 + $0x270] sm:$0xff]
    %v1876 = vld [vmem:[#allocation15 + $0x278] sm:$0xff]
    %v1877 = vld [vmem:[#allocation15 + $0x280] sm:$0xff]
    %v1878 = vld [vmem:[#allocation15 + $0x288] sm:$0xff]
    %v1879 = vld [vmem:[#allocation15 + $0x290] sm:$0xff]
    %v1880 = vld [vmem:[#allocation15 + $0x298] sm:$0xff]
    %v1881 = vld [vmem:[#allocation15 + $0x2a0] sm:$0xff]
    %v1882 = vld [vmem:[#allocation15 + $0x2a8] sm:$0xff]
    %v1883 = vld [vmem:[#allocation15 + $0x2b0] sm:$0xff]
    %v1884 = vld [vmem:[#allocation15 + $0x2b8] sm:$0xff]
    %v1885 = vld [vmem:[#allocation15 + $0x2c0] sm:$0xff]
    %v1886 = vld [vmem:[#allocation15 + $0x2c8] sm:$0xff]
    %v1887 = vld [vmem:[#allocation15 + $0x2d0] sm:$0xff]
    %v1888 = vld [vmem:[#allocation15 + $0x2d8] sm:$0xff]
    %v1889 = vld [vmem:[#allocation15 + $0x2e0] sm:$0xff]
    %v1890 = vld [vmem:[#allocation15 + $0x2e8] sm:$0xff]
    %v1891 = vld [vmem:[#allocation15 + $0x2f0] sm:$0xff]
    %v1892 = vld [vmem:[#allocation15 + $0x2f8] sm:$0xff]
    %v1893 = vld [vmem:[#allocation15 + $0x300] sm:$0xff]
    %v1894 = vld [vmem:[#allocation15 + $0x308] sm:$0xff]
    %v1895 = vld [vmem:[#allocation15 + $0x310] sm:$0xff]
    %v1896 = vld [vmem:[#allocation15 + $0x318] sm:$0xff]
    %v1897 = vld [vmem:[#allocation15 + $0x320] sm:$0xff]
    %v1898 = vld [vmem:[#allocation15 + $0x328] sm:$0xff]
    %v1899 = vld [vmem:[#allocation15 + $0x330] sm:$0xff]
    %v1900 = vld [vmem:[#allocation15 + $0x338] sm:$0xff]
    %v1901 = vld [vmem:[#allocation15 + $0x340] sm:$0xff]
    %v1902 = vld [vmem:[#allocation15 + $0x348] sm:$0xff]
    %v1903 = vld [vmem:[#allocation15 + $0x350] sm:$0xff]
    %v1904 = vld [vmem:[#allocation15 + $0x358] sm:$0xff]
    %v1905 = vld [vmem:[#allocation15 + $0x360] sm:$0xff]
    %v1906 = vld [vmem:[#allocation15 + $0x368] sm:$0xff]
    %v1907 = vld [vmem:[#allocation15 + $0x370] sm:$0xff]
    %v1908 = vld [vmem:[#allocation15 + $0x378] sm:$0xff]
    %v1909 = vld [vmem:[#allocation15 + $0x380] sm:$0xff]
    %v1910 = vld [vmem:[#allocation15 + $0x388] sm:$0xff]
    %v1911 = vld [vmem:[#allocation15 + $0x390] sm:$0xff]
    %v1912 = vld [vmem:[#allocation15 + $0x398] sm:$0xff]
    %v1913 = vld [vmem:[#allocation15 + $0x3a0] sm:$0xff]
    %v1914 = vld [vmem:[#allocation15 + $0x3a8] sm:$0xff]
    %v1915 = vld [vmem:[#allocation15 + $0x3b0] sm:$0xff]
    %v1916 = vld [vmem:[#allocation15 + $0x3b8] sm:$0xff]
    %v1917 = vld [vmem:[#allocation15 + $0x3c0] sm:$0xff]
    %v1918 = vld [vmem:[#allocation15 + $0x3c8] sm:$0xff]
    %v1919 = vld [vmem:[#allocation15 + $0x3d0] sm:$0xff]
    %v1920 = vld [vmem:[#allocation15 + $0x3d8] sm:$0xff]
    %v1921 = vld [vmem:[#allocation15 + $0x3e0] sm:$0xff]
    %v1922 = vld [vmem:[#allocation15 + $0x3e8] sm:$0xff]
    %v1923 = vld [vmem:[#allocation15 + $0x3f0] sm:$0xff]
    %v1924 = vld [vmem:[#allocation15 + $0x3f8] sm:$0xff]
    %v1925 = vpack.c.bf16 %v1793, %v1793
    %v1926 = vpack.c.bf16 %v1794, %v1794
    %v1927 = vpack.c.bf16 %v1795, %v1795
    %v1928 = vpack.c.bf16 %v1796, %v1796
    %v1929 = vld [vmem:[%s15 + $0xd] sm:$0xf]
    %v1930 = vunpack.c.l.bf16 %v1929
    %v1932 = vlaneseq
    %v1933 = vshrl.u32 %v1932, 7
    %v1934 = vsub.s32 0, %v1933
    %v1935 = vrot.slane %v1930, %v1934
    %v1936 = vlaneseq
    %v1937 = vshrl.u32 %v1936, 7
    %v1938 = vsub.s32 2, %v1937
    %v1939 = vrot.slane %v1930, %v1938
    %v1940 = vlaneseq
    %v1941 = vshrl.u32 %v1940, 7
    %v1942 = vsub.s32 4, %v1941
    %v1943 = vrot.slane %v1930, %v1942
    %v1944 = vlaneseq
    %v1945 = vshrl.u32 %v1944, 7
    %v1946 = vsub.s32 6, %v1945
    %v1947 = vrot.slane %v1930, %v1946
    %v1952 = vlaneseq
    %v1953 = vshrl.u32 %v1952, 7
    %v1954 = vsub.s32 0, %v1953
    %v1955 = vrot.slane %v1935, %v1954
    %v1956 = vlaneseq
    %v1957 = vshrl.u32 %v1956, 7
    %v1958 = vsub.s32 0, %v1957
    %v1959 = vrot.slane %v1939, %v1958
    %v1960 = vlaneseq
    %v1961 = vshrl.u32 %v1960, 7
    %v1962 = vsub.s32 0, %v1961
    %v1963 = vrot.slane %v1943, %v1962
    %v1964 = vlaneseq
    %v1965 = vshrl.u32 %v1964, 7
    %v1966 = vsub.s32 0, %v1965
    %v1967 = vrot.slane %v1947, %v1966
    %v2096 = vunpack.c.l.b16 %v1797
    %v2097 = vunpack.c.h.b16 %v1797
    %v2098 = vunpack.c.l.b16 %v1798
    %v2099 = vunpack.c.h.b16 %v1798
    %v2100 = vunpack.c.l.b16 %v1799
    %v2101 = vunpack.c.h.b16 %v1799
    %v2102 = vunpack.c.l.b16 %v1800
    %v2103 = vunpack.c.h.b16 %v1800
    %v2104 = vunpack.c.l.b16 %v1801
    %v2105 = vunpack.c.h.b16 %v1801
    %v2106 = vunpack.c.l.b16 %v1802
    %v2107 = vunpack.c.h.b16 %v1802
    %v2108 = vunpack.c.l.b16 %v1803
    %v2109 = vunpack.c.h.b16 %v1803
    %v2110 = vunpack.c.l.b16 %v1804
    %v2111 = vunpack.c.h.b16 %v1804
    %v2112 = vunpack.c.l.b16 %v1805
    %v2113 = vunpack.c.h.b16 %v1805
    %v2114 = vunpack.c.l.b16 %v1806
    %v2115 = vunpack.c.h.b16 %v1806
    %v2116 = vunpack.c.l.b16 %v1807
    %v2117 = vunpack.c.h.b16 %v1807
    %v2118 = vunpack.c.l.b16 %v1808
    %v2119 = vunpack.c.h.b16 %v1808
    %v2120 = vunpack.c.l.b16 %v1809
    %v2121 = vunpack.c.h.b16 %v1809
    %v2122 = vunpack.c.l.b16 %v1810
    %v2123 = vunpack.c.h.b16 %v1810
    %v2124 = vunpack.c.l.b16 %v1811
    %v2125 = vunpack.c.h.b16 %v1811
    %v2126 = vunpack.c.l.b16 %v1812
    %v2127 = vunpack.c.h.b16 %v1812
    %v2128 = vunpack.c.l.b16 %v1813
    %v2129 = vunpack.c.h.b16 %v1813
    %v2130 = vunpack.c.l.b16 %v1814
    %v2131 = vunpack.c.h.b16 %v1814
    %v2132 = vunpack.c.l.b16 %v1815
    %v2133 = vunpack.c.h.b16 %v1815
    %v2134 = vunpack.c.l.b16 %v1816
    %v2135 = vunpack.c.h.b16 %v1816
    %v2136 = vunpack.c.l.b16 %v1817
    %v2137 = vunpack.c.h.b16 %v1817
    %v2138 = vunpack.c.l.b16 %v1818
    %v2139 = vunpack.c.h.b16 %v1818
    %v2140 = vunpack.c.l.b16 %v1819
    %v2141 = vunpack.c.h.b16 %v1819
    %v2142 = vunpack.c.l.b16 %v1820
    %v2143 = vunpack.c.h.b16 %v1820
    %v2144 = vunpack.c.l.b16 %v1821
    %v2145 = vunpack.c.h.b16 %v1821
    %v2146 = vunpack.c.l.b16 %v1822
    %v2147 = vunpack.c.h.b16 %v1822
    %v2148 = vunpack.c.l.b16 %v1823
    %v2149 = vunpack.c.h.b16 %v1823
    %v2150 = vunpack.c.l.b16 %v1824
    %v2151 = vunpack.c.h.b16 %v1824
    %v2152 = vunpack.c.l.b16 %v1825
    %v2153 = vunpack.c.h.b16 %v1825
    %v2154 = vunpack.c.l.b16 %v1826
    %v2155 = vunpack.c.h.b16 %v1826
    %v2156 = vunpack.c.l.b16 %v1827
    %v2157 = vunpack.c.h.b16 %v1827
    %v2158 = vunpack.c.l.b16 %v1828
    %v2159 = vunpack.c.h.b16 %v1828
    %v2160 = vunpack.c.l.b16 %v1829
    %v2161 = vunpack.c.h.b16 %v1829
    %v2162 = vunpack.c.l.b16 %v1830
    %v2163 = vunpack.c.h.b16 %v1830
    %v2164 = vunpack.c.l.b16 %v1831
    %v2165 = vunpack.c.h.b16 %v1831
    %v2166 = vunpack.c.l.b16 %v1832
    %v2167 = vunpack.c.h.b16 %v1832
    %v2168 = vunpack.c.l.b16 %v1833
    %v2169 = vunpack.c.h.b16 %v1833
    %v2170 = vunpack.c.l.b16 %v1834
    %v2171 = vunpack.c.h.b16 %v1834
    %v2172 = vunpack.c.l.b16 %v1835
    %v2173 = vunpack.c.h.b16 %v1835
    %v2174 = vunpack.c.l.b16 %v1836
    %v2175 = vunpack.c.h.b16 %v1836
    %v2176 = vunpack.c.l.b16 %v1837
    %v2177 = vunpack.c.h.b16 %v1837
    %v2178 = vunpack.c.l.b16 %v1838
    %v2179 = vunpack.c.h.b16 %v1838
    %v2180 = vunpack.c.l.b16 %v1839
    %v2181 = vunpack.c.h.b16 %v1839
    %v2182 = vunpack.c.l.b16 %v1840
    %v2183 = vunpack.c.h.b16 %v1840
    %v2184 = vunpack.c.l.b16 %v1841
    %v2185 = vunpack.c.h.b16 %v1841
    %v2186 = vunpack.c.l.b16 %v1842
    %v2187 = vunpack.c.h.b16 %v1842
    %v2188 = vunpack.c.l.b16 %v1843
    %v2189 = vunpack.c.h.b16 %v1843
    %v2190 = vunpack.c.l.b16 %v1844
    %v2191 = vunpack.c.h.b16 %v1844
    %v2192 = vunpack.c.l.b16 %v1845
    %v2193 = vunpack.c.h.b16 %v1845
    %v2194 = vunpack.c.l.b16 %v1846
    %v2195 = vunpack.c.h.b16 %v1846
    %v2196 = vunpack.c.l.b16 %v1847
    %v2197 = vunpack.c.h.b16 %v1847
    %v2198 = vunpack.c.l.b16 %v1848
    %v2199 = vunpack.c.h.b16 %v1848
    %v2200 = vunpack.c.l.b16 %v1849
    %v2201 = vunpack.c.h.b16 %v1849
    %v2202 = vunpack.c.l.b16 %v1850
    %v2203 = vunpack.c.h.b16 %v1850
    %v2204 = vunpack.c.l.b16 %v1851
    %v2205 = vunpack.c.h.b16 %v1851
    %v2206 = vunpack.c.l.b16 %v1852
    %v2207 = vunpack.c.h.b16 %v1852
    %v2208 = vunpack.c.l.b16 %v1853
    %v2209 = vunpack.c.h.b16 %v1853
    %v2210 = vunpack.c.l.b16 %v1854
    %v2211 = vunpack.c.h.b16 %v1854
    %v2212 = vunpack.c.l.b16 %v1855
    %v2213 = vunpack.c.h.b16 %v1855
    %v2214 = vunpack.c.l.b16 %v1856
    %v2215 = vunpack.c.h.b16 %v1856
    %v2216 = vunpack.c.l.b16 %v1857
    %v2217 = vunpack.c.h.b16 %v1857
    %v2218 = vunpack.c.l.b16 %v1858
    %v2219 = vunpack.c.h.b16 %v1858
    %v2220 = vunpack.c.l.b16 %v1859
    %v2221 = vunpack.c.h.b16 %v1859
    %v2222 = vunpack.c.l.b16 %v1860
    %v2223 = vunpack.c.h.b16 %v1860
    %v2224 = vunpack.c.l.b16 %v1861
    %v2225 = vunpack.c.h.b16 %v1861
    %v2226 = vunpack.c.l.b16 %v1862
    %v2227 = vunpack.c.h.b16 %v1862
    %v2228 = vunpack.c.l.b16 %v1863
    %v2229 = vunpack.c.h.b16 %v1863
    %v2230 = vunpack.c.l.b16 %v1864
    %v2231 = vunpack.c.h.b16 %v1864
    %v2232 = vunpack.c.l.b16 %v1865
    %v2233 = vunpack.c.h.b16 %v1865
    %v2234 = vunpack.c.l.b16 %v1866
    %v2235 = vunpack.c.h.b16 %v1866
    %v2236 = vunpack.c.l.b16 %v1867
    %v2237 = vunpack.c.h.b16 %v1867
    %v2238 = vunpack.c.l.b16 %v1868
    %v2239 = vunpack.c.h.b16 %v1868
    %v2240 = vunpack.c.l.b16 %v1869
    %v2241 = vunpack.c.h.b16 %v1869
    %v2242 = vunpack.c.l.b16 %v1870
    %v2243 = vunpack.c.h.b16 %v1870
    %v2244 = vunpack.c.l.b16 %v1871
    %v2245 = vunpack.c.h.b16 %v1871
    %v2246 = vunpack.c.l.b16 %v1872
    %v2247 = vunpack.c.h.b16 %v1872
    %v2248 = vunpack.c.l.b16 %v1873
    %v2249 = vunpack.c.h.b16 %v1873
    %v2250 = vunpack.c.l.b16 %v1874
    %v2251 = vunpack.c.h.b16 %v1874
    %v2252 = vunpack.c.l.b16 %v1875
    %v2253 = vunpack.c.h.b16 %v1875
    %v2254 = vunpack.c.l.b16 %v1876
    %v2255 = vunpack.c.h.b16 %v1876
    %v2256 = vunpack.c.l.b16 %v1877
    %v2257 = vunpack.c.h.b16 %v1877
    %v2258 = vunpack.c.l.b16 %v1878
    %v2259 = vunpack.c.h.b16 %v1878
    %v2260 = vunpack.c.l.b16 %v1879
    %v2261 = vunpack.c.h.b16 %v1879
    %v2262 = vunpack.c.l.b16 %v1880
    %v2263 = vunpack.c.h.b16 %v1880
    %v2264 = vunpack.c.l.b16 %v1881
    %v2265 = vunpack.c.h.b16 %v1881
    %v2266 = vunpack.c.l.b16 %v1882
    %v2267 = vunpack.c.h.b16 %v1882
    %v2268 = vunpack.c.l.b16 %v1883
    %v2269 = vunpack.c.h.b16 %v1883
    %v2270 = vunpack.c.l.b16 %v1884
    %v2271 = vunpack.c.h.b16 %v1884
    %v2272 = vunpack.c.l.b16 %v1885
    %v2273 = vunpack.c.h.b16 %v1885
    %v2274 = vunpack.c.l.b16 %v1886
    %v2275 = vunpack.c.h.b16 %v1886
    %v2276 = vunpack.c.l.b16 %v1887
    %v2277 = vunpack.c.h.b16 %v1887
    %v2278 = vunpack.c.l.b16 %v1888
    %v2279 = vunpack.c.h.b16 %v1888
    %v2280 = vunpack.c.l.b16 %v1889
    %v2281 = vunpack.c.h.b16 %v1889
    %v2282 = vunpack.c.l.b16 %v1890
    %v2283 = vunpack.c.h.b16 %v1890
    %v2284 = vunpack.c.l.b16 %v1891
    %v2285 = vunpack.c.h.b16 %v1891
    %v2286 = vunpack.c.l.b16 %v1892
    %v2287 = vunpack.c.h.b16 %v1892
    %v2288 = vunpack.c.l.b16 %v1893
    %v2289 = vunpack.c.h.b16 %v1893
    %v2290 = vunpack.c.l.b16 %v1894
    %v2291 = vunpack.c.h.b16 %v1894
    %v2292 = vunpack.c.l.b16 %v1895
    %v2293 = vunpack.c.h.b16 %v1895
    %v2294 = vunpack.c.l.b16 %v1896
    %v2295 = vunpack.c.h.b16 %v1896
    %v2296 = vunpack.c.l.b16 %v1897
    %v2297 = vunpack.c.h.b16 %v1897
    %v2298 = vunpack.c.l.b16 %v1898
    %v2299 = vunpack.c.h.b16 %v1898
    %v2300 = vunpack.c.l.b16 %v1899
    %v2301 = vunpack.c.h.b16 %v1899
    %v2302 = vunpack.c.l.b16 %v1900
    %v2303 = vunpack.c.h.b16 %v1900
    %v2304 = vunpack.c.l.b16 %v1901
    %v2305 = vunpack.c.h.b16 %v1901
    %v2306 = vunpack.c.l.b16 %v1902
    %v2307 = vunpack.c.h.b16 %v1902
    %v2308 = vunpack.c.l.b16 %v1903
    %v2309 = vunpack.c.h.b16 %v1903
    %v2310 = vunpack.c.l.b16 %v1904
    %v2311 = vunpack.c.h.b16 %v1904
    %v2312 = vunpack.c.l.b16 %v1905
    %v2313 = vunpack.c.h.b16 %v1905
    %v2314 = vunpack.c.l.b16 %v1906
    %v2315 = vunpack.c.h.b16 %v1906
    %v2316 = vunpack.c.l.b16 %v1907
    %v2317 = vunpack.c.h.b16 %v1907
    %v2318 = vunpack.c.l.b16 %v1908
    %v2319 = vunpack.c.h.b16 %v1908
    %v2320 = vunpack.c.l.b16 %v1909
    %v2321 = vunpack.c.h.b16 %v1909
    %v2322 = vunpack.c.l.b16 %v1910
    %v2323 = vunpack.c.h.b16 %v1910
    %v2324 = vunpack.c.l.b16 %v1911
    %v2325 = vunpack.c.h.b16 %v1911
    %v2326 = vunpack.c.l.b16 %v1912
    %v2327 = vunpack.c.h.b16 %v1912
    %v2328 = vunpack.c.l.b16 %v1913
    %v2329 = vunpack.c.h.b16 %v1913
    %v2330 = vunpack.c.l.b16 %v1914
    %v2331 = vunpack.c.h.b16 %v1914
    %v2332 = vunpack.c.l.b16 %v1915
    %v2333 = vunpack.c.h.b16 %v1915
    %v2334 = vunpack.c.l.b16 %v1916
    %v2335 = vunpack.c.h.b16 %v1916
    %v2336 = vunpack.c.l.b16 %v1917
    %v2337 = vunpack.c.h.b16 %v1917
    %v2338 = vunpack.c.l.b16 %v1918
    %v2339 = vunpack.c.h.b16 %v1918
    %v2340 = vunpack.c.l.b16 %v1919
    %v2341 = vunpack.c.h.b16 %v1919
    %v2342 = vunpack.c.l.b16 %v1920
    %v2343 = vunpack.c.h.b16 %v1920
    %v2344 = vunpack.c.l.b16 %v1921
    %v2345 = vunpack.c.h.b16 %v1921
    %v2346 = vunpack.c.l.b16 %v1922
    %v2347 = vunpack.c.h.b16 %v1922
    %v2348 = vunpack.c.l.b16 %v1923
    %v2349 = vunpack.c.h.b16 %v1923
    %v2350 = vunpack.c.l.b16 %v1924
    %v2351 = vunpack.c.h.b16 %v1924
    %v2352 = vpack.c.b16 %v2100, %v2096
    %v2353 = vpack.c.b16 %v2101, %v2097
    %v2354 = vpack.c.b16 %v2102, %v2098
    %v2355 = vpack.c.b16 %v2103, %v2099
    %v2356 = vpack.c.b16 %v2108, %v2104
    %v2357 = vpack.c.b16 %v2109, %v2105
    %v2358 = vpack.c.b16 %v2110, %v2106
    %v2359 = vpack.c.b16 %v2111, %v2107
    %v2360 = vpack.c.b16 %v2116, %v2112
    %v2361 = vpack.c.b16 %v2117, %v2113
    %v2362 = vpack.c.b16 %v2118, %v2114
    %v2363 = vpack.c.b16 %v2119, %v2115
    %v2364 = vpack.c.b16 %v2124, %v2120
    %v2365 = vpack.c.b16 %v2125, %v2121
    %v2366 = vpack.c.b16 %v2126, %v2122
    %v2367 = vpack.c.b16 %v2127, %v2123
    %v2368 = vpack.c.b16 %v2132, %v2128
    %v2369 = vpack.c.b16 %v2133, %v2129
    %v2370 = vpack.c.b16 %v2134, %v2130
    %v2371 = vpack.c.b16 %v2135, %v2131
    %v2372 = vpack.c.b16 %v2140, %v2136
    %v2373 = vpack.c.b16 %v2141, %v2137
    %v2374 = vpack.c.b16 %v2142, %v2138
    %v2375 = vpack.c.b16 %v2143, %v2139
    %v2376 = vpack.c.b16 %v2148, %v2144
    %v2377 = vpack.c.b16 %v2149, %v2145
    %v2378 = vpack.c.b16 %v2150, %v2146
    %v2379 = vpack.c.b16 %v2151, %v2147
    %v2380 = vpack.c.b16 %v2156, %v2152
    %v2381 = vpack.c.b16 %v2157, %v2153
    %v2382 = vpack.c.b16 %v2158, %v2154
    %v2383 = vpack.c.b16 %v2159, %v2155
    %v2384 = vpack.c.b16 %v2164, %v2160
    %v2385 = vpack.c.b16 %v2165, %v2161
    %v2386 = vpack.c.b16 %v2166, %v2162
    %v2387 = vpack.c.b16 %v2167, %v2163
    %v2388 = vpack.c.b16 %v2172, %v2168
    %v2389 = vpack.c.b16 %v2173, %v2169
    %v2390 = vpack.c.b16 %v2174, %v2170
    %v2391 = vpack.c.b16 %v2175, %v2171
    %v2392 = vpack.c.b16 %v2180, %v2176
    %v2393 = vpack.c.b16 %v2181, %v2177
    %v2394 = vpack.c.b16 %v2182, %v2178
    %v2395 = vpack.c.b16 %v2183, %v2179
    %v2396 = vpack.c.b16 %v2188, %v2184
    %v2397 = vpack.c.b16 %v2189, %v2185
    %v2398 = vpack.c.b16 %v2190, %v2186
    %v2399 = vpack.c.b16 %v2191, %v2187
    %v2400 = vpack.c.b16 %v2196, %v2192
    %v2401 = vpack.c.b16 %v2197, %v2193
    %v2402 = vpack.c.b16 %v2198, %v2194
    %v2403 = vpack.c.b16 %v2199, %v2195
    %v2404 = vpack.c.b16 %v2204, %v2200
    %v2405 = vpack.c.b16 %v2205, %v2201
    %v2406 = vpack.c.b16 %v2206, %v2202
    %v2407 = vpack.c.b16 %v2207, %v2203
    %v2408 = vpack.c.b16 %v2212, %v2208
    %v2409 = vpack.c.b16 %v2213, %v2209
    %v2410 = vpack.c.b16 %v2214, %v2210
    %v2411 = vpack.c.b16 %v2215, %v2211
    %v2412 = vpack.c.b16 %v2220, %v2216
    %v2413 = vpack.c.b16 %v2221, %v2217
    %v2414 = vpack.c.b16 %v2222, %v2218
    %v2415 = vpack.c.b16 %v2223, %v2219
    %v2416 = vpack.c.b16 %v2228, %v2224
    %v2417 = vpack.c.b16 %v2229, %v2225
    %v2418 = vpack.c.b16 %v2230, %v2226
    %v2419 = vpack.c.b16 %v2231, %v2227
    %v2420 = vpack.c.b16 %v2236, %v2232
    %v2421 = vpack.c.b16 %v2237, %v2233
    %v2422 = vpack.c.b16 %v2238, %v2234
    %v2423 = vpack.c.b16 %v2239, %v2235
    %v2424 = vpack.c.b16 %v2244, %v2240
    %v2425 = vpack.c.b16 %v2245, %v2241
    %v2426 = vpack.c.b16 %v2246, %v2242
    %v2427 = vpack.c.b16 %v2247, %v2243
    %v2428 = vpack.c.b16 %v2252, %v2248
    %v2429 = vpack.c.b16 %v2253, %v2249
    %v2430 = vpack.c.b16 %v2254, %v2250
    %v2431 = vpack.c.b16 %v2255, %v2251
    %v2432 = vpack.c.b16 %v2260, %v2256
    %v2433 = vpack.c.b16 %v2261, %v2257
    %v2434 = vpack.c.b16 %v2262, %v2258
    %v2435 = vpack.c.b16 %v2263, %v2259
    %v2436 = vpack.c.b16 %v2268, %v2264
    %v2437 = vpack.c.b16 %v2269, %v2265
    %v2438 = vpack.c.b16 %v2270, %v2266
    %v2439 = vpack.c.b16 %v2271, %v2267
    %v2440 = vpack.c.b16 %v2276, %v2272
    %v2441 = vpack.c.b16 %v2277, %v2273
    %v2442 = vpack.c.b16 %v2278, %v2274
    %v2443 = vpack.c.b16 %v2279, %v2275
    %v2444 = vpack.c.b16 %v2284, %v2280
    %v2445 = vpack.c.b16 %v2285, %v2281
    %v2446 = vpack.c.b16 %v2286, %v2282
    %v2447 = vpack.c.b16 %v2287, %v2283
    %v2448 = vpack.c.b16 %v2292, %v2288
    %v2449 = vpack.c.b16 %v2293, %v2289
    %v2450 = vpack.c.b16 %v2294, %v2290
    %v2451 = vpack.c.b16 %v2295, %v2291
    %v2452 = vpack.c.b16 %v2300, %v2296
    %v2453 = vpack.c.b16 %v2301, %v2297
    %v2454 = vpack.c.b16 %v2302, %v2298
    %v2455 = vpack.c.b16 %v2303, %v2299
    %v2456 = vpack.c.b16 %v2308, %v2304
    %v2457 = vpack.c.b16 %v2309, %v2305
    %v2458 = vpack.c.b16 %v2310, %v2306
    %v2459 = vpack.c.b16 %v2311, %v2307
    %v2460 = vpack.c.b16 %v2316, %v2312
    %v2461 = vpack.c.b16 %v2317, %v2313
    %v2462 = vpack.c.b16 %v2318, %v2314
    %v2463 = vpack.c.b16 %v2319, %v2315
    %v2464 = vpack.c.b16 %v2324, %v2320
    %v2465 = vpack.c.b16 %v2325, %v2321
    %v2466 = vpack.c.b16 %v2326, %v2322
    %v2467 = vpack.c.b16 %v2327, %v2323
    %v2468 = vpack.c.b16 %v2332, %v2328
    %v2469 = vpack.c.b16 %v2333, %v2329
    %v2470 = vpack.c.b16 %v2334, %v2330
    %v2471 = vpack.c.b16 %v2335, %v2331
    %v2472 = vpack.c.b16 %v2340, %v2336
    %v2473 = vpack.c.b16 %v2341, %v2337
    %v2474 = vpack.c.b16 %v2342, %v2338
    %v2475 = vpack.c.b16 %v2343, %v2339
    %v2476 = vpack.c.b16 %v2348, %v2344
    %v2477 = vpack.c.b16 %v2349, %v2345
    %v2478 = vpack.c.b16 %v2350, %v2346
    %v2479 = vpack.c.b16 %v2351, %v2347
    %2608 = vmatprep.subr.bf16.mxu0 %v2353
    %2609 = vmatpush1.bf16.msra.mxu0 %v2352
    %2610 = vmatprep.subr.bf16.mxu0 %v2357
    %2611 = vmatpush1.bf16.msra.mxu0 %v2356
    %2612 = vmatprep.subr.bf16.mxu0 %v2361
    %2613 = vmatpush1.bf16.msra.mxu0 %v2360
    %2614 = vmatprep.subr.bf16.mxu0 %v2365
    %2615 = vmatpush1.bf16.msra.mxu0 %v2364
    %2616 = vmatprep.subr.bf16.mxu0 %v2369
    %2617 = vmatpush1.bf16.msra.mxu0 %v2368
    %2618 = vmatprep.subr.bf16.mxu0 %v2373
    %2619 = vmatpush1.bf16.msra.mxu0 %v2372
    %2620 = vmatprep.subr.bf16.mxu0 %v2377
    %2621 = vmatpush1.bf16.msra.mxu0 %v2376
    %2622 = vmatprep.subr.bf16.mxu0 %v2381
    %2623 = vmatpush1.bf16.msra.mxu0 %v2380
    %2624 = vmatprep.subr.bf16.mxu0 %v2385
    %2625 = vmatpush1.bf16.msra.mxu0 %v2384
    %2626 = vmatprep.subr.bf16.mxu0 %v2389
    %2627 = vmatpush1.bf16.msra.mxu0 %v2388
    %2628 = vmatprep.subr.bf16.mxu0 %v2393
    %2629 = vmatpush1.bf16.msra.mxu0 %v2392
    %2630 = vmatprep.subr.bf16.mxu0 %v2397
    %2631 = vmatpush1.bf16.msra.mxu0 %v2396
    %2632 = vmatprep.subr.bf16.mxu0 %v2401
    %2633 = vmatpush1.bf16.msra.mxu0 %v2400
    %2634 = vmatprep.subr.bf16.mxu0 %v2405
    %2635 = vmatpush1.bf16.msra.mxu0 %v2404
    %2636 = vmatprep.subr.bf16.mxu0 %v2409
    %2637 = vmatpush1.bf16.msra.mxu0 %v2408
    %2638 = vmatprep.subr.bf16.mxu0 %v2413
    %2639 = vmatpush1.bf16.msra.mxu0 %v2412
    %2640 = vmatprep.mubr.bf16.mxu0 %v1926
    %2641 = vmatmul.mubr.bf16.gmra.mrb[0].mxu0 %v1925
    %v2642 = vpop.f32.mrb[0].mxu0
    %v2643 = vadd.f32 %v1955, %v2642
    %v2644 = vpop.f32.mrb[0].mxu0
    %v2645 = vadd.f32 %v1959, %v2644
    %v2646 = vpop.f32.mrb[0].mxu0
    %v2647 = vpop.f32.mrb[0].mxu0
    %2648 = vdwg.mxu0
    %2649 = vmatprep.subr.bf16.mxu0 %v2417
    %2650 = vmatpush1.bf16.msra.mxu0 %v2416
    %2651 = vmatprep.subr.bf16.mxu0 %v2421
    %2652 = vmatpush1.bf16.msra.mxu0 %v2420
    %2653 = vmatprep.subr.bf16.mxu0 %v2425
    %2654 = vmatpush1.bf16.msra.mxu0 %v2424
    %2655 = vmatprep.subr.bf16.mxu0 %v2429
    %2656 = vmatpush1.bf16.msra.mxu0 %v2428
    %2657 = vmatprep.subr.bf16.mxu0 %v2433
    %2658 = vmatpush1.bf16.msra.mxu0 %v2432
    %2659 = vmatprep.subr.bf16.mxu0 %v2437
    %2660 = vmatpush1.bf16.msra.mxu0 %v2436
    %2661 = vmatprep.subr.bf16.mxu0 %v2441
    %2662 = vmatpush1.bf16.msra.mxu0 %v2440
    %2663 = vmatprep.subr.bf16.mxu0 %v2445
    %2664 = vmatpush1.bf16.msra.mxu0 %v2444
    %2665 = vmatprep.subr.bf16.mxu0 %v2449
    %2666 = vmatpush1.bf16.msra.mxu0 %v2448
    %2667 = vmatprep.subr.bf16.mxu0 %v2453
    %2668 = vmatpush1.bf16.msra.mxu0 %v2452
    %2669 = vmatprep.subr.bf16.mxu0 %v2457
    %2670 = vmatpush1.bf16.msra.mxu0 %v2456
    %2671 = vmatprep.subr.bf16.mxu0 %v2461
    %2672 = vmatpush1.bf16.msra.mxu0 %v2460
    %2673 = vmatprep.subr.bf16.mxu0 %v2465
    %2674 = vmatpush1.bf16.msra.mxu0 %v2464
    %2675 = vmatprep.subr.bf16.mxu0 %v2469
    %2676 = vmatpush1.bf16.msra.mxu0 %v2468
    %2677 = vmatprep.subr.bf16.mxu0 %v2473
    %2678 = vmatpush1.bf16.msra.mxu0 %v2472
    %2679 = vmatprep.subr.bf16.mxu0 %v2477
    %2680 = vmatpush1.bf16.msra.mxu0 %v2476
    %2681 = vmatprep.mubr.bf16.mxu0 %v1928
    %2682 = vmatmul.mubr.bf16.gmra.mrb[0].mxu0 %v1927
    %v2683 = vpop.f32.mrb[0].mxu0
    %v2684 = vadd.f32 %v2643, %v2683
    %v2685 = vpop.f32.mrb[0].mxu0
    %v2686 = vadd.f32 %v2645, %v2685
    %v2687 = vpop.f32.mrb[0].mxu0
    %v2688 = vpop.f32.mrb[0].mxu0
    %2689 = vdwg.mxu0
    %2690 = vmatprep.subr.bf16.mxu0 %v2355
    %2691 = vmatpush1.bf16.msra.mxu0 %v2354
    %2692 = vmatprep.subr.bf16.mxu0 %v2359
    %2693 = vmatpush1.bf16.msra.mxu0 %v2358
    %2694 = vmatprep.subr.bf16.mxu0 %v2363
    %2695 = vmatpush1.bf16.msra.mxu0 %v2362
    %2696 = vmatprep.subr.bf16.mxu0 %v2367
    %2697 = vmatpush1.bf16.msra.mxu0 %v2366
    %2698 = vmatprep.subr.bf16.mxu0 %v2371
    %2699 = vmatpush1.bf16.msra.mxu0 %v2370
    %2700 = vmatprep.subr.bf16.mxu0 %v2375
    %2701 = vmatpush1.bf16.msra.mxu0 %v2374
    %2702 = vmatprep.subr.bf16.mxu0 %v2379
    %2703 = vmatpush1.bf16.msra.mxu0 %v2378
    %2704 = vmatprep.subr.bf16.mxu0 %v2383
    %2705 = vmatpush1.bf16.msra.mxu0 %v2382
    %2706 = vmatprep.subr.bf16.mxu0 %v2387
    %2707 = vmatpush1.bf16.msra.mxu0 %v2386
    %2708 = vmatprep.subr.bf16.mxu0 %v2391
    %2709 = vmatpush1.bf16.msra.mxu0 %v2390
    %2710 = vmatprep.subr.bf16.mxu0 %v2395
    %2711 = vmatpush1.bf16.msra.mxu0 %v2394
    %2712 = vmatprep.subr.bf16.mxu0 %v2399
    %2713 = vmatpush1.bf16.msra.mxu0 %v2398
    %2714 = vmatprep.subr.bf16.mxu0 %v2403
    %2715 = vmatpush1.bf16.msra.mxu0 %v2402
    %2716 = vmatprep.subr.bf16.mxu0 %v2407
    %2717 = vmatpush1.bf16.msra.mxu0 %v2406
    %2718 = vmatprep.subr.bf16.mxu0 %v2411
    %2719 = vmatpush1.bf16.msra.mxu0 %v2410
    %2720 = vmatprep.subr.bf16.mxu0 %v2415
    %2721 = vmatpush1.bf16.msra.mxu0 %v2414
    %2722 = vmatprep.mubr.bf16.mxu0 %v1926
    %2723 = vmatmul.mubr.bf16.gmra.mrb[0].mxu0 %v1925
    %v2724 = vpop.f32.mrb[0].mxu0
    %v2725 = vadd.f32 %v1963, %v2724
    %v2726 = vpop.f32.mrb[0].mxu0
    %v2727 = vadd.f32 %v1967, %v2726
    %v2728 = vpop.f32.mrb[0].mxu0
    %v2729 = vpop.f32.mrb[0].mxu0
    %2730 = vdwg.mxu0
    %2731 = vmatprep.subr.bf16.mxu0 %v2419
    %2732 = vmatpush1.bf16.msra.mxu0 %v2418
    %2733 = vmatprep.subr.bf16.mxu0 %v2423
    %2734 = vmatpush1.bf16.msra.mxu0 %v2422
    %2735 = vmatprep.subr.bf16.mxu0 %v2427
    %2736 = vmatpush1.bf16.msra.mxu0 %v2426
    %2737 = vmatprep.subr.bf16.mxu0 %v2431
    %2738 = vmatpush1.bf16.msra.mxu0 %v2430
    %2739 = vmatprep.subr.bf16.mxu0 %v2435
    %2740 = vmatpush1.bf16.msra.mxu0 %v2434
    %2741 = vmatprep.subr.bf16.mxu0 %v2439
    %2742 = vmatpush1.bf16.msra.mxu0 %v2438
    %2743 = vmatprep.subr.bf16.mxu0 %v2443
    %2744 = vmatpush1.bf16.msra.mxu0 %v2442
    %2745 = vmatprep.subr.bf16.mxu0 %v2447
    %2746 = vmatpush1.bf16.msra.mxu0 %v2446
    %2747 = vmatprep.subr.bf16.mxu0 %v2451
    %2748 = vmatpush1.bf16.msra.mxu0 %v2450
    %2749 = vmatprep.subr.bf16.mxu0 %v2455
    %2750 = vmatpush1.bf16.msra.mxu0 %v2454
    %2751 = vmatprep.subr.bf16.mxu0 %v2459
    %2752 = vmatpush1.bf16.msra.mxu0 %v2458
    %2753 = vmatprep.subr.bf16.mxu0 %v2463
    %2754 = vmatpush1.bf16.msra.mxu0 %v2462
    %2755 = vmatprep.subr.bf16.mxu0 %v2467
    %2756 = vmatpush1.bf16.msra.mxu0 %v2466
    %2757 = vmatprep.subr.bf16.mxu0 %v2471
    %2758 = vmatpush1.bf16.msra.mxu0 %v2470
    %2759 = vmatprep.subr.bf16.mxu0 %v2475
    %2760 = vmatpush1.bf16.msra.mxu0 %v2474
    %2761 = vmatprep.subr.bf16.mxu0 %v2479
    %2762 = vmatpush1.bf16.msra.mxu0 %v2478
    %2763 = vmatprep.mubr.bf16.mxu0 %v1928
    %2764 = vmatmul.mubr.bf16.gmra.mrb[0].mxu0 %v1927
    %v2765 = vpop.f32.mrb[0].mxu0
    %v2766 = vadd.f32 %v2725, %v2765
    %v2767 = vpop.f32.mrb[0].mxu0
    %v2768 = vadd.f32 %v2727, %v2767
    %v2769 = vpop.f32.mrb[0].mxu0
    %v2770 = vpop.f32.mrb[0].mxu0
    %2771 = vdwg.mxu0
    %v2772 = vmax.f32 %v2684, 0.0
    %v2773 = vmax.f32 %v2686, 0.0
    %v2774 = vmax.f32 %v2766, 0.0
    %v2775 = vmax.f32 %v2768, 0.0
    %2776 = vst [vmem:[#allocation2] sm:$0xff] %v2772
    %2777 = vst [vmem:[#allocation2 + $0x8] sm:$0xff] %v2773
    %2778 = vst [vmem:[#allocation2 + $0x10] sm:$0xff] %v2774
    %2779 = vst [vmem:[#allocation2 + $0x18] sm:$0xff] %v2775
    %v2780 = vld [vmem:[#allocation2] sm:$0xff]
    %v2781 = vld [vmem:[#allocation2 + $0x8] sm:$0xff]
    %v2782 = vld [vmem:[#allocation2 + $0x10] sm:$0xff]
    %v2783 = vld [vmem:[#allocation2 + $0x18] sm:$0xff]
    %v2784 = vld [vmem:[#allocation17] sm:$0xff]
    %v2785 = vld [vmem:[#allocation17 + $0x8] sm:$0xff]
    %v2786 = vld [vmem:[#allocation17 + $0x10] sm:$0xff]
    %v2787 = vld [vmem:[#allocation17 + $0x18] sm:$0xff]
    %v2788 = vld [vmem:[#allocation17 + $0x20] sm:$0xff]
    %v2789 = vld [vmem:[#allocation17 + $0x28] sm:$0xff]
    %v2790 = vld [vmem:[#allocation17 + $0x30] sm:$0xff]
    %v2791 = vld [vmem:[#allocation17 + $0x38] sm:$0xff]
    %v2792 = vld [vmem:[#allocation17 + $0x40] sm:$0xff]
    %v2793 = vld [vmem:[#allocation17 + $0x48] sm:$0xff]
    %v2794 = vld [vmem:[#allocation17 + $0x50] sm:$0xff]
    %v2795 = vld [vmem:[#allocation17 + $0x58] sm:$0xff]
    %v2796 = vld [vmem:[#allocation17 + $0x60] sm:$0xff]
    %v2797 = vld [vmem:[#allocation17 + $0x68] sm:$0xff]
    %v2798 = vld [vmem:[#allocation17 + $0x70] sm:$0xff]
    %v2799 = vld [vmem:[#allocation17 + $0x78] sm:$0xff]
    %v2800 = vld [vmem:[#allocation17 + $0x80] sm:$0xff]
    %v2801 = vld [vmem:[#allocation17 + $0x88] sm:$0xff]
    %v2802 = vld [vmem:[#allocation17 + $0x90] sm:$0xff]
    %v2803 = vld [vmem:[#allocation17 + $0x98] sm:$0xff]
    %v2804 = vld [vmem:[#allocation17 + $0xa0] sm:$0xff]
    %v2805 = vld [vmem:[#allocation17 + $0xa8] sm:$0xff]
    %v2806 = vld [vmem:[#allocation17 + $0xb0] sm:$0xff]
    %v2807 = vld [vmem:[#allocation17 + $0xb8] sm:$0xff]
    %v2808 = vld [vmem:[#allocation17 + $0xc0] sm:$0xff]
    %v2809 = vld [vmem:[#allocation17 + $0xc8] sm:$0xff]
    %v2810 = vld [vmem:[#allocation17 + $0xd0] sm:$0xff]
    %v2811 = vld [vmem:[#allocation17 + $0xd8] sm:$0xff]
    %v2812 = vld [vmem:[#allocation17 + $0xe0] sm:$0xff]
    %v2813 = vld [vmem:[#allocation17 + $0xe8] sm:$0xff]
    %v2814 = vld [vmem:[#allocation17 + $0xf0] sm:$0xff]
    %v2815 = vld [vmem:[#allocation17 + $0xf8] sm:$0xff]
    %v2816 = vld [vmem:[#allocation17 + $0x100] sm:$0xff]
    %v2817 = vld [vmem:[#allocation17 + $0x108] sm:$0xff]
    %v2818 = vld [vmem:[#allocation17 + $0x110] sm:$0xff]
    %v2819 = vld [vmem:[#allocation17 + $0x118] sm:$0xff]
    %v2820 = vld [vmem:[#allocation17 + $0x120] sm:$0xff]
    %v2821 = vld [vmem:[#allocation17 + $0x128] sm:$0xff]
    %v2822 = vld [vmem:[#allocation17 + $0x130] sm:$0xff]
    %v2823 = vld [vmem:[#allocation17 + $0x138] sm:$0xff]
    %v2824 = vld [vmem:[#allocation17 + $0x140] sm:$0xff]
    %v2825 = vld [vmem:[#allocation17 + $0x148] sm:$0xff]
    %v2826 = vld [vmem:[#allocation17 + $0x150] sm:$0xff]
    %v2827 = vld [vmem:[#allocation17 + $0x158] sm:$0xff]
    %v2828 = vld [vmem:[#allocation17 + $0x160] sm:$0xff]
    %v2829 = vld [vmem:[#allocation17 + $0x168] sm:$0xff]
    %v2830 = vld [vmem:[#allocation17 + $0x170] sm:$0xff]
    %v2831 = vld [vmem:[#allocation17 + $0x178] sm:$0xff]
    %v2832 = vld [vmem:[#allocation17 + $0x180] sm:$0xff]
    %v2833 = vld [vmem:[#allocation17 + $0x188] sm:$0xff]
    %v2834 = vld [vmem:[#allocation17 + $0x190] sm:$0xff]
    %v2835 = vld [vmem:[#allocation17 + $0x198] sm:$0xff]
    %v2836 = vld [vmem:[#allocation17 + $0x1a0] sm:$0xff]
    %v2837 = vld [vmem:[#allocation17 + $0x1a8] sm:$0xff]
    %v2838 = vld [vmem:[#allocation17 + $0x1b0] sm:$0xff]
    %v2839 = vld [vmem:[#allocation17 + $0x1b8] sm:$0xff]
    %v2840 = vld [vmem:[#allocation17 + $0x1c0] sm:$0xff]
    %v2841 = vld [vmem:[#allocation17 + $0x1c8] sm:$0xff]
    %v2842 = vld [vmem:[#allocation17 + $0x1d0] sm:$0xff]
    %v2843 = vld [vmem:[#allocation17 + $0x1d8] sm:$0xff]
    %v2844 = vld [vmem:[#allocation17 + $0x1e0] sm:$0xff]
    %v2845 = vld [vmem:[#allocation17 + $0x1e8] sm:$0xff]
    %v2846 = vld [vmem:[#allocation17 + $0x1f0] sm:$0xff]
    %v2847 = vld [vmem:[#allocation17 + $0x1f8] sm:$0xff]
    %v2848 = vld [vmem:[#allocation17 + $0x200] sm:$0xff]
    %v2849 = vld [vmem:[#allocation17 + $0x208] sm:$0xff]
    %v2850 = vld [vmem:[#allocation17 + $0x210] sm:$0xff]
    %v2851 = vld [vmem:[#allocation17 + $0x218] sm:$0xff]
    %v2852 = vld [vmem:[#allocation17 + $0x220] sm:$0xff]
    %v2853 = vld [vmem:[#allocation17 + $0x228] sm:$0xff]
    %v2854 = vld [vmem:[#allocation17 + $0x230] sm:$0xff]
    %v2855 = vld [vmem:[#allocation17 + $0x238] sm:$0xff]
    %v2856 = vld [vmem:[#allocation17 + $0x240] sm:$0xff]
    %v2857 = vld [vmem:[#allocation17 + $0x248] sm:$0xff]
    %v2858 = vld [vmem:[#allocation17 + $0x250] sm:$0xff]
    %v2859 = vld [vmem:[#allocation17 + $0x258] sm:$0xff]
    %v2860 = vld [vmem:[#allocation17 + $0x260] sm:$0xff]
    %v2861 = vld [vmem:[#allocation17 + $0x268] sm:$0xff]
    %v2862 = vld [vmem:[#allocation17 + $0x270] sm:$0xff]
    %v2863 = vld [vmem:[#allocation17 + $0x278] sm:$0xff]
    %v2864 = vld [vmem:[#allocation17 + $0x280] sm:$0xff]
    %v2865 = vld [vmem:[#allocation17 + $0x288] sm:$0xff]
    %v2866 = vld [vmem:[#allocation17 + $0x290] sm:$0xff]
    %v2867 = vld [vmem:[#allocation17 + $0x298] sm:$0xff]
    %v2868 = vld [vmem:[#allocation17 + $0x2a0] sm:$0xff]
    %v2869 = vld [vmem:[#allocation17 + $0x2a8] sm:$0xff]
    %v2870 = vld [vmem:[#allocation17 + $0x2b0] sm:$0xff]
    %v2871 = vld [vmem:[#allocation17 + $0x2b8] sm:$0xff]
    %v2872 = vld [vmem:[#allocation17 + $0x2c0] sm:$0xff]
    %v2873 = vld [vmem:[#allocation17 + $0x2c8] sm:$0xff]
    %v2874 = vld [vmem:[#allocation17 + $0x2d0] sm:$0xff]
    %v2875 = vld [vmem:[#allocation17 + $0x2d8] sm:$0xff]
    %v2876 = vld [vmem:[#allocation17 + $0x2e0] sm:$0xff]
    %v2877 = vld [vmem:[#allocation17 + $0x2e8] sm:$0xff]
    %v2878 = vld [vmem:[#allocation17 + $0x2f0] sm:$0xff]
    %v2879 = vld [vmem:[#allocation17 + $0x2f8] sm:$0xff]
    %v2880 = vld [vmem:[#allocation17 + $0x300] sm:$0xff]
    %v2881 = vld [vmem:[#allocation17 + $0x308] sm:$0xff]
    %v2882 = vld [vmem:[#allocation17 + $0x310] sm:$0xff]
    %v2883 = vld [vmem:[#allocation17 + $0x318] sm:$0xff]
    %v2884 = vld [vmem:[#allocation17 + $0x320] sm:$0xff]
    %v2885 = vld [vmem:[#allocation17 + $0x328] sm:$0xff]
    %v2886 = vld [vmem:[#allocation17 + $0x330] sm:$0xff]
    %v2887 = vld [vmem:[#allocation17 + $0x338] sm:$0xff]
    %v2888 = vld [vmem:[#allocation17 + $0x340] sm:$0xff]
    %v2889 = vld [vmem:[#allocation17 + $0x348] sm:$0xff]
    %v2890 = vld [vmem:[#allocation17 + $0x350] sm:$0xff]
    %v2891 = vld [vmem:[#allocation17 + $0x358] sm:$0xff]
    %v2892 = vld [vmem:[#allocation17 + $0x360] sm:$0xff]
    %v2893 = vld [vmem:[#allocation17 + $0x368] sm:$0xff]
    %v2894 = vld [vmem:[#allocation17 + $0x370] sm:$0xff]
    %v2895 = vld [vmem:[#allocation17 + $0x378] sm:$0xff]
    %v2896 = vld [vmem:[#allocation17 + $0x380] sm:$0xff]
    %v2897 = vld [vmem:[#allocation17 + $0x388] sm:$0xff]
    %v2898 = vld [vmem:[#allocation17 + $0x390] sm:$0xff]
    %v2899 = vld [vmem:[#allocation17 + $0x398] sm:$0xff]
    %v2900 = vld [vmem:[#allocation17 + $0x3a0] sm:$0xff]
    %v2901 = vld [vmem:[#allocation17 + $0x3a8] sm:$0xff]
    %v2902 = vld [vmem:[#allocation17 + $0x3b0] sm:$0xff]
    %v2903 = vld [vmem:[#allocation17 + $0x3b8] sm:$0xff]
    %v2904 = vld [vmem:[#allocation17 + $0x3c0] sm:$0xff]
    %v2905 = vld [vmem:[#allocation17 + $0x3c8] sm:$0xff]
    %v2906 = vld [vmem:[#allocation17 + $0x3d0] sm:$0xff]
    %v2907 = vld [vmem:[#allocation17 + $0x3d8] sm:$0xff]
    %v2908 = vld [vmem:[#allocation17 + $0x3e0] sm:$0xff]
    %v2909 = vld [vmem:[#allocation17 + $0x3e8] sm:$0xff]
    %v2910 = vld [vmem:[#allocation17 + $0x3f0] sm:$0xff]
    %v2911 = vld [vmem:[#allocation17 + $0x3f8] sm:$0xff]
    %v2912 = vpack.c.bf16 %v2780, %v2780
    %v2913 = vpack.c.bf16 %v2781, %v2781
    %v2914 = vpack.c.bf16 %v2782, %v2782
    %v2915 = vpack.c.bf16 %v2783, %v2783
    %v2916 = vld [vmem:[%s15 + $0x11] sm:$0xf]
    %v2917 = vunpack.c.l.bf16 %v2916
    %v2919 = vlaneseq
    %v2920 = vshrl.u32 %v2919, 7
    %v2921 = vsub.s32 0, %v2920
    %v2922 = vrot.slane %v2917, %v2921
    %v2923 = vlaneseq
    %v2924 = vshrl.u32 %v2923, 7
    %v2925 = vsub.s32 2, %v2924
    %v2926 = vrot.slane %v2917, %v2925
    %v2927 = vlaneseq
    %v2928 = vshrl.u32 %v2927, 7
    %v2929 = vsub.s32 4, %v2928
    %v2930 = vrot.slane %v2917, %v2929
    %v2931 = vlaneseq
    %v2932 = vshrl.u32 %v2931, 7
    %v2933 = vsub.s32 6, %v2932
    %v2934 = vrot.slane %v2917, %v2933
    %v2939 = vlaneseq
    %v2940 = vshrl.u32 %v2939, 7
    %v2941 = vsub.s32 0, %v2940
    %v2942 = vrot.slane %v2922, %v2941
    %v2943 = vlaneseq
    %v2944 = vshrl.u32 %v2943, 7
    %v2945 = vsub.s32 0, %v2944
    %v2946 = vrot.slane %v2926, %v2945
    %v2947 = vlaneseq
    %v2948 = vshrl.u32 %v2947, 7
    %v2949 = vsub.s32 0, %v2948
    %v2950 = vrot.slane %v2930, %v2949
    %v2951 = vlaneseq
    %v2952 = vshrl.u32 %v2951, 7
    %v2953 = vsub.s32 0, %v2952
    %v2954 = vrot.slane %v2934, %v2953
    %v3083 = vunpack.c.l.b16 %v2784
    %v3084 = vunpack.c.h.b16 %v2784
    %v3085 = vunpack.c.l.b16 %v2785
    %v3086 = vunpack.c.h.b16 %v2785
    %v3087 = vunpack.c.l.b16 %v2786
    %v3088 = vunpack.c.h.b16 %v2786
    %v3089 = vunpack.c.l.b16 %v2787
    %v3090 = vunpack.c.h.b16 %v2787
    %v3091 = vunpack.c.l.b16 %v2788
    %v3092 = vunpack.c.h.b16 %v2788
    %v3093 = vunpack.c.l.b16 %v2789
    %v3094 = vunpack.c.h.b16 %v2789
    %v3095 = vunpack.c.l.b16 %v2790
    %v3096 = vunpack.c.h.b16 %v2790
    %v3097 = vunpack.c.l.b16 %v2791
    %v3098 = vunpack.c.h.b16 %v2791
    %v3099 = vunpack.c.l.b16 %v2792
    %v3100 = vunpack.c.h.b16 %v2792
    %v3101 = vunpack.c.l.b16 %v2793
    %v3102 = vunpack.c.h.b16 %v2793
    %v3103 = vunpack.c.l.b16 %v2794
    %v3104 = vunpack.c.h.b16 %v2794
    %v3105 = vunpack.c.l.b16 %v2795
    %v3106 = vunpack.c.h.b16 %v2795
    %v3107 = vunpack.c.l.b16 %v2796
    %v3108 = vunpack.c.h.b16 %v2796
    %v3109 = vunpack.c.l.b16 %v2797
    %v3110 = vunpack.c.h.b16 %v2797
    %v3111 = vunpack.c.l.b16 %v2798
    %v3112 = vunpack.c.h.b16 %v2798
    %v3113 = vunpack.c.l.b16 %v2799
    %v3114 = vunpack.c.h.b16 %v2799
    %v3115 = vunpack.c.l.b16 %v2800
    %v3116 = vunpack.c.h.b16 %v2800
    %v3117 = vunpack.c.l.b16 %v2801
    %v3118 = vunpack.c.h.b16 %v2801
    %v3119 = vunpack.c.l.b16 %v2802
    %v3120 = vunpack.c.h.b16 %v2802
    %v3121 = vunpack.c.l.b16 %v2803
    %v3122 = vunpack.c.h.b16 %v2803
    %v3123 = vunpack.c.l.b16 %v2804
    %v3124 = vunpack.c.h.b16 %v2804
    %v3125 = vunpack.c.l.b16 %v2805
    %v3126 = vunpack.c.h.b16 %v2805
    %v3127 = vunpack.c.l.b16 %v2806
    %v3128 = vunpack.c.h.b16 %v2806
    %v3129 = vunpack.c.l.b16 %v2807
    %v3130 = vunpack.c.h.b16 %v2807
    %v3131 = vunpack.c.l.b16 %v2808
    %v3132 = vunpack.c.h.b16 %v2808
    %v3133 = vunpack.c.l.b16 %v2809
    %v3134 = vunpack.c.h.b16 %v2809
    %v3135 = vunpack.c.l.b16 %v2810
    %v3136 = vunpack.c.h.b16 %v2810
    %v3137 = vunpack.c.l.b16 %v2811
    %v3138 = vunpack.c.h.b16 %v2811
    %v3139 = vunpack.c.l.b16 %v2812
    %v3140 = vunpack.c.h.b16 %v2812
    %v3141 = vunpack.c.l.b16 %v2813
    %v3142 = vunpack.c.h.b16 %v2813
    %v3143 = vunpack.c.l.b16 %v2814
    %v3144 = vunpack.c.h.b16 %v2814
    %v3145 = vunpack.c.l.b16 %v2815
    %v3146 = vunpack.c.h.b16 %v2815
    %v3147 = vunpack.c.l.b16 %v2816
    %v3148 = vunpack.c.h.b16 %v2816
    %v3149 = vunpack.c.l.b16 %v2817
    %v3150 = vunpack.c.h.b16 %v2817
    %v3151 = vunpack.c.l.b16 %v2818
    %v3152 = vunpack.c.h.b16 %v2818
    %v3153 = vunpack.c.l.b16 %v2819
    %v3154 = vunpack.c.h.b16 %v2819
    %v3155 = vunpack.c.l.b16 %v2820
    %v3156 = vunpack.c.h.b16 %v2820
    %v3157 = vunpack.c.l.b16 %v2821
    %v3158 = vunpack.c.h.b16 %v2821
    %v3159 = vunpack.c.l.b16 %v2822
    %v3160 = vunpack.c.h.b16 %v2822
    %v3161 = vunpack.c.l.b16 %v2823
    %v3162 = vunpack.c.h.b16 %v2823
    %v3163 = vunpack.c.l.b16 %v2824
    %v3164 = vunpack.c.h.b16 %v2824
    %v3165 = vunpack.c.l.b16 %v2825
    %v3166 = vunpack.c.h.b16 %v2825
    %v3167 = vunpack.c.l.b16 %v2826
    %v3168 = vunpack.c.h.b16 %v2826
    %v3169 = vunpack.c.l.b16 %v2827
    %v3170 = vunpack.c.h.b16 %v2827
    %v3171 = vunpack.c.l.b16 %v2828
    %v3172 = vunpack.c.h.b16 %v2828
    %v3173 = vunpack.c.l.b16 %v2829
    %v3174 = vunpack.c.h.b16 %v2829
    %v3175 = vunpack.c.l.b16 %v2830
    %v3176 = vunpack.c.h.b16 %v2830
    %v3177 = vunpack.c.l.b16 %v2831
    %v3178 = vunpack.c.h.b16 %v2831
    %v3179 = vunpack.c.l.b16 %v2832
    %v3180 = vunpack.c.h.b16 %v2832
    %v3181 = vunpack.c.l.b16 %v2833
    %v3182 = vunpack.c.h.b16 %v2833
    %v3183 = vunpack.c.l.b16 %v2834
    %v3184 = vunpack.c.h.b16 %v2834
    %v3185 = vunpack.c.l.b16 %v2835
    %v3186 = vunpack.c.h.b16 %v2835
    %v3187 = vunpack.c.l.b16 %v2836
    %v3188 = vunpack.c.h.b16 %v2836
    %v3189 = vunpack.c.l.b16 %v2837
    %v3190 = vunpack.c.h.b16 %v2837
    %v3191 = vunpack.c.l.b16 %v2838
    %v3192 = vunpack.c.h.b16 %v2838
    %v3193 = vunpack.c.l.b16 %v2839
    %v3194 = vunpack.c.h.b16 %v2839
    %v3195 = vunpack.c.l.b16 %v2840
    %v3196 = vunpack.c.h.b16 %v2840
    %v3197 = vunpack.c.l.b16 %v2841
    %v3198 = vunpack.c.h.b16 %v2841
    %v3199 = vunpack.c.l.b16 %v2842
    %v3200 = vunpack.c.h.b16 %v2842
    %v3201 = vunpack.c.l.b16 %v2843
    %v3202 = vunpack.c.h.b16 %v2843
    %v3203 = vunpack.c.l.b16 %v2844
    %v3204 = vunpack.c.h.b16 %v2844
    %v3205 = vunpack.c.l.b16 %v2845
    %v3206 = vunpack.c.h.b16 %v2845
    %v3207 = vunpack.c.l.b16 %v2846
    %v3208 = vunpack.c.h.b16 %v2846
    %v3209 = vunpack.c.l.b16 %v2847
    %v3210 = vunpack.c.h.b16 %v2847
    %v3211 = vunpack.c.l.b16 %v2848
    %v3212 = vunpack.c.h.b16 %v2848
    %v3213 = vunpack.c.l.b16 %v2849
    %v3214 = vunpack.c.h.b16 %v2849
    %v3215 = vunpack.c.l.b16 %v2850
    %v3216 = vunpack.c.h.b16 %v2850
    %v3217 = vunpack.c.l.b16 %v2851
    %v3218 = vunpack.c.h.b16 %v2851
    %v3219 = vunpack.c.l.b16 %v2852
    %v3220 = vunpack.c.h.b16 %v2852
    %v3221 = vunpack.c.l.b16 %v2853
    %v3222 = vunpack.c.h.b16 %v2853
    %v3223 = vunpack.c.l.b16 %v2854
    %v3224 = vunpack.c.h.b16 %v2854
    %v3225 = vunpack.c.l.b16 %v2855
    %v3226 = vunpack.c.h.b16 %v2855
    %v3227 = vunpack.c.l.b16 %v2856
    %v3228 = vunpack.c.h.b16 %v2856
    %v3229 = vunpack.c.l.b16 %v2857
    %v3230 = vunpack.c.h.b16 %v2857
    %v3231 = vunpack.c.l.b16 %v2858
    %v3232 = vunpack.c.h.b16 %v2858
    %v3233 = vunpack.c.l.b16 %v2859
    %v3234 = vunpack.c.h.b16 %v2859
    %v3235 = vunpack.c.l.b16 %v2860
    %v3236 = vunpack.c.h.b16 %v2860
    %v3237 = vunpack.c.l.b16 %v2861
    %v3238 = vunpack.c.h.b16 %v2861
    %v3239 = vunpack.c.l.b16 %v2862
    %v3240 = vunpack.c.h.b16 %v2862
    %v3241 = vunpack.c.l.b16 %v2863
    %v3242 = vunpack.c.h.b16 %v2863
    %v3243 = vunpack.c.l.b16 %v2864
    %v3244 = vunpack.c.h.b16 %v2864
    %v3245 = vunpack.c.l.b16 %v2865
    %v3246 = vunpack.c.h.b16 %v2865
    %v3247 = vunpack.c.l.b16 %v2866
    %v3248 = vunpack.c.h.b16 %v2866
    %v3249 = vunpack.c.l.b16 %v2867
    %v3250 = vunpack.c.h.b16 %v2867
    %v3251 = vunpack.c.l.b16 %v2868
    %v3252 = vunpack.c.h.b16 %v2868
    %v3253 = vunpack.c.l.b16 %v2869
    %v3254 = vunpack.c.h.b16 %v2869
    %v3255 = vunpack.c.l.b16 %v2870
    %v3256 = vunpack.c.h.b16 %v2870
    %v3257 = vunpack.c.l.b16 %v2871
    %v3258 = vunpack.c.h.b16 %v2871
    %v3259 = vunpack.c.l.b16 %v2872
    %v3260 = vunpack.c.h.b16 %v2872
    %v3261 = vunpack.c.l.b16 %v2873
    %v3262 = vunpack.c.h.b16 %v2873
    %v3263 = vunpack.c.l.b16 %v2874
    %v3264 = vunpack.c.h.b16 %v2874
    %v3265 = vunpack.c.l.b16 %v2875
    %v3266 = vunpack.c.h.b16 %v2875
    %v3267 = vunpack.c.l.b16 %v2876
    %v3268 = vunpack.c.h.b16 %v2876
    %v3269 = vunpack.c.l.b16 %v2877
    %v3270 = vunpack.c.h.b16 %v2877
    %v3271 = vunpack.c.l.b16 %v2878
    %v3272 = vunpack.c.h.b16 %v2878
    %v3273 = vunpack.c.l.b16 %v2879
    %v3274 = vunpack.c.h.b16 %v2879
    %v3275 = vunpack.c.l.b16 %v2880
    %v3276 = vunpack.c.h.b16 %v2880
    %v3277 = vunpack.c.l.b16 %v2881
    %v3278 = vunpack.c.h.b16 %v2881
    %v3279 = vunpack.c.l.b16 %v2882
    %v3280 = vunpack.c.h.b16 %v2882
    %v3281 = vunpack.c.l.b16 %v2883
    %v3282 = vunpack.c.h.b16 %v2883
    %v3283 = vunpack.c.l.b16 %v2884
    %v3284 = vunpack.c.h.b16 %v2884
    %v3285 = vunpack.c.l.b16 %v2885
    %v3286 = vunpack.c.h.b16 %v2885
    %v3287 = vunpack.c.l.b16 %v2886
    %v3288 = vunpack.c.h.b16 %v2886
    %v3289 = vunpack.c.l.b16 %v2887
    %v3290 = vunpack.c.h.b16 %v2887
    %v3291 = vunpack.c.l.b16 %v2888
    %v3292 = vunpack.c.h.b16 %v2888
    %v3293 = vunpack.c.l.b16 %v2889
    %v3294 = vunpack.c.h.b16 %v2889
    %v3295 = vunpack.c.l.b16 %v2890
    %v3296 = vunpack.c.h.b16 %v2890
    %v3297 = vunpack.c.l.b16 %v2891
    %v3298 = vunpack.c.h.b16 %v2891
    %v3299 = vunpack.c.l.b16 %v2892
    %v3300 = vunpack.c.h.b16 %v2892
    %v3301 = vunpack.c.l.b16 %v2893
    %v3302 = vunpack.c.h.b16 %v2893
    %v3303 = vunpack.c.l.b16 %v2894
    %v3304 = vunpack.c.h.b16 %v2894
    %v3305 = vunpack.c.l.b16 %v2895
    %v3306 = vunpack.c.h.b16 %v2895
    %v3307 = vunpack.c.l.b16 %v2896
    %v3308 = vunpack.c.h.b16 %v2896
    %v3309 = vunpack.c.l.b16 %v2897
    %v3310 = vunpack.c.h.b16 %v2897
    %v3311 = vunpack.c.l.b16 %v2898
    %v3312 = vunpack.c.h.b16 %v2898
    %v3313 = vunpack.c.l.b16 %v2899
    %v3314 = vunpack.c.h.b16 %v2899
    %v3315 = vunpack.c.l.b16 %v2900
    %v3316 = vunpack.c.h.b16 %v2900
    %v3317 = vunpack.c.l.b16 %v2901
    %v3318 = vunpack.c.h.b16 %v2901
    %v3319 = vunpack.c.l.b16 %v2902
    %v3320 = vunpack.c.h.b16 %v2902
    %v3321 = vunpack.c.l.b16 %v2903
    %v3322 = vunpack.c.h.b16 %v2903
    %v3323 = vunpack.c.l.b16 %v2904
    %v3324 = vunpack.c.h.b16 %v2904
    %v3325 = vunpack.c.l.b16 %v2905
    %v3326 = vunpack.c.h.b16 %v2905
    %v3327 = vunpack.c.l.b16 %v2906
    %v3328 = vunpack.c.h.b16 %v2906
    %v3329 = vunpack.c.l.b16 %v2907
    %v3330 = vunpack.c.h.b16 %v2907
    %v3331 = vunpack.c.l.b16 %v2908
    %v3332 = vunpack.c.h.b16 %v2908
    %v3333 = vunpack.c.l.b16 %v2909
    %v3334 = vunpack.c.h.b16 %v2909
    %v3335 = vunpack.c.l.b16 %v2910
    %v3336 = vunpack.c.h.b16 %v2910
    %v3337 = vunpack.c.l.b16 %v2911
    %v3338 = vunpack.c.h.b16 %v2911
    %v3339 = vpack.c.b16 %v3087, %v3083
    %v3340 = vpack.c.b16 %v3088, %v3084
    %v3341 = vpack.c.b16 %v3089, %v3085
    %v3342 = vpack.c.b16 %v3090, %v3086
    %v3343 = vpack.c.b16 %v3095, %v3091
    %v3344 = vpack.c.b16 %v3096, %v3092
    %v3345 = vpack.c.b16 %v3097, %v3093
    %v3346 = vpack.c.b16 %v3098, %v3094
    %v3347 = vpack.c.b16 %v3103, %v3099
    %v3348 = vpack.c.b16 %v3104, %v3100
    %v3349 = vpack.c.b16 %v3105, %v3101
    %v3350 = vpack.c.b16 %v3106, %v3102
    %v3351 = vpack.c.b16 %v3111, %v3107
    %v3352 = vpack.c.b16 %v3112, %v3108
    %v3353 = vpack.c.b16 %v3113, %v3109
    %v3354 = vpack.c.b16 %v3114, %v3110
    %v3355 = vpack.c.b16 %v3119, %v3115
    %v3356 = vpack.c.b16 %v3120, %v3116
    %v3357 = vpack.c.b16 %v3121, %v3117
    %v3358 = vpack.c.b16 %v3122, %v3118
    %v3359 = vpack.c.b16 %v3127, %v3123
    %v3360 = vpack.c.b16 %v3128, %v3124
    %v3361 = vpack.c.b16 %v3129, %v3125
    %v3362 = vpack.c.b16 %v3130, %v3126
    %v3363 = vpack.c.b16 %v3135, %v3131
    %v3364 = vpack.c.b16 %v3136, %v3132
    %v3365 = vpack.c.b16 %v3137, %v3133
    %v3366 = vpack.c.b16 %v3138, %v3134
    %v3367 = vpack.c.b16 %v3143, %v3139
    %v3368 = vpack.c.b16 %v3144, %v3140
    %v3369 = vpack.c.b16 %v3145, %v3141
    %v3370 = vpack.c.b16 %v3146, %v3142
    %v3371 = vpack.c.b16 %v3151, %v3147
    %v3372 = vpack.c.b16 %v3152, %v3148
    %v3373 = vpack.c.b16 %v3153, %v3149
    %v3374 = vpack.c.b16 %v3154, %v3150
    %v3375 = vpack.c.b16 %v3159, %v3155
    %v3376 = vpack.c.b16 %v3160, %v3156
    %v3377 = vpack.c.b16 %v3161, %v3157
    %v3378 = vpack.c.b16 %v3162, %v3158
    %v3379 = vpack.c.b16 %v3167, %v3163
    %v3380 = vpack.c.b16 %v3168, %v3164
    %v3381 = vpack.c.b16 %v3169, %v3165
    %v3382 = vpack.c.b16 %v3170, %v3166
    %v3383 = vpack.c.b16 %v3175, %v3171
    %v3384 = vpack.c.b16 %v3176, %v3172
    %v3385 = vpack.c.b16 %v3177, %v3173
    %v3386 = vpack.c.b16 %v3178, %v3174
    %v3387 = vpack.c.b16 %v3183, %v3179
    %v3388 = vpack.c.b16 %v3184, %v3180
    %v3389 = vpack.c.b16 %v3185, %v3181
    %v3390 = vpack.c.b16 %v3186, %v3182
    %v3391 = vpack.c.b16 %v3191, %v3187
    %v3392 = vpack.c.b16 %v3192, %v3188
    %v3393 = vpack.c.b16 %v3193, %v3189
    %v3394 = vpack.c.b16 %v3194, %v3190
    %v3395 = vpack.c.b16 %v3199, %v3195
    %v3396 = vpack.c.b16 %v3200, %v3196
    %v3397 = vpack.c.b16 %v3201, %v3197
    %v3398 = vpack.c.b16 %v3202, %v3198
    %v3399 = vpack.c.b16 %v3207, %v3203
    %v3400 = vpack.c.b16 %v3208, %v3204
    %v3401 = vpack.c.b16 %v3209, %v3205
    %v3402 = vpack.c.b16 %v3210, %v3206
    %v3403 = vpack.c.b16 %v3215, %v3211
    %v3404 = vpack.c.b16 %v3216, %v3212
    %v3405 = vpack.c.b16 %v3217, %v3213
    %v3406 = vpack.c.b16 %v3218, %v3214
    %v3407 = vpack.c.b16 %v3223, %v3219
    %v3408 = vpack.c.b16 %v3224, %v3220
    %v3409 = vpack.c.b16 %v3225, %v3221
    %v3410 = vpack.c.b16 %v3226, %v3222
    %v3411 = vpack.c.b16 %v3231, %v3227
    %v3412 = vpack.c.b16 %v3232, %v3228
    %v3413 = vpack.c.b16 %v3233, %v3229
    %v3414 = vpack.c.b16 %v3234, %v3230
    %v3415 = vpack.c.b16 %v3239, %v3235
    %v3416 = vpack.c.b16 %v3240, %v3236
    %v3417 = vpack.c.b16 %v3241, %v3237
    %v3418 = vpack.c.b16 %v3242, %v3238
    %v3419 = vpack.c.b16 %v3247, %v3243
    %v3420 = vpack.c.b16 %v3248, %v3244
    %v3421 = vpack.c.b16 %v3249, %v3245
    %v3422 = vpack.c.b16 %v3250, %v3246
    %v3423 = vpack.c.b16 %v3255, %v3251
    %v3424 = vpack.c.b16 %v3256, %v3252
    %v3425 = vpack.c.b16 %v3257, %v3253
    %v3426 = vpack.c.b16 %v3258, %v3254
    %v3427 = vpack.c.b16 %v3263, %v3259
    %v3428 = vpack.c.b16 %v3264, %v3260
    %v3429 = vpack.c.b16 %v3265, %v3261
    %v3430 = vpack.c.b16 %v3266, %v3262
    %v3431 = vpack.c.b16 %v3271, %v3267
    %v3432 = vpack.c.b16 %v3272, %v3268
    %v3433 = vpack.c.b16 %v3273, %v3269
    %v3434 = vpack.c.b16 %v3274, %v3270
    %v3435 = vpack.c.b16 %v3279, %v3275
    %v3436 = vpack.c.b16 %v3280, %v3276
    %v3437 = vpack.c.b16 %v3281, %v3277
    %v3438 = vpack.c.b16 %v3282, %v3278
    %v3439 = vpack.c.b16 %v3287, %v3283
    %v3440 = vpack.c.b16 %v3288, %v3284
    %v3441 = vpack.c.b16 %v3289, %v3285
    %v3442 = vpack.c.b16 %v3290, %v3286
    %v3443 = vpack.c.b16 %v3295, %v3291
    %v3444 = vpack.c.b16 %v3296, %v3292
    %v3445 = vpack.c.b16 %v3297, %v3293
    %v3446 = vpack.c.b16 %v3298, %v3294
    %v3447 = vpack.c.b16 %v3303, %v3299
    %v3448 = vpack.c.b16 %v3304, %v3300
    %v3449 = vpack.c.b16 %v3305, %v3301
    %v3450 = vpack.c.b16 %v3306, %v3302
    %v3451 = vpack.c.b16 %v3311, %v3307
    %v3452 = vpack.c.b16 %v3312, %v3308
    %v3453 = vpack.c.b16 %v3313, %v3309
    %v3454 = vpack.c.b16 %v3314, %v3310
    %v3455 = vpack.c.b16 %v3319, %v3315
    %v3456 = vpack.c.b16 %v3320, %v3316
    %v3457 = vpack.c.b16 %v3321, %v3317
    %v3458 = vpack.c.b16 %v3322, %v3318
    %v3459 = vpack.c.b16 %v3327, %v3323
    %v3460 = vpack.c.b16 %v3328, %v3324
    %v3461 = vpack.c.b16 %v3329, %v3325
    %v3462 = vpack.c.b16 %v3330, %v3326
    %v3463 = vpack.c.b16 %v3335, %v3331
    %v3464 = vpack.c.b16 %v3336, %v3332
    %v3465 = vpack.c.b16 %v3337, %v3333
    %v3466 = vpack.c.b16 %v3338, %v3334
    %3595 = vmatprep.subr.bf16.mxu0 %v3340
    %3596 = vmatpush1.bf16.msra.mxu0 %v3339
    %3597 = vmatprep.subr.bf16.mxu0 %v3344
    %3598 = vmatpush1.bf16.msra.mxu0 %v3343
    %3599 = vmatprep.subr.bf16.mxu0 %v3348
    %3600 = vmatpush1.bf16.msra.mxu0 %v3347
    %3601 = vmatprep.subr.bf16.mxu0 %v3352
    %3602 = vmatpush1.bf16.msra.mxu0 %v3351
    %3603 = vmatprep.subr.bf16.mxu0 %v3356
    %3604 = vmatpush1.bf16.msra.mxu0 %v3355
    %3605 = vmatprep.subr.bf16.mxu0 %v3360
    %3606 = vmatpush1.bf16.msra.mxu0 %v3359
    %3607 = vmatprep.subr.bf16.mxu0 %v3364
    %3608 = vmatpush1.bf16.msra.mxu0 %v3363
    %3609 = vmatprep.subr.bf16.mxu0 %v3368
    %3610 = vmatpush1.bf16.msra.mxu0 %v3367
    %3611 = vmatprep.subr.bf16.mxu0 %v3372
    %3612 = vmatpush1.bf16.msra.mxu0 %v3371
    %3613 = vmatprep.subr.bf16.mxu0 %v3376
    %3614 = vmatpush1.bf16.msra.mxu0 %v3375
    %3615 = vmatprep.subr.bf16.mxu0 %v3380
    %3616 = vmatpush1.bf16.msra.mxu0 %v3379
    %3617 = vmatprep.subr.bf16.mxu0 %v3384
    %3618 = vmatpush1.bf16.msra.mxu0 %v3383
    %3619 = vmatprep.subr.bf16.mxu0 %v3388
    %3620 = vmatpush1.bf16.msra.mxu0 %v3387
    %3621 = vmatprep.subr.bf16.mxu0 %v3392
    %3622 = vmatpush1.bf16.msra.mxu0 %v3391
    %3623 = vmatprep.subr.bf16.mxu0 %v3396
    %3624 = vmatpush1.bf16.msra.mxu0 %v3395
    %3625 = vmatprep.subr.bf16.mxu0 %v3400
    %3626 = vmatpush1.bf16.msra.mxu0 %v3399
    %3627 = vmatprep.mubr.bf16.mxu0 %v2913
    %3628 = vmatmul.mubr.bf16.gmra.mrb[0].mxu0 %v2912
    %v3629 = vpop.f32.mrb[0].mxu0
    %v3630 = vadd.f32 %v2942, %v3629
    %v3631 = vpop.f32.mrb[0].mxu0
    %v3632 = vadd.f32 %v2946, %v3631
    %v3633 = vpop.f32.mrb[0].mxu0
    %v3634 = vpop.f32.mrb[0].mxu0
    %3635 = vdwg.mxu0
    %3636 = vmatprep.subr.bf16.mxu0 %v3404
    %3637 = vmatpush1.bf16.msra.mxu0 %v3403
    %3638 = vmatprep.subr.bf16.mxu0 %v3408
    %3639 = vmatpush1.bf16.msra.mxu0 %v3407
    %3640 = vmatprep.subr.bf16.mxu0 %v3412
    %3641 = vmatpush1.bf16.msra.mxu0 %v3411
    %3642 = vmatprep.subr.bf16.mxu0 %v3416
    %3643 = vmatpush1.bf16.msra.mxu0 %v3415
    %3644 = vmatprep.subr.bf16.mxu0 %v3420
    %3645 = vmatpush1.bf16.msra.mxu0 %v3419
    %3646 = vmatprep.subr.bf16.mxu0 %v3424
    %3647 = vmatpush1.bf16.msra.mxu0 %v3423
    %3648 = vmatprep.subr.bf16.mxu0 %v3428
    %3649 = vmatpush1.bf16.msra.mxu0 %v3427
    %3650 = vmatprep.subr.bf16.mxu0 %v3432
    %3651 = vmatpush1.bf16.msra.mxu0 %v3431
    %3652 = vmatprep.subr.bf16.mxu0 %v3436
    %3653 = vmatpush1.bf16.msra.mxu0 %v3435
    %3654 = vmatprep.subr.bf16.mxu0 %v3440
    %3655 = vmatpush1.bf16.msra.mxu0 %v3439
    %3656 = vmatprep.subr.bf16.mxu0 %v3444
    %3657 = vmatpush1.bf16.msra.mxu0 %v3443
    %3658 = vmatprep.subr.bf16.mxu0 %v3448
    %3659 = vmatpush1.bf16.msra.mxu0 %v3447
    %3660 = vmatprep.subr.bf16.mxu0 %v3452
    %3661 = vmatpush1.bf16.msra.mxu0 %v3451
    %3662 = vmatprep.subr.bf16.mxu0 %v3456
    %3663 = vmatpush1.bf16.msra.mxu0 %v3455
    %3664 = vmatprep.subr.bf16.mxu0 %v3460
    %3665 = vmatpush1.bf16.msra.mxu0 %v3459
    %3666 = vmatprep.subr.bf16.mxu0 %v3464
    %3667 = vmatpush1.bf16.msra.mxu0 %v3463
    %3668 = vmatprep.mubr.bf16.mxu0 %v2915
    %3669 = vmatmul.mubr.bf16.gmra.mrb[0].mxu0 %v2914
    %v3670 = vpop.f32.mrb[0].mxu0
    %v3671 = vadd.f32 %v3630, %v3670
    %v3672 = vpop.f32.mrb[0].mxu0
    %v3673 = vadd.f32 %v3632, %v3672
    %v3674 = vpop.f32.mrb[0].mxu0
    %v3675 = vpop.f32.mrb[0].mxu0
    %3676 = vdwg.mxu0
    %3677 = vmatprep.subr.bf16.mxu0 %v3342
    %3678 = vmatpush1.bf16.msra.mxu0 %v3341
    %3679 = vmatprep.subr.bf16.mxu0 %v3346
    %3680 = vmatpush1.bf16.msra.mxu0 %v3345
    %3681 = vmatprep.subr.bf16.mxu0 %v3350
    %3682 = vmatpush1.bf16.msra.mxu0 %v3349
    %3683 = vmatprep.subr.bf16.mxu0 %v3354
    %3684 = vmatpush1.bf16.msra.mxu0 %v3353
    %3685 = vmatprep.subr.bf16.mxu0 %v3358
    %3686 = vmatpush1.bf16.msra.mxu0 %v3357
    %3687 = vmatprep.subr.bf16.mxu0 %v3362
    %3688 = vmatpush1.bf16.msra.mxu0 %v3361
    %3689 = vmatprep.subr.bf16.mxu0 %v3366
    %3690 = vmatpush1.bf16.msra.mxu0 %v3365
    %3691 = vmatprep.subr.bf16.mxu0 %v3370
    %3692 = vmatpush1.bf16.msra.mxu0 %v3369
    %3693 = vmatprep.subr.bf16.mxu0 %v3374
    %3694 = vmatpush1.bf16.msra.mxu0 %v3373
    %3695 = vmatprep.subr.bf16.mxu0 %v3378
    %3696 = vmatpush1.bf16.msra.mxu0 %v3377
    %3697 = vmatprep.subr.bf16.mxu0 %v3382
    %3698 = vmatpush1.bf16.msra.mxu0 %v3381
    %3699 = vmatprep.subr.bf16.mxu0 %v3386
    %3700 = vmatpush1.bf16.msra.mxu0 %v3385
    %3701 = vmatprep.subr.bf16.mxu0 %v3390
    %3702 = vmatpush1.bf16.msra.mxu0 %v3389
    %3703 = vmatprep.subr.bf16.mxu0 %v3394
    %3704 = vmatpush1.bf16.msra.mxu0 %v3393
    %3705 = vmatprep.subr.bf16.mxu0 %v3398
    %3706 = vmatpush1.bf16.msra.mxu0 %v3397
    %3707 = vmatprep.subr.bf16.mxu0 %v3402
    %3708 = vmatpush1.bf16.msra.mxu0 %v3401
    %3709 = vmatprep.mubr.bf16.mxu0 %v2913
    %3710 = vmatmul.mubr.bf16.gmra.mrb[0].mxu0 %v2912
    %v3711 = vpop.f32.mrb[0].mxu0
    %v3712 = vadd.f32 %v2950, %v3711
    %v3713 = vpop.f32.mrb[0].mxu0
    %v3714 = vadd.f32 %v2954, %v3713
    %v3715 = vpop.f32.mrb[0].mxu0
    %v3716 = vpop.f32.mrb[0].mxu0
    %3717 = vdwg.mxu0
    %3718 = vmatprep.subr.bf16.mxu0 %v3406
    %3719 = vmatpush1.bf16.msra.mxu0 %v3405
    %3720 = vmatprep.subr.bf16.mxu0 %v3410
    %3721 = vmatpush1.bf16.msra.mxu0 %v3409
    %3722 = vmatprep.subr.bf16.mxu0 %v3414
    %3723 = vmatpush1.bf16.msra.mxu0 %v3413
    %3724 = vmatprep.subr.bf16.mxu0 %v3418
    %3725 = vmatpush1.bf16.msra.mxu0 %v3417
    %3726 = vmatprep.subr.bf16.mxu0 %v3422
    %3727 = vmatpush1.bf16.msra.mxu0 %v3421
    %3728 = vmatprep.subr.bf16.mxu0 %v3426
    %3729 = vmatpush1.bf16.msra.mxu0 %v3425
    %3730 = vmatprep.subr.bf16.mxu0 %v3430
    %3731 = vmatpush1.bf16.msra.mxu0 %v3429
    %3732 = vmatprep.subr.bf16.mxu0 %v3434
    %3733 = vmatpush1.bf16.msra.mxu0 %v3433
    %3734 = vmatprep.subr.bf16.mxu0 %v3438
    %3735 = vmatpush1.bf16.msra.mxu0 %v3437
    %3736 = vmatprep.subr.bf16.mxu0 %v3442
    %3737 = vmatpush1.bf16.msra.mxu0 %v3441
    %3738 = vmatprep.subr.bf16.mxu0 %v3446
    %3739 = vmatpush1.bf16.msra.mxu0 %v3445
    %3740 = vmatprep.subr.bf16.mxu0 %v3450
    %3741 = vmatpush1.bf16.msra.mxu0 %v3449
    %3742 = vmatprep.subr.bf16.mxu0 %v3454
    %3743 = vmatpush1.bf16.msra.mxu0 %v3453
    %3744 = vmatprep.subr.bf16.mxu0 %v3458
    %3745 = vmatpush1.bf16.msra.mxu0 %v3457
    %3746 = vmatprep.subr.bf16.mxu0 %v3462
    %3747 = vmatpush1.bf16.msra.mxu0 %v3461
    %3748 = vmatprep.subr.bf16.mxu0 %v3466
    %3749 = vmatpush1.bf16.msra.mxu0 %v3465
    %3750 = vmatprep.mubr.bf16.mxu0 %v2915
    %3751 = vmatmul.mubr.bf16.gmra.mrb[0].mxu0 %v2914
    %v3752 = vpop.f32.mrb[0].mxu0
    %v3753 = vadd.f32 %v3712, %v3752
    %v3754 = vpop.f32.mrb[0].mxu0
    %v3755 = vadd.f32 %v3714, %v3754
    %v3756 = vpop.f32.mrb[0].mxu0
    %v3757 = vpop.f32.mrb[0].mxu0
    %3758 = vdwg.mxu0
    %v3759 = vmax.f32 %v3671, 0.0
    %v3760 = vmax.f32 %v3673, 0.0
    %v3761 = vmax.f32 %v3753, 0.0
    %v3762 = vmax.f32 %v3755, 0.0
    %3763 = vst [vmem:[#allocation2] sm:$0xff] %v3759
    %3764 = vst [vmem:[#allocation2 + $0x8] sm:$0xff] %v3760
    %3765 = vst [vmem:[#allocation2 + $0x10] sm:$0xff] %v3761
    %3766 = vst [vmem:[#allocation2 + $0x18] sm:$0xff] %v3762
    %v3767 = vld [vmem:[#allocation2] sm:$0xff]
    %v3768 = vld [vmem:[#allocation2 + $0x8] sm:$0xff]
    %v3769 = vld [vmem:[#allocation2 + $0x10] sm:$0xff]
    %v3770 = vld [vmem:[#allocation2 + $0x18] sm:$0xff]
    %v3771 = vld [vmem:[#allocation18] sm:$0xff]
    %v3772 = vld [vmem:[#allocation18 + $0x8] sm:$0xff]
    %v3773 = vld [vmem:[#allocation18 + $0x10] sm:$0xff]
    %v3774 = vld [vmem:[#allocation18 + $0x18] sm:$0xff]
    %v3775 = vld [vmem:[#allocation18 + $0x20] sm:$0xff]
    %v3776 = vld [vmem:[#allocation18 + $0x28] sm:$0xff]
    %v3777 = vld [vmem:[#allocation18 + $0x30] sm:$0xff]
    %v3778 = vld [vmem:[#allocation18 + $0x38] sm:$0xff]
    %v3779 = vld [vmem:[#allocation18 + $0x40] sm:$0xff]
    %v3780 = vld [vmem:[#allocation18 + $0x48] sm:$0xff]
    %v3781 = vld [vmem:[#allocation18 + $0x50] sm:$0xff]
    %v3782 = vld [vmem:[#allocation18 + $0x58] sm:$0xff]
    %v3783 = vld [vmem:[#allocation18 + $0x60] sm:$0xff]
    %v3784 = vld [vmem:[#allocation18 + $0x68] sm:$0xff]
    %v3785 = vld [vmem:[#allocation18 + $0x70] sm:$0xff]
    %v3786 = vld [vmem:[#allocation18 + $0x78] sm:$0xff]
    %v3787 = vld [vmem:[#allocation18 + $0x80] sm:$0xff]
    %v3788 = vld [vmem:[#allocation18 + $0x88] sm:$0xff]
    %v3789 = vld [vmem:[#allocation18 + $0x90] sm:$0xff]
    %v3790 = vld [vmem:[#allocation18 + $0x98] sm:$0xff]
    %v3791 = vld [vmem:[#allocation18 + $0xa0] sm:$0xff]
    %v3792 = vld [vmem:[#allocation18 + $0xa8] sm:$0xff]
    %v3793 = vld [vmem:[#allocation18 + $0xb0] sm:$0xff]
    %v3794 = vld [vmem:[#allocation18 + $0xb8] sm:$0xff]
    %v3795 = vld [vmem:[#allocation18 + $0xc0] sm:$0xff]
    %v3796 = vld [vmem:[#allocation18 + $0xc8] sm:$0xff]
    %v3797 = vld [vmem:[#allocation18 + $0xd0] sm:$0xff]
    %v3798 = vld [vmem:[#allocation18 + $0xd8] sm:$0xff]
    %v3799 = vld [vmem:[#allocation18 + $0xe0] sm:$0xff]
    %v3800 = vld [vmem:[#allocation18 + $0xe8] sm:$0xff]
    %v3801 = vld [vmem:[#allocation18 + $0xf0] sm:$0xff]
    %v3802 = vld [vmem:[#allocation18 + $0xf8] sm:$0xff]
    %v3803 = vld [vmem:[#allocation18 + $0x100] sm:$0xff]
    %v3804 = vld [vmem:[#allocation18 + $0x108] sm:$0xff]
    %v3805 = vld [vmem:[#allocation18 + $0x110] sm:$0xff]
    %v3806 = vld [vmem:[#allocation18 + $0x118] sm:$0xff]
    %v3807 = vld [vmem:[#allocation18 + $0x120] sm:$0xff]
    %v3808 = vld [vmem:[#allocation18 + $0x128] sm:$0xff]
    %v3809 = vld [vmem:[#allocation18 + $0x130] sm:$0xff]
    %v3810 = vld [vmem:[#allocation18 + $0x138] sm:$0xff]
    %v3811 = vld [vmem:[#allocation18 + $0x140] sm:$0xff]
    %v3812 = vld [vmem:[#allocation18 + $0x148] sm:$0xff]
    %v3813 = vld [vmem:[#allocation18 + $0x150] sm:$0xff]
    %v3814 = vld [vmem:[#allocation18 + $0x158] sm:$0xff]
    %v3815 = vld [vmem:[#allocation18 + $0x160] sm:$0xff]
    %v3816 = vld [vmem:[#allocation18 + $0x168] sm:$0xff]
    %v3817 = vld [vmem:[#allocation18 + $0x170] sm:$0xff]
    %v3818 = vld [vmem:[#allocation18 + $0x178] sm:$0xff]
    %v3819 = vld [vmem:[#allocation18 + $0x180] sm:$0xff]
    %v3820 = vld [vmem:[#allocation18 + $0x188] sm:$0xff]
    %v3821 = vld [vmem:[#allocation18 + $0x190] sm:$0xff]
    %v3822 = vld [vmem:[#allocation18 + $0x198] sm:$0xff]
    %v3823 = vld [vmem:[#allocation18 + $0x1a0] sm:$0xff]
    %v3824 = vld [vmem:[#allocation18 + $0x1a8] sm:$0xff]
    %v3825 = vld [vmem:[#allocation18 + $0x1b0] sm:$0xff]
    %v3826 = vld [vmem:[#allocation18 + $0x1b8] sm:$0xff]
    %v3827 = vld [vmem:[#allocation18 + $0x1c0] sm:$0xff]
    %v3828 = vld [vmem:[#allocation18 + $0x1c8] sm:$0xff]
    %v3829 = vld [vmem:[#allocation18 + $0x1d0] sm:$0xff]
    %v3830 = vld [vmem:[#allocation18 + $0x1d8] sm:$0xff]
    %v3831 = vld [vmem:[#allocation18 + $0x1e0] sm:$0xff]
    %v3832 = vld [vmem:[#allocation18 + $0x1e8] sm:$0xff]
    %v3833 = vld [vmem:[#allocation18 + $0x1f0] sm:$0xff]
    %v3834 = vld [vmem:[#allocation18 + $0x1f8] sm:$0xff]
    %v3835 = vpack.c.bf16 %v3767, %v3767
    %v3836 = vpack.c.bf16 %v3768, %v3768
    %v3837 = vpack.c.bf16 %v3769, %v3769
    %v3838 = vpack.c.bf16 %v3770, %v3770
    %v3839 = vld [vmem:[%s15 + $0x15] sm:$0x3]
    %v3840 = vunpack.c.l.bf16 %v3839
    %v3842 = vlaneseq
    %v3843 = vshrl.u32 %v3842, 7
    %v3844 = vsub.s32 0, %v3843
    %v3845 = vrot.slane %v3840, %v3844
    %v3846 = vlaneseq
    %v3847 = vshrl.u32 %v3846, 7
    %v3848 = vsub.s32 2, %v3847
    %v3849 = vrot.slane %v3840, %v3848
    %v3852 = vlaneseq
    %v3853 = vshrl.u32 %v3852, 7
    %v3854 = vsub.s32 0, %v3853
    %v3855 = vrot.slane %v3845, %v3854
    %v3856 = vlaneseq
    %v3857 = vshrl.u32 %v3856, 7
    %v3858 = vsub.s32 0, %v3857
    %v3859 = vrot.slane %v3849, %v3858
    %v3924 = vunpack.c.l.b16 %v3771
    %v3925 = vunpack.c.h.b16 %v3771
    %v3926 = vunpack.c.l.b16 %v3772
    %v3927 = vunpack.c.h.b16 %v3772
    %v3928 = vunpack.c.l.b16 %v3773
    %v3929 = vunpack.c.h.b16 %v3773
    %v3930 = vunpack.c.l.b16 %v3774
    %v3931 = vunpack.c.h.b16 %v3774
    %v3932 = vunpack.c.l.b16 %v3775
    %v3933 = vunpack.c.h.b16 %v3775
    %v3934 = vunpack.c.l.b16 %v3776
    %v3935 = vunpack.c.h.b16 %v3776
    %v3936 = vunpack.c.l.b16 %v3777
    %v3937 = vunpack.c.h.b16 %v3777
    %v3938 = vunpack.c.l.b16 %v3778
    %v3939 = vunpack.c.h.b16 %v3778
    %v3940 = vunpack.c.l.b16 %v3779
    %v3941 = vunpack.c.h.b16 %v3779
    %v3942 = vunpack.c.l.b16 %v3780
    %v3943 = vunpack.c.h.b16 %v3780
    %v3944 = vunpack.c.l.b16 %v3781
    %v3945 = vunpack.c.h.b16 %v3781
    %v3946 = vunpack.c.l.b16 %v3782
    %v3947 = vunpack.c.h.b16 %v3782
    %v3948 = vunpack.c.l.b16 %v3783
    %v3949 = vunpack.c.h.b16 %v3783
    %v3950 = vunpack.c.l.b16 %v3784
    %v3951 = vunpack.c.h.b16 %v3784
    %v3952 = vunpack.c.l.b16 %v3785
    %v3953 = vunpack.c.h.b16 %v3785
    %v3954 = vunpack.c.l.b16 %v3786
    %v3955 = vunpack.c.h.b16 %v3786
    %v3956 = vunpack.c.l.b16 %v3787
    %v3957 = vunpack.c.h.b16 %v3787
    %v3958 = vunpack.c.l.b16 %v3788
    %v3959 = vunpack.c.h.b16 %v3788
    %v3960 = vunpack.c.l.b16 %v3789
    %v3961 = vunpack.c.h.b16 %v3789
    %v3962 = vunpack.c.l.b16 %v3790
    %v3963 = vunpack.c.h.b16 %v3790
    %v3964 = vunpack.c.l.b16 %v3791
    %v3965 = vunpack.c.h.b16 %v3791
    %v3966 = vunpack.c.l.b16 %v3792
    %v3967 = vunpack.c.h.b16 %v3792
    %v3968 = vunpack.c.l.b16 %v3793
    %v3969 = vunpack.c.h.b16 %v3793
    %v3970 = vunpack.c.l.b16 %v3794
    %v3971 = vunpack.c.h.b16 %v3794
    %v3972 = vunpack.c.l.b16 %v3795
    %v3973 = vunpack.c.h.b16 %v3795
    %v3974 = vunpack.c.l.b16 %v3796
    %v3975 = vunpack.c.h.b16 %v3796
    %v3976 = vunpack.c.l.b16 %v3797
    %v3977 = vunpack.c.h.b16 %v3797
    %v3978 = vunpack.c.l.b16 %v3798
    %v3979 = vunpack.c.h.b16 %v3798
    %v3980 = vunpack.c.l.b16 %v3799
    %v3981 = vunpack.c.h.b16 %v3799
    %v3982 = vunpack.c.l.b16 %v3800
    %v3983 = vunpack.c.h.b16 %v3800
    %v3984 = vunpack.c.l.b16 %v3801
    %v3985 = vunpack.c.h.b16 %v3801
    %v3986 = vunpack.c.l.b16 %v3802
    %v3987 = vunpack.c.h.b16 %v3802
    %v3988 = vunpack.c.l.b16 %v3803
    %v3989 = vunpack.c.h.b16 %v3803
    %v3990 = vunpack.c.l.b16 %v3804
    %v3991 = vunpack.c.h.b16 %v3804
    %v3992 = vunpack.c.l.b16 %v3805
    %v3993 = vunpack.c.h.b16 %v3805
    %v3994 = vunpack.c.l.b16 %v3806
    %v3995 = vunpack.c.h.b16 %v3806
    %v3996 = vunpack.c.l.b16 %v3807
    %v3997 = vunpack.c.h.b16 %v3807
    %v3998 = vunpack.c.l.b16 %v3808
    %v3999 = vunpack.c.h.b16 %v3808
    %v4000 = vunpack.c.l.b16 %v3809
    %v4001 = vunpack.c.h.b16 %v3809
    %v4002 = vunpack.c.l.b16 %v3810
    %v4003 = vunpack.c.h.b16 %v3810
    %v4004 = vunpack.c.l.b16 %v3811
    %v4005 = vunpack.c.h.b16 %v3811
    %v4006 = vunpack.c.l.b16 %v3812
    %v4007 = vunpack.c.h.b16 %v3812
    %v4008 = vunpack.c.l.b16 %v3813
    %v4009 = vunpack.c.h.b16 %v3813
    %v4010 = vunpack.c.l.b16 %v3814
    %v4011 = vunpack.c.h.b16 %v3814
    %v4012 = vunpack.c.l.b16 %v3815
    %v4013 = vunpack.c.h.b16 %v3815
    %v4014 = vunpack.c.l.b16 %v3816
    %v4015 = vunpack.c.h.b16 %v3816
    %v4016 = vunpack.c.l.b16 %v3817
    %v4017 = vunpack.c.h.b16 %v3817
    %v4018 = vunpack.c.l.b16 %v3818
    %v4019 = vunpack.c.h.b16 %v3818
    %v4020 = vunpack.c.l.b16 %v3819
    %v4021 = vunpack.c.h.b16 %v3819
    %v4022 = vunpack.c.l.b16 %v3820
    %v4023 = vunpack.c.h.b16 %v3820
    %v4024 = vunpack.c.l.b16 %v3821
    %v4025 = vunpack.c.h.b16 %v3821
    %v4026 = vunpack.c.l.b16 %v3822
    %v4027 = vunpack.c.h.b16 %v3822
    %v4028 = vunpack.c.l.b16 %v3823
    %v4029 = vunpack.c.h.b16 %v3823
    %v4030 = vunpack.c.l.b16 %v3824
    %v4031 = vunpack.c.h.b16 %v3824
    %v4032 = vunpack.c.l.b16 %v3825
    %v4033 = vunpack.c.h.b16 %v3825
    %v4034 = vunpack.c.l.b16 %v3826
    %v4035 = vunpack.c.h.b16 %v3826
    %v4036 = vunpack.c.l.b16 %v3827
    %v4037 = vunpack.c.h.b16 %v3827
    %v4038 = vunpack.c.l.b16 %v3828
    %v4039 = vunpack.c.h.b16 %v3828
    %v4040 = vunpack.c.l.b16 %v3829
    %v4041 = vunpack.c.h.b16 %v3829
    %v4042 = vunpack.c.l.b16 %v3830
    %v4043 = vunpack.c.h.b16 %v3830
    %v4044 = vunpack.c.l.b16 %v3831
    %v4045 = vunpack.c.h.b16 %v3831
    %v4046 = vunpack.c.l.b16 %v3832
    %v4047 = vunpack.c.h.b16 %v3832
    %v4048 = vunpack.c.l.b16 %v3833
    %v4049 = vunpack.c.h.b16 %v3833
    %v4050 = vunpack.c.l.b16 %v3834
    %v4051 = vunpack.c.h.b16 %v3834
    %v4052 = vpack.c.b16 %v3926, %v3924
    %v4053 = vpack.c.b16 %v3927, %v3925
    %v4054 = vpack.c.b16 %v3930, %v3928
    %v4055 = vpack.c.b16 %v3931, %v3929
    %v4056 = vpack.c.b16 %v3934, %v3932
    %v4057 = vpack.c.b16 %v3935, %v3933
    %v4058 = vpack.c.b16 %v3938, %v3936
    %v4059 = vpack.c.b16 %v3939, %v3937
    %v4060 = vpack.c.b16 %v3942, %v3940
    %v4061 = vpack.c.b16 %v3943, %v3941
    %v4062 = vpack.c.b16 %v3946, %v3944
    %v4063 = vpack.c.b16 %v3947, %v3945
    %v4064 = vpack.c.b16 %v3950, %v3948
    %v4065 = vpack.c.b16 %v3951, %v3949
    %v4066 = vpack.c.b16 %v3954, %v3952
    %v4067 = vpack.c.b16 %v3955, %v3953
    %v4068 = vpack.c.b16 %v3958, %v3956
    %v4069 = vpack.c.b16 %v3959, %v3957
    %v4070 = vpack.c.b16 %v3962, %v3960
    %v4071 = vpack.c.b16 %v3963, %v3961
    %v4072 = vpack.c.b16 %v3966, %v3964
    %v4073 = vpack.c.b16 %v3967, %v3965
    %v4074 = vpack.c.b16 %v3970, %v3968
    %v4075 = vpack.c.b16 %v3971, %v3969
    %v4076 = vpack.c.b16 %v3974, %v3972
    %v4077 = vpack.c.b16 %v3975, %v3973
    %v4078 = vpack.c.b16 %v3978, %v3976
    %v4079 = vpack.c.b16 %v3979, %v3977
    %v4080 = vpack.c.b16 %v3982, %v3980
    %v4081 = vpack.c.b16 %v3983, %v3981
    %v4082 = vpack.c.b16 %v3986, %v3984
    %v4083 = vpack.c.b16 %v3987, %v3985
    %v4084 = vpack.c.b16 %v3990, %v3988
    %v4085 = vpack.c.b16 %v3991, %v3989
    %v4086 = vpack.c.b16 %v3994, %v3992
    %v4087 = vpack.c.b16 %v3995, %v3993
    %v4088 = vpack.c.b16 %v3998, %v3996
    %v4089 = vpack.c.b16 %v3999, %v3997
    %v4090 = vpack.c.b16 %v4002, %v4000
    %v4091 = vpack.c.b16 %v4003, %v4001
    %v4092 = vpack.c.b16 %v4006, %v4004
    %v4093 = vpack.c.b16 %v4007, %v4005
    %v4094 = vpack.c.b16 %v4010, %v4008
    %v4095 = vpack.c.b16 %v4011, %v4009
    %v4096 = vpack.c.b16 %v4014, %v4012
    %v4097 = vpack.c.b16 %v4015, %v4013
    %v4098 = vpack.c.b16 %v4018, %v4016
    %v4099 = vpack.c.b16 %v4019, %v4017
    %v4100 = vpack.c.b16 %v4022, %v4020
    %v4101 = vpack.c.b16 %v4023, %v4021
    %v4102 = vpack.c.b16 %v4026, %v4024
    %v4103 = vpack.c.b16 %v4027, %v4025
    %v4104 = vpack.c.b16 %v4030, %v4028
    %v4105 = vpack.c.b16 %v4031, %v4029
    %v4106 = vpack.c.b16 %v4034, %v4032
    %v4107 = vpack.c.b16 %v4035, %v4033
    %v4108 = vpack.c.b16 %v4038, %v4036
    %v4109 = vpack.c.b16 %v4039, %v4037
    %v4110 = vpack.c.b16 %v4042, %v4040
    %v4111 = vpack.c.b16 %v4043, %v4041
    %v4112 = vpack.c.b16 %v4046, %v4044
    %v4113 = vpack.c.b16 %v4047, %v4045
    %v4114 = vpack.c.b16 %v4050, %v4048
    %v4115 = vpack.c.b16 %v4051, %v4049
    %4180 = vmatprep.subr.bf16.mxu0 %v4053
    %4181 = vmatpush1.bf16.msra.mxu0 %v4052
    %4182 = vmatprep.subr.bf16.mxu0 %v4055
    %4183 = vmatpush1.bf16.msra.mxu0 %v4054
    %4184 = vmatprep.subr.bf16.mxu0 %v4057
    %4185 = vmatpush1.bf16.msra.mxu0 %v4056
    %4186 = vmatprep.subr.bf16.mxu0 %v4059
    %4187 = vmatpush1.bf16.msra.mxu0 %v4058
    %4188 = vmatprep.subr.bf16.mxu0 %v4061
    %4189 = vmatpush1.bf16.msra.mxu0 %v4060
    %4190 = vmatprep.subr.bf16.mxu0 %v4063
    %4191 = vmatpush1.bf16.msra.mxu0 %v4062
    %4192 = vmatprep.subr.bf16.mxu0 %v4065
    %4193 = vmatpush1.bf16.msra.mxu0 %v4064
    %4194 = vmatprep.subr.bf16.mxu0 %v4067
    %4195 = vmatpush1.bf16.msra.mxu0 %v4066
    %4196 = vmatprep.subr.bf16.mxu0 %v4069
    %4197 = vmatpush1.bf16.msra.mxu0 %v4068
    %4198 = vmatprep.subr.bf16.mxu0 %v4071
    %4199 = vmatpush1.bf16.msra.mxu0 %v4070
    %4200 = vmatprep.subr.bf16.mxu0 %v4073
    %4201 = vmatpush1.bf16.msra.mxu0 %v4072
    %4202 = vmatprep.subr.bf16.mxu0 %v4075
    %4203 = vmatpush1.bf16.msra.mxu0 %v4074
    %4204 = vmatprep.subr.bf16.mxu0 %v4077
    %4205 = vmatpush1.bf16.msra.mxu0 %v4076
    %4206 = vmatprep.subr.bf16.mxu0 %v4079
    %4207 = vmatpush1.bf16.msra.mxu0 %v4078
    %4208 = vmatprep.subr.bf16.mxu0 %v4081
    %4209 = vmatpush1.bf16.msra.mxu0 %v4080
    %4210 = vmatprep.subr.bf16.mxu0 %v4083
    %4211 = vmatpush1.bf16.msra.mxu0 %v4082
    %4212 = vmatprep.mubr.bf16.mxu0 %v3836
    %4213 = vmatmul.mubr.bf16.gmra.mrb[0].mxu0 %v3835
    %v4214 = vpop.f32.mrb[0].mxu0
    %v4215 = vadd.f32 %v3855, %v4214
    %v4216 = vpop.f32.mrb[0].mxu0
    %v4217 = vadd.f32 %v3859, %v4216
    %v4218 = vpop.f32.mrb[0].mxu0
    %v4219 = vpop.f32.mrb[0].mxu0
    %4220 = vdwg.mxu0
    %4221 = vmatprep.subr.bf16.mxu0 %v4085
    %4222 = vmatpush1.bf16.msra.mxu0 %v4084
    %4223 = vmatprep.subr.bf16.mxu0 %v4087
    %4224 = vmatpush1.bf16.msra.mxu0 %v4086
    %4225 = vmatprep.subr.bf16.mxu0 %v4089
    %4226 = vmatpush1.bf16.msra.mxu0 %v4088
    %4227 = vmatprep.subr.bf16.mxu0 %v4091
    %4228 = vmatpush1.bf16.msra.mxu0 %v4090
    %4229 = vmatprep.subr.bf16.mxu0 %v4093
    %4230 = vmatpush1.bf16.msra.mxu0 %v4092
    %4231 = vmatprep.subr.bf16.mxu0 %v4095
    %4232 = vmatpush1.bf16.msra.mxu0 %v4094
    %4233 = vmatprep.subr.bf16.mxu0 %v4097
    %4234 = vmatpush1.bf16.msra.mxu0 %v4096
    %4235 = vmatprep.subr.bf16.mxu0 %v4099
    %4236 = vmatpush1.bf16.msra.mxu0 %v4098
    %4237 = vmatprep.subr.bf16.mxu0 %v4101
    %4238 = vmatpush1.bf16.msra.mxu0 %v4100
    %4239 = vmatprep.subr.bf16.mxu0 %v4103
    %4240 = vmatpush1.bf16.msra.mxu0 %v4102
    %4241 = vmatprep.subr.bf16.mxu0 %v4105
    %4242 = vmatpush1.bf16.msra.mxu0 %v4104
    %4243 = vmatprep.subr.bf16.mxu0 %v4107
    %4244 = vmatpush1.bf16.msra.mxu0 %v4106
    %4245 = vmatprep.subr.bf16.mxu0 %v4109
    %4246 = vmatpush1.bf16.msra.mxu0 %v4108
    %4247 = vmatprep.subr.bf16.mxu0 %v4111
    %4248 = vmatpush1.bf16.msra.mxu0 %v4110
    %4249 = vmatprep.subr.bf16.mxu0 %v4113
    %4250 = vmatpush1.bf16.msra.mxu0 %v4112
    %4251 = vmatprep.subr.bf16.mxu0 %v4115
    %4252 = vmatpush1.bf16.msra.mxu0 %v4114
    %4253 = vmatprep.mubr.bf16.mxu0 %v3838
    %4254 = vmatmul.mubr.bf16.gmra.mrb[0].mxu0 %v3837
    %v4255 = vpop.f32.mrb[0].mxu0
    %v4256 = vadd.f32 %v4215, %v4255
    %v4257 = vpop.f32.mrb[0].mxu0
    %v4258 = vadd.f32 %v4217, %v4257
    %v4259 = vpop.f32.mrb[0].mxu0
    %v4260 = vpop.f32.mrb[0].mxu0
    %4261 = vdwg.mxu0
    %v4262 = vmax.f32 %v4256, 0.0
    %v4263 = vmax.f32 %v4258, 0.0
    %4264 = vst [vmem:[#allocation2] sm:$0xff] %v4262
    %4265 = vst [vmem:[#allocation2 + $0x8] sm:$0xff] %v4263
    %v4266 = vld [vmem:[#allocation2] sm:$0xff]
    %v4267 = vld [vmem:[#allocation2 + $0x8] sm:$0xff]
    %v4268 = vld [vmem:[#allocation20] sm:$0xff]
    %v4269 = vld [vmem:[#allocation20 + $0x8] sm:$0xff]
    %v4270 = vld [vmem:[#allocation20 + $0x10] sm:$0xff]
    %v4271 = vld [vmem:[#allocation20 + $0x18] sm:$0xff]
    %v4272 = vld [vmem:[#allocation20 + $0x20] sm:$0xff]
    %v4273 = vld [vmem:[#allocation20 + $0x28] sm:$0xff]
    %v4274 = vld [vmem:[#allocation20 + $0x30] sm:$0xff]
    %v4275 = vld [vmem:[#allocation20 + $0x38] sm:$0xff]
    %v4276 = vld [vmem:[#allocation20 + $0x40] sm:$0xff]
    %v4277 = vld [vmem:[#allocation20 + $0x48] sm:$0xff]
    %v4278 = vld [vmem:[#allocation20 + $0x50] sm:$0xff]
    %v4279 = vld [vmem:[#allocation20 + $0x58] sm:$0xff]
    %v4280 = vld [vmem:[#allocation20 + $0x60] sm:$0xff]
    %v4281 = vld [vmem:[#allocation20 + $0x68] sm:$0xff]
    %v4282 = vld [vmem:[#allocation20 + $0x70] sm:$0xff]
    %v4283 = vld [vmem:[#allocation20 + $0x78] sm:$0xff]
    %v4284 = vld [vmem:[#allocation20 + $0x80] sm:$0xff]
    %v4285 = vld [vmem:[#allocation20 + $0x88] sm:$0xff]
    %v4286 = vld [vmem:[#allocation20 + $0x90] sm:$0xff]
    %v4287 = vld [vmem:[#allocation20 + $0x98] sm:$0xff]
    %v4288 = vld [vmem:[#allocation20 + $0xa0] sm:$0xff]
    %v4289 = vld [vmem:[#allocation20 + $0xa8] sm:$0xff]
    %v4290 = vld [vmem:[#allocation20 + $0xb0] sm:$0xff]
    %v4291 = vld [vmem:[#allocation20 + $0xb8] sm:$0xff]
    %v4292 = vld [vmem:[#allocation20 + $0xc0] sm:$0xff]
    %v4293 = vld [vmem:[#allocation20 + $0xc8] sm:$0xff]
    %v4294 = vld [vmem:[#allocation20 + $0xd0] sm:$0xff]
    %v4295 = vld [vmem:[#allocation20 + $0xd8] sm:$0xff]
    %v4296 = vld [vmem:[#allocation20 + $0xe0] sm:$0xff]
    %v4297 = vld [vmem:[#allocation20 + $0xe8] sm:$0xff]
    %v4298 = vld [vmem:[#allocation20 + $0xf0] sm:$0xff]
    %v4299 = vld [vmem:[#allocation20 + $0xf8] sm:$0xff]
    %v4300 = vpack.c.bf16 %v4266, %v4266
    %v4301 = vpack.c.bf16 %v4267, %v4267
    %v4302 = vld [vmem:[%s15 + $0x17] sm:$0x3]
    %v4303 = vunpack.c.l.bf16 %v4302
    %v4305 = vlaneseq
    %v4306 = vshrl.u32 %v4305, 7
    %v4307 = vsub.s32 0, %v4306
    %v4308 = vrot.slane %v4303, %v4307
    %v4309 = vlaneseq
    %v4310 = vshrl.u32 %v4309, 7
    %v4311 = vsub.s32 2, %v4310
    %v4312 = vrot.slane %v4303, %v4311
    %v4315 = vlaneseq
    %v4316 = vshrl.u32 %v4315, 7
    %v4317 = vsub.s32 0, %v4316
    %v4318 = vrot.slane %v4308, %v4317
    %v4319 = vlaneseq
    %v4320 = vshrl.u32 %v4319, 7
    %v4321 = vsub.s32 0, %v4320
    %v4322 = vrot.slane %v4312, %v4321
    %v4355 = vunpack.c.l.b16 %v4268
    %v4356 = vunpack.c.h.b16 %v4268
    %v4357 = vunpack.c.l.b16 %v4269
    %v4358 = vunpack.c.h.b16 %v4269
    %v4359 = vunpack.c.l.b16 %v4270
    %v4360 = vunpack.c.h.b16 %v4270
    %v4361 = vunpack.c.l.b16 %v4271
    %v4362 = vunpack.c.h.b16 %v4271
    %v4363 = vunpack.c.l.b16 %v4272
    %v4364 = vunpack.c.h.b16 %v4272
    %v4365 = vunpack.c.l.b16 %v4273
    %v4366 = vunpack.c.h.b16 %v4273
    %v4367 = vunpack.c.l.b16 %v4274
    %v4368 = vunpack.c.h.b16 %v4274
    %v4369 = vunpack.c.l.b16 %v4275
    %v4370 = vunpack.c.h.b16 %v4275
    %v4371 = vunpack.c.l.b16 %v4276
    %v4372 = vunpack.c.h.b16 %v4276
    %v4373 = vunpack.c.l.b16 %v4277
    %v4374 = vunpack.c.h.b16 %v4277
    %v4375 = vunpack.c.l.b16 %v4278
    %v4376 = vunpack.c.h.b16 %v4278
    %v4377 = vunpack.c.l.b16 %v4279
    %v4378 = vunpack.c.h.b16 %v4279
    %v4379 = vunpack.c.l.b16 %v4280
    %v4380 = vunpack.c.h.b16 %v4280
    %v4381 = vunpack.c.l.b16 %v4281
    %v4382 = vunpack.c.h.b16 %v4281
    %v4383 = vunpack.c.l.b16 %v4282
    %v4384 = vunpack.c.h.b16 %v4282
    %v4385 = vunpack.c.l.b16 %v4283
    %v4386 = vunpack.c.h.b16 %v4283
    %v4387 = vunpack.c.l.b16 %v4284
    %v4388 = vunpack.c.h.b16 %v4284
    %v4389 = vunpack.c.l.b16 %v4285
    %v4390 = vunpack.c.h.b16 %v4285
    %v4391 = vunpack.c.l.b16 %v4286
    %v4392 = vunpack.c.h.b16 %v4286
    %v4393 = vunpack.c.l.b16 %v4287
    %v4394 = vunpack.c.h.b16 %v4287
    %v4395 = vunpack.c.l.b16 %v4288
    %v4396 = vunpack.c.h.b16 %v4288
    %v4397 = vunpack.c.l.b16 %v4289
    %v4398 = vunpack.c.h.b16 %v4289
    %v4399 = vunpack.c.l.b16 %v4290
    %v4400 = vunpack.c.h.b16 %v4290
    %v4401 = vunpack.c.l.b16 %v4291
    %v4402 = vunpack.c.h.b16 %v4291
    %v4403 = vunpack.c.l.b16 %v4292
    %v4404 = vunpack.c.h.b16 %v4292
    %v4405 = vunpack.c.l.b16 %v4293
    %v4406 = vunpack.c.h.b16 %v4293
    %v4407 = vunpack.c.l.b16 %v4294
    %v4408 = vunpack.c.h.b16 %v4294
    %v4409 = vunpack.c.l.b16 %v4295
    %v4410 = vunpack.c.h.b16 %v4295
    %v4411 = vunpack.c.l.b16 %v4296
    %v4412 = vunpack.c.h.b16 %v4296
    %v4413 = vunpack.c.l.b16 %v4297
    %v4414 = vunpack.c.h.b16 %v4297
    %v4415 = vunpack.c.l.b16 %v4298
    %v4416 = vunpack.c.h.b16 %v4298
    %v4417 = vunpack.c.l.b16 %v4299
    %v4418 = vunpack.c.h.b16 %v4299
    %v4419 = vpack.c.b16 %v4357, %v4355
    %v4420 = vpack.c.b16 %v4358, %v4356
    %v4421 = vpack.c.b16 %v4361, %v4359
    %v4422 = vpack.c.b16 %v4362, %v4360
    %v4423 = vpack.c.b16 %v4365, %v4363
    %v4424 = vpack.c.b16 %v4366, %v4364
    %v4425 = vpack.c.b16 %v4369, %v4367
    %v4426 = vpack.c.b16 %v4370, %v4368
    %v4427 = vpack.c.b16 %v4373, %v4371
    %v4428 = vpack.c.b16 %v4374, %v4372
    %v4429 = vpack.c.b16 %v4377, %v4375
    %v4430 = vpack.c.b16 %v4378, %v4376
    %v4431 = vpack.c.b16 %v4381, %v4379
    %v4432 = vpack.c.b16 %v4382, %v4380
    %v4433 = vpack.c.b16 %v4385, %v4383
    %v4434 = vpack.c.b16 %v4386, %v4384
    %v4435 = vpack.c.b16 %v4389, %v4387
    %v4436 = vpack.c.b16 %v4390, %v4388
    %v4437 = vpack.c.b16 %v4393, %v4391
    %v4438 = vpack.c.b16 %v4394, %v4392
    %v4439 = vpack.c.b16 %v4397, %v4395
    %v4440 = vpack.c.b16 %v4398, %v4396
    %v4441 = vpack.c.b16 %v4401, %v4399
    %v4442 = vpack.c.b16 %v4402, %v4400
    %v4443 = vpack.c.b16 %v4405, %v4403
    %v4444 = vpack.c.b16 %v4406, %v4404
    %v4445 = vpack.c.b16 %v4409, %v4407
    %v4446 = vpack.c.b16 %v4410, %v4408
    %v4447 = vpack.c.b16 %v4413, %v4411
    %v4448 = vpack.c.b16 %v4414, %v4412
    %v4449 = vpack.c.b16 %v4417, %v4415
    %v4450 = vpack.c.b16 %v4418, %v4416
    %4483 = vmatprep.subr.bf16.mxu0 %v4420
    %4484 = vmatpush1.bf16.msra.mxu0 %v4419
    %4485 = vmatprep.subr.bf16.mxu0 %v4422
    %4486 = vmatpush1.bf16.msra.mxu0 %v4421
    %4487 = vmatprep.subr.bf16.mxu0 %v4424
    %4488 = vmatpush1.bf16.msra.mxu0 %v4423
    %4489 = vmatprep.subr.bf16.mxu0 %v4426
    %4490 = vmatpush1.bf16.msra.mxu0 %v4425
    %4491 = vmatprep.subr.bf16.mxu0 %v4428
    %4492 = vmatpush1.bf16.msra.mxu0 %v4427
    %4493 = vmatprep.subr.bf16.mxu0 %v4430
    %4494 = vmatpush1.bf16.msra.mxu0 %v4429
    %4495 = vmatprep.subr.bf16.mxu0 %v4432
    %4496 = vmatpush1.bf16.msra.mxu0 %v4431
    %4497 = vmatprep.subr.bf16.mxu0 %v4434
    %4498 = vmatpush1.bf16.msra.mxu0 %v4433
    %4499 = vmatprep.subr.bf16.mxu0 %v4436
    %4500 = vmatpush1.bf16.msra.mxu0 %v4435
    %4501 = vmatprep.subr.bf16.mxu0 %v4438
    %4502 = vmatpush1.bf16.msra.mxu0 %v4437
    %4503 = vmatprep.subr.bf16.mxu0 %v4440
    %4504 = vmatpush1.bf16.msra.mxu0 %v4439
    %4505 = vmatprep.subr.bf16.mxu0 %v4442
    %4506 = vmatpush1.bf16.msra.mxu0 %v4441
    %4507 = vmatprep.subr.bf16.mxu0 %v4444
    %4508 = vmatpush1.bf16.msra.mxu0 %v4443
    %4509 = vmatprep.subr.bf16.mxu0 %v4446
    %4510 = vmatpush1.bf16.msra.mxu0 %v4445
    %4511 = vmatprep.subr.bf16.mxu0 %v4448
    %4512 = vmatpush1.bf16.msra.mxu0 %v4447
    %4513 = vmatprep.subr.bf16.mxu0 %v4450
    %4514 = vmatpush1.bf16.msra.mxu0 %v4449
    %4515 = vmatprep.mubr.bf16.mxu0 %v4301
    %4516 = vmatmul.mubr.bf16.gmra.mrb[0].mxu0 %v4300
    %v4517 = vpop.f32.mrb[0].mxu0
    %v4518 = vadd.f32 %v4318, %v4517
    %v4519 = vpop.f32.mrb[0].mxu0
    %v4520 = vadd.f32 %v4322, %v4519
    %v4521 = vpop.f32.mrb[0].mxu0
    %v4522 = vpop.f32.mrb[0].mxu0
    %4523 = vdwg.mxu0
    %v4524 = vmax.f32 %v4518, 0.0
    %v4525 = vmax.f32 %v4520, 0.0
    %4526 = vst [vmem:[#allocation2] sm:$0xff] %v4524
    %4527 = vst [vmem:[#allocation2 + $0x8] sm:$0xff] %v4525
    %v4528 = vld [vmem:[#allocation2] sm:$0xff]
    %v4529 = vld [vmem:[#allocation2 + $0x8] sm:$0xff]
    %v4530 = vld [vmem:[#allocation21] sm:$0xff]
    %v4531 = vld [vmem:[#allocation21 + $0x8] sm:$0xff]
    %v4532 = vld [vmem:[#allocation21 + $0x10] sm:$0xff]
    %v4533 = vld [vmem:[#allocation21 + $0x18] sm:$0xff]
    %v4534 = vld [vmem:[#allocation21 + $0x20] sm:$0xff]
    %v4535 = vld [vmem:[#allocation21 + $0x28] sm:$0xff]
    %v4536 = vld [vmem:[#allocation21 + $0x30] sm:$0xff]
    %v4537 = vld [vmem:[#allocation21 + $0x38] sm:$0xff]
    %v4538 = vld [vmem:[#allocation21 + $0x40] sm:$0xff]
    %v4539 = vld [vmem:[#allocation21 + $0x48] sm:$0xff]
    %v4540 = vld [vmem:[#allocation21 + $0x50] sm:$0xff]
    %v4541 = vld [vmem:[#allocation21 + $0x58] sm:$0xff]
    %v4542 = vld [vmem:[#allocation21 + $0x60] sm:$0xff]
    %v4543 = vld [vmem:[#allocation21 + $0x68] sm:$0xff]
    %v4544 = vld [vmem:[#allocation21 + $0x70] sm:$0xff]
    %v4545 = vld [vmem:[#allocation21 + $0x78] sm:$0xff]
    %v4546 = vld [vmem:[#allocation21 + $0x80] sm:$0xff]
    %v4547 = vld [vmem:[#allocation21 + $0x88] sm:$0xff]
    %v4548 = vld [vmem:[#allocation21 + $0x90] sm:$0xff]
    %v4549 = vld [vmem:[#allocation21 + $0x98] sm:$0xff]
    %v4550 = vld [vmem:[#allocation21 + $0xa0] sm:$0xff]
    %v4551 = vld [vmem:[#allocation21 + $0xa8] sm:$0xff]
    %v4552 = vld [vmem:[#allocation21 + $0xb0] sm:$0xff]
    %v4553 = vld [vmem:[#allocation21 + $0xb8] sm:$0xff]
    %v4554 = vld [vmem:[#allocation21 + $0xc0] sm:$0xff]
    %v4555 = vld [vmem:[#allocation21 + $0xc8] sm:$0xff]
    %v4556 = vld [vmem:[#allocation21 + $0xd0] sm:$0xff]
    %v4557 = vld [vmem:[#allocation21 + $0xd8] sm:$0xff]
    %v4558 = vld [vmem:[#allocation21 + $0xe0] sm:$0xff]
    %v4559 = vld [vmem:[#allocation21 + $0xe8] sm:$0xff]
    %v4560 = vld [vmem:[#allocation21 + $0xf0] sm:$0xff]
    %v4561 = vld [vmem:[#allocation21 + $0xf8] sm:$0xff]
    %v4562 = vpack.c.bf16 %v4528, %v4528
    %v4563 = vpack.c.bf16 %v4529, %v4529
    %v4564 = vld [vmem:[%s15 + $0x19] sm:$0x3]
    %v4565 = vunpack.c.l.bf16 %v4564
    %v4567 = vlaneseq
    %v4568 = vshrl.u32 %v4567, 7
    %v4569 = vsub.s32 0, %v4568
    %v4570 = vrot.slane %v4565, %v4569
    %v4571 = vlaneseq
    %v4572 = vshrl.u32 %v4571, 7
    %v4573 = vsub.s32 2, %v4572
    %v4574 = vrot.slane %v4565, %v4573
    %v4577 = vlaneseq
    %v4578 = vshrl.u32 %v4577, 7
    %v4579 = vsub.s32 0, %v4578
    %v4580 = vrot.slane %v4570, %v4579
    %v4581 = vlaneseq
    %v4582 = vshrl.u32 %v4581, 7
    %v4583 = vsub.s32 0, %v4582
    %v4584 = vrot.slane %v4574, %v4583
    %v4617 = vunpack.c.l.b16 %v4530
    %v4618 = vunpack.c.h.b16 %v4530
    %v4619 = vunpack.c.l.b16 %v4531
    %v4620 = vunpack.c.h.b16 %v4531
    %v4621 = vunpack.c.l.b16 %v4532
    %v4622 = vunpack.c.h.b16 %v4532
    %v4623 = vunpack.c.l.b16 %v4533
    %v4624 = vunpack.c.h.b16 %v4533
    %v4625 = vunpack.c.l.b16 %v4534
    %v4626 = vunpack.c.h.b16 %v4534
    %v4627 = vunpack.c.l.b16 %v4535
    %v4628 = vunpack.c.h.b16 %v4535
    %v4629 = vunpack.c.l.b16 %v4536
    %v4630 = vunpack.c.h.b16 %v4536
    %v4631 = vunpack.c.l.b16 %v4537
    %v4632 = vunpack.c.h.b16 %v4537
    %v4633 = vunpack.c.l.b16 %v4538
    %v4634 = vunpack.c.h.b16 %v4538
    %v4635 = vunpack.c.l.b16 %v4539
    %v4636 = vunpack.c.h.b16 %v4539
    %v4637 = vunpack.c.l.b16 %v4540
    %v4638 = vunpack.c.h.b16 %v4540
    %v4639 = vunpack.c.l.b16 %v4541
    %v4640 = vunpack.c.h.b16 %v4541
    %v4641 = vunpack.c.l.b16 %v4542
    %v4642 = vunpack.c.h.b16 %v4542
    %v4643 = vunpack.c.l.b16 %v4543
    %v4644 = vunpack.c.h.b16 %v4543
    %v4645 = vunpack.c.l.b16 %v4544
    %v4646 = vunpack.c.h.b16 %v4544
    %v4647 = vunpack.c.l.b16 %v4545
    %v4648 = vunpack.c.h.b16 %v4545
    %v4649 = vunpack.c.l.b16 %v4546
    %v4650 = vunpack.c.h.b16 %v4546
    %v4651 = vunpack.c.l.b16 %v4547
    %v4652 = vunpack.c.h.b16 %v4547
    %v4653 = vunpack.c.l.b16 %v4548
    %v4654 = vunpack.c.h.b16 %v4548
    %v4655 = vunpack.c.l.b16 %v4549
    %v4656 = vunpack.c.h.b16 %v4549
    %v4657 = vunpack.c.l.b16 %v4550
    %v4658 = vunpack.c.h.b16 %v4550
    %v4659 = vunpack.c.l.b16 %v4551
    %v4660 = vunpack.c.h.b16 %v4551
    %v4661 = vunpack.c.l.b16 %v4552
    %v4662 = vunpack.c.h.b16 %v4552
    %v4663 = vunpack.c.l.b16 %v4553
    %v4664 = vunpack.c.h.b16 %v4553
    %v4665 = vunpack.c.l.b16 %v4554
    %v4666 = vunpack.c.h.b16 %v4554
    %v4667 = vunpack.c.l.b16 %v4555
    %v4668 = vunpack.c.h.b16 %v4555
    %v4669 = vunpack.c.l.b16 %v4556
    %v4670 = vunpack.c.h.b16 %v4556
    %v4671 = vunpack.c.l.b16 %v4557
    %v4672 = vunpack.c.h.b16 %v4557
    %v4673 = vunpack.c.l.b16 %v4558
    %v4674 = vunpack.c.h.b16 %v4558
    %v4675 = vunpack.c.l.b16 %v4559
    %v4676 = vunpack.c.h.b16 %v4559
    %v4677 = vunpack.c.l.b16 %v4560
    %v4678 = vunpack.c.h.b16 %v4560
    %v4679 = vunpack.c.l.b16 %v4561
    %v4680 = vunpack.c.h.b16 %v4561
    %v4681 = vpack.c.b16 %v4619, %v4617
    %v4682 = vpack.c.b16 %v4620, %v4618
    %v4683 = vpack.c.b16 %v4623, %v4621
    %v4684 = vpack.c.b16 %v4624, %v4622
    %v4685 = vpack.c.b16 %v4627, %v4625
    %v4686 = vpack.c.b16 %v4628, %v4626
    %v4687 = vpack.c.b16 %v4631, %v4629
    %v4688 = vpack.c.b16 %v4632, %v4630
    %v4689 = vpack.c.b16 %v4635, %v4633
    %v4690 = vpack.c.b16 %v4636, %v4634
    %v4691 = vpack.c.b16 %v4639, %v4637
    %v4692 = vpack.c.b16 %v4640, %v4638
    %v4693 = vpack.c.b16 %v4643, %v4641
    %v4694 = vpack.c.b16 %v4644, %v4642
    %v4695 = vpack.c.b16 %v4647, %v4645
    %v4696 = vpack.c.b16 %v4648, %v4646
    %v4697 = vpack.c.b16 %v4651, %v4649
    %v4698 = vpack.c.b16 %v4652, %v4650
    %v4699 = vpack.c.b16 %v4655, %v4653
    %v4700 = vpack.c.b16 %v4656, %v4654
    %v4701 = vpack.c.b16 %v4659, %v4657
    %v4702 = vpack.c.b16 %v4660, %v4658
    %v4703 = vpack.c.b16 %v4663, %v4661
    %v4704 = vpack.c.b16 %v4664, %v4662
    %v4705 = vpack.c.b16 %v4667, %v4665
    %v4706 = vpack.c.b16 %v4668, %v4666
    %v4707 = vpack.c.b16 %v4671, %v4669
    %v4708 = vpack.c.b16 %v4672, %v4670
    %v4709 = vpack.c.b16 %v4675, %v4673
    %v4710 = vpack.c.b16 %v4676, %v4674
    %v4711 = vpack.c.b16 %v4679, %v4677
    %v4712 = vpack.c.b16 %v4680, %v4678
    %4745 = vmatprep.subr.bf16.mxu0 %v4682
    %4746 = vmatpush1.bf16.msra.mxu0 %v4681
    %4747 = vmatprep.subr.bf16.mxu0 %v4684
    %4748 = vmatpush1.bf16.msra.mxu0 %v4683
    %4749 = vmatprep.subr.bf16.mxu0 %v4686
    %4750 = vmatpush1.bf16.msra.mxu0 %v4685
    %4751 = vmatprep.subr.bf16.mxu0 %v4688
    %4752 = vmatpush1.bf16.msra.mxu0 %v4687
    %4753 = vmatprep.subr.bf16.mxu0 %v4690
    %4754 = vmatpush1.bf16.msra.mxu0 %v4689
    %4755 = vmatprep.subr.bf16.mxu0 %v4692
    %4756 = vmatpush1.bf16.msra.mxu0 %v4691
    %4757 = vmatprep.subr.bf16.mxu0 %v4694
    %4758 = vmatpush1.bf16.msra.mxu0 %v4693
    %4759 = vmatprep.subr.bf16.mxu0 %v4696
    %4760 = vmatpush1.bf16.msra.mxu0 %v4695
    %4761 = vmatprep.subr.bf16.mxu0 %v4698
    %4762 = vmatpush1.bf16.msra.mxu0 %v4697
    %4763 = vmatprep.subr.bf16.mxu0 %v4700
    %4764 = vmatpush1.bf16.msra.mxu0 %v4699
    %4765 = vmatprep.subr.bf16.mxu0 %v4702
    %4766 = vmatpush1.bf16.msra.mxu0 %v4701
    %4767 = vmatprep.subr.bf16.mxu0 %v4704
    %4768 = vmatpush1.bf16.msra.mxu0 %v4703
    %4769 = vmatprep.subr.bf16.mxu0 %v4706
    %4770 = vmatpush1.bf16.msra.mxu0 %v4705
    %4771 = vmatprep.subr.bf16.mxu0 %v4708
    %4772 = vmatpush1.bf16.msra.mxu0 %v4707
    %4773 = vmatprep.subr.bf16.mxu0 %v4710
    %4774 = vmatpush1.bf16.msra.mxu0 %v4709
    %4775 = vmatprep.subr.bf16.mxu0 %v4712
    %4776 = vmatpush1.bf16.msra.mxu0 %v4711
    %4777 = vmatprep.mubr.bf16.mxu0 %v4563
    %4778 = vmatmul.mubr.bf16.gmra.mrb[0].mxu0 %v4562
    %v4779 = vpop.f32.mrb[0].mxu0
    %v4780 = vadd.f32 %v4580, %v4779
    %v4781 = vpop.f32.mrb[0].mxu0
    %v4782 = vadd.f32 %v4584, %v4781
    %v4783 = vpop.f32.mrb[0].mxu0
    %v4784 = vpop.f32.mrb[0].mxu0
    %4785 = vdwg.mxu0
    %v4786 = vmax.f32 %v4780, 0.0
    %v4787 = vmax.f32 %v4782, 0.0
    %4788 = vst [vmem:[#allocation2] sm:$0xff] %v4786
    %4789 = vst [vmem:[#allocation2 + $0x8] sm:$0xff] %v4787
    %v4790 = vld [vmem:[#allocation2] sm:$0xff]
    %v4791 = vld [vmem:[#allocation2 + $0x8] sm:$0xff]
    %v4792 = vld [vmem:[#allocation23] sm:$0xff]
    %v4793 = vld [vmem:[#allocation23 + $0x8] sm:$0xff]
    %v4794 = vld [vmem:[#allocation23 + $0x10] sm:$0xff]
    %v4795 = vld [vmem:[#allocation23 + $0x18] sm:$0xff]
    %v4796 = vld [vmem:[#allocation23 + $0x20] sm:$0xff]
    %v4797 = vld [vmem:[#allocation23 + $0x28] sm:$0xff]
    %v4798 = vld [vmem:[#allocation23 + $0x30] sm:$0xff]
    %v4799 = vld [vmem:[#allocation23 + $0x38] sm:$0xff]
    %v4800 = vld [vmem:[#allocation23 + $0x40] sm:$0xff]
    %v4801 = vld [vmem:[#allocation23 + $0x48] sm:$0xff]
    %v4802 = vld [vmem:[#allocation23 + $0x50] sm:$0xff]
    %v4803 = vld [vmem:[#allocation23 + $0x58] sm:$0xff]
    %v4804 = vld [vmem:[#allocation23 + $0x60] sm:$0xff]
    %v4805 = vld [vmem:[#allocation23 + $0x68] sm:$0xff]
    %v4806 = vld [vmem:[#allocation23 + $0x70] sm:$0xff]
    %v4807 = vld [vmem:[#allocation23 + $0x78] sm:$0xff]
    %v4808 = vld [vmem:[#allocation23 + $0x80] sm:$0xff]
    %v4809 = vld [vmem:[#allocation23 + $0x88] sm:$0xff]
    %v4810 = vld [vmem:[#allocation23 + $0x90] sm:$0xff]
    %v4811 = vld [vmem:[#allocation23 + $0x98] sm:$0xff]
    %v4812 = vld [vmem:[#allocation23 + $0xa0] sm:$0xff]
    %v4813 = vld [vmem:[#allocation23 + $0xa8] sm:$0xff]
    %v4814 = vld [vmem:[#allocation23 + $0xb0] sm:$0xff]
    %v4815 = vld [vmem:[#allocation23 + $0xb8] sm:$0xff]
    %v4816 = vld [vmem:[#allocation23 + $0xc0] sm:$0xff]
    %v4817 = vld [vmem:[#allocation23 + $0xc8] sm:$0xff]
    %v4818 = vld [vmem:[#allocation23 + $0xd0] sm:$0xff]
    %v4819 = vld [vmem:[#allocation23 + $0xd8] sm:$0xff]
    %v4820 = vld [vmem:[#allocation23 + $0xe0] sm:$0xff]
    %v4821 = vld [vmem:[#allocation23 + $0xe8] sm:$0xff]
    %v4822 = vld [vmem:[#allocation23 + $0xf0] sm:$0xff]
    %v4823 = vld [vmem:[#allocation23 + $0xf8] sm:$0xff]
    %v4824 = vpack.c.bf16 %v4790, %v4790
    %v4825 = vpack.c.bf16 %v4791, %v4791
    %v4826 = vld [vmem:[%s15 + $0x1b] sm:$0x3]
    %v4827 = vunpack.c.l.bf16 %v4826
    %v4829 = vlaneseq
    %v4830 = vshrl.u32 %v4829, 7
    %v4831 = vsub.s32 0, %v4830
    %v4832 = vrot.slane %v4827, %v4831
    %v4833 = vlaneseq
    %v4834 = vshrl.u32 %v4833, 7
    %v4835 = vsub.s32 2, %v4834
    %v4836 = vrot.slane %v4827, %v4835
    %v4839 = vlaneseq
    %v4840 = vshrl.u32 %v4839, 7
    %v4841 = vsub.s32 0, %v4840
    %v4842 = vrot.slane %v4832, %v4841
    %v4843 = vlaneseq
    %v4844 = vshrl.u32 %v4843, 7
    %v4845 = vsub.s32 0, %v4844
    %v4846 = vrot.slane %v4836, %v4845
    %v4879 = vunpack.c.l.b16 %v4792
    %v4880 = vunpack.c.h.b16 %v4792
    %v4881 = vunpack.c.l.b16 %v4793
    %v4882 = vunpack.c.h.b16 %v4793
    %v4883 = vunpack.c.l.b16 %v4794
    %v4884 = vunpack.c.h.b16 %v4794
    %v4885 = vunpack.c.l.b16 %v4795
    %v4886 = vunpack.c.h.b16 %v4795
    %v4887 = vunpack.c.l.b16 %v4796
    %v4888 = vunpack.c.h.b16 %v4796
    %v4889 = vunpack.c.l.b16 %v4797
    %v4890 = vunpack.c.h.b16 %v4797
    %v4891 = vunpack.c.l.b16 %v4798
    %v4892 = vunpack.c.h.b16 %v4798
    %v4893 = vunpack.c.l.b16 %v4799
    %v4894 = vunpack.c.h.b16 %v4799
    %v4895 = vunpack.c.l.b16 %v4800
    %v4896 = vunpack.c.h.b16 %v4800
    %v4897 = vunpack.c.l.b16 %v4801
    %v4898 = vunpack.c.h.b16 %v4801
    %v4899 = vunpack.c.l.b16 %v4802
    %v4900 = vunpack.c.h.b16 %v4802
    %v4901 = vunpack.c.l.b16 %v4803
    %v4902 = vunpack.c.h.b16 %v4803
    %v4903 = vunpack.c.l.b16 %v4804
    %v4904 = vunpack.c.h.b16 %v4804
    %v4905 = vunpack.c.l.b16 %v4805
    %v4906 = vunpack.c.h.b16 %v4805
    %v4907 = vunpack.c.l.b16 %v4806
    %v4908 = vunpack.c.h.b16 %v4806
    %v4909 = vunpack.c.l.b16 %v4807
    %v4910 = vunpack.c.h.b16 %v4807
    %v4911 = vunpack.c.l.b16 %v4808
    %v4912 = vunpack.c.h.b16 %v4808
    %v4913 = vunpack.c.l.b16 %v4809
    %v4914 = vunpack.c.h.b16 %v4809
    %v4915 = vunpack.c.l.b16 %v4810
    %v4916 = vunpack.c.h.b16 %v4810
    %v4917 = vunpack.c.l.b16 %v4811
    %v4918 = vunpack.c.h.b16 %v4811
    %v4919 = vunpack.c.l.b16 %v4812
    %v4920 = vunpack.c.h.b16 %v4812
    %v4921 = vunpack.c.l.b16 %v4813
    %v4922 = vunpack.c.h.b16 %v4813
    %v4923 = vunpack.c.l.b16 %v4814
    %v4924 = vunpack.c.h.b16 %v4814
    %v4925 = vunpack.c.l.b16 %v4815
    %v4926 = vunpack.c.h.b16 %v4815
    %v4927 = vunpack.c.l.b16 %v4816
    %v4928 = vunpack.c.h.b16 %v4816
    %v4929 = vunpack.c.l.b16 %v4817
    %v4930 = vunpack.c.h.b16 %v4817
    %v4931 = vunpack.c.l.b16 %v4818
    %v4932 = vunpack.c.h.b16 %v4818
    %v4933 = vunpack.c.l.b16 %v4819
    %v4934 = vunpack.c.h.b16 %v4819
    %v4935 = vunpack.c.l.b16 %v4820
    %v4936 = vunpack.c.h.b16 %v4820
    %v4937 = vunpack.c.l.b16 %v4821
    %v4938 = vunpack.c.h.b16 %v4821
    %v4939 = vunpack.c.l.b16 %v4822
    %v4940 = vunpack.c.h.b16 %v4822
    %v4941 = vunpack.c.l.b16 %v4823
    %v4942 = vunpack.c.h.b16 %v4823
    %v4943 = vpack.c.b16 %v4881, %v4879
    %v4944 = vpack.c.b16 %v4882, %v4880
    %v4945 = vpack.c.b16 %v4885, %v4883
    %v4946 = vpack.c.b16 %v4886, %v4884
    %v4947 = vpack.c.b16 %v4889, %v4887
    %v4948 = vpack.c.b16 %v4890, %v4888
    %v4949 = vpack.c.b16 %v4893, %v4891
    %v4950 = vpack.c.b16 %v4894, %v4892
    %v4951 = vpack.c.b16 %v4897, %v4895
    %v4952 = vpack.c.b16 %v4898, %v4896
    %v4953 = vpack.c.b16 %v4901, %v4899
    %v4954 = vpack.c.b16 %v4902, %v4900
    %v4955 = vpack.c.b16 %v4905, %v4903
    %v4956 = vpack.c.b16 %v4906, %v4904
    %v4957 = vpack.c.b16 %v4909, %v4907
    %v4958 = vpack.c.b16 %v4910, %v4908
    %v4959 = vpack.c.b16 %v4913, %v4911
    %v4960 = vpack.c.b16 %v4914, %v4912
    %v4961 = vpack.c.b16 %v4917, %v4915
    %v4962 = vpack.c.b16 %v4918, %v4916
    %v4963 = vpack.c.b16 %v4921, %v4919
    %v4964 = vpack.c.b16 %v4922, %v4920
    %v4965 = vpack.c.b16 %v4925, %v4923
    %v4966 = vpack.c.b16 %v4926, %v4924
    %v4967 = vpack.c.b16 %v4929, %v4927
    %v4968 = vpack.c.b16 %v4930, %v4928
    %v4969 = vpack.c.b16 %v4933, %v4931
    %v4970 = vpack.c.b16 %v4934, %v4932
    %v4971 = vpack.c.b16 %v4937, %v4935
    %v4972 = vpack.c.b16 %v4938, %v4936
    %v4973 = vpack.c.b16 %v4941, %v4939
    %v4974 = vpack.c.b16 %v4942, %v4940
    %5007 = vmatprep.subr.bf16.mxu0 %v4944
    %5008 = vmatpush1.bf16.msra.mxu0 %v4943
    %5009 = vmatprep.subr.bf16.mxu0 %v4946
    %5010 = vmatpush1.bf16.msra.mxu0 %v4945
    %5011 = vmatprep.subr.bf16.mxu0 %v4948
    %5012 = vmatpush1.bf16.msra.mxu0 %v4947
    %5013 = vmatprep.subr.bf16.mxu0 %v4950
    %5014 = vmatpush1.bf16.msra.mxu0 %v4949
    %5015 = vmatprep.subr.bf16.mxu0 %v4952
    %5016 = vmatpush1.bf16.msra.mxu0 %v4951
    %5017 = vmatprep.subr.bf16.mxu0 %v4954
    %5018 = vmatpush1.bf16.msra.mxu0 %v4953
    %5019 = vmatprep.subr.bf16.mxu0 %v4956
    %5020 = vmatpush1.bf16.msra.mxu0 %v4955
    %5021 = vmatprep.subr.bf16.mxu0 %v4958
    %5022 = vmatpush1.bf16.msra.mxu0 %v4957
    %5023 = vmatprep.subr.bf16.mxu0 %v4960
    %5024 = vmatpush1.bf16.msra.mxu0 %v4959
    %5025 = vmatprep.subr.bf16.mxu0 %v4962
    %5026 = vmatpush1.bf16.msra.mxu0 %v4961
    %5027 = vmatprep.subr.bf16.mxu0 %v4964
    %5028 = vmatpush1.bf16.msra.mxu0 %v4963
    %5029 = vmatprep.subr.bf16.mxu0 %v4966
    %5030 = vmatpush1.bf16.msra.mxu0 %v4965
    %5031 = vmatprep.subr.bf16.mxu0 %v4968
    %5032 = vmatpush1.bf16.msra.mxu0 %v4967
    %5033 = vmatprep.subr.bf16.mxu0 %v4970
    %5034 = vmatpush1.bf16.msra.mxu0 %v4969
    %5035 = vmatprep.subr.bf16.mxu0 %v4972
    %5036 = vmatpush1.bf16.msra.mxu0 %v4971
    %5037 = vmatprep.subr.bf16.mxu0 %v4974
    %5038 = vmatpush1.bf16.msra.mxu0 %v4973
    %5039 = vmatprep.mubr.bf16.mxu0 %v4825
    %5040 = vmatmul.mubr.bf16.gmra.mrb[0].mxu0 %v4824
    %v5041 = vpop.f32.mrb[0].mxu0
    %v5042 = vadd.f32 %v4842, %v5041
    %v5043 = vpop.f32.mrb[0].mxu0
    %v5044 = vadd.f32 %v4846, %v5043
    %v5045 = vpop.f32.mrb[0].mxu0
    %v5046 = vpop.f32.mrb[0].mxu0
    %5047 = vdwg.mxu0
    %v5048 = vmax.f32 %v5042, 0.0
    %v5049 = vmax.f32 %v5044, 0.0
    %5050 = vst [vmem:[#allocation2] sm:$0xff] %v5048
    %5051 = vst [vmem:[#allocation2 + $0x8] sm:$0xff] %v5049
    %v5052 = vld [vmem:[#allocation2] sm:$0xff]
    %v5053 = vld [vmem:[#allocation2 + $0x8] sm:$0xff]
    %v5054 = vld [vmem:[#allocation24] sm:$0xf]
    %v5055 = vld [vmem:[#allocation24 + $0x4] sm:$0xf]
    %v5056 = vld [vmem:[#allocation24 + $0x8] sm:$0xf]
    %v5057 = vld [vmem:[#allocation24 + $0xc] sm:$0xf]
    %v5058 = vld [vmem:[#allocation24 + $0x10] sm:$0xf]
    %v5059 = vld [vmem:[#allocation24 + $0x14] sm:$0xf]
    %v5060 = vld [vmem:[#allocation24 + $0x18] sm:$0xf]
    %v5061 = vld [vmem:[#allocation24 + $0x1c] sm:$0xf]
    %v5062 = vld [vmem:[#allocation24 + $0x20] sm:$0xf]
    %v5063 = vld [vmem:[#allocation24 + $0x24] sm:$0xf]
    %v5064 = vld [vmem:[#allocation24 + $0x28] sm:$0xf]
    %v5065 = vld [vmem:[#allocation24 + $0x2c] sm:$0xf]
    %v5066 = vld [vmem:[#allocation24 + $0x30] sm:$0xf]
    %v5067 = vld [vmem:[#allocation24 + $0x34] sm:$0xf]
    %v5068 = vld [vmem:[#allocation24 + $0x38] sm:$0xf]
    %v5069 = vld [vmem:[#allocation24 + $0x3c] sm:$0xf]
    %v5070 = vld [vmem:[#allocation24 + $0x40] sm:$0xf]
    %v5071 = vld [vmem:[#allocation24 + $0x44] sm:$0xf]
    %v5072 = vld [vmem:[#allocation24 + $0x48] sm:$0xf]
    %v5073 = vld [vmem:[#allocation24 + $0x4c] sm:$0xf]
    %v5074 = vld [vmem:[#allocation24 + $0x50] sm:$0xf]
    %v5075 = vld [vmem:[#allocation24 + $0x54] sm:$0xf]
    %v5076 = vld [vmem:[#allocation24 + $0x58] sm:$0xf]
    %v5077 = vld [vmem:[#allocation24 + $0x5c] sm:$0xf]
    %v5078 = vld [vmem:[#allocation24 + $0x60] sm:$0xf]
    %v5079 = vld [vmem:[#allocation24 + $0x64] sm:$0xf]
    %v5080 = vld [vmem:[#allocation24 + $0x68] sm:$0xf]
    %v5081 = vld [vmem:[#allocation24 + $0x6c] sm:$0xf]
    %v5082 = vld [vmem:[#allocation24 + $0x70] sm:$0xf]
    %v5083 = vld [vmem:[#allocation24 + $0x74] sm:$0xf]
    %v5084 = vld [vmem:[#allocation24 + $0x78] sm:$0xf]
    %v5085 = vld [vmem:[#allocation24 + $0x7c] sm:$0xf]
    %v5086 = vpack.c.bf16 %v5052, %v5052
    %v5087 = vpack.c.bf16 %v5053, %v5053
    %v5088 = vld [vmem:[%s15 + $0x1d] sm:$0x1]
    %v5089 = vunpack.c.l.bf16 %v5088
    %v5090 = vlaneseq
    %v5091 = vshrl.u32 %v5090, 7
    %v5092 = vsub.s32 0, %v5091
    %v5093 = vrot.slane %v5089, %v5092
    %v5126 = vunpack.c.l.b16 %v5054
    %v5127 = vunpack.c.l.b16 %v5055
    %v5128 = vunpack.c.l.b16 %v5056
    %v5129 = vunpack.c.l.b16 %v5057
    %v5130 = vunpack.c.l.b16 %v5058
    %v5131 = vunpack.c.l.b16 %v5059
    %v5132 = vunpack.c.l.b16 %v5060
    %v5133 = vunpack.c.l.b16 %v5061
    %v5134 = vunpack.c.l.b16 %v5062
    %v5135 = vunpack.c.l.b16 %v5063
    %v5136 = vunpack.c.l.b16 %v5064
    %v5137 = vunpack.c.l.b16 %v5065
    %v5138 = vunpack.c.l.b16 %v5066
    %v5139 = vunpack.c.l.b16 %v5067
    %v5140 = vunpack.c.l.b16 %v5068
    %v5141 = vunpack.c.l.b16 %v5069
    %v5142 = vunpack.c.l.b16 %v5070
    %v5143 = vunpack.c.l.b16 %v5071
    %v5144 = vunpack.c.l.b16 %v5072
    %v5145 = vunpack.c.l.b16 %v5073
    %v5146 = vunpack.c.l.b16 %v5074
    %v5147 = vunpack.c.l.b16 %v5075
    %v5148 = vunpack.c.l.b16 %v5076
    %v5149 = vunpack.c.l.b16 %v5077
    %v5150 = vunpack.c.l.b16 %v5078
    %v5151 = vunpack.c.l.b16 %v5079
    %v5152 = vunpack.c.l.b16 %v5080
    %v5153 = vunpack.c.l.b16 %v5081
    %v5154 = vunpack.c.l.b16 %v5082
    %v5155 = vunpack.c.l.b16 %v5083
    %v5156 = vunpack.c.l.b16 %v5084
    %v5157 = vunpack.c.l.b16 %v5085
    %v5158 = vpack.c.b16 %v5127, %v5126
    %v5159 = vpack.c.b16 %v5129, %v5128
    %v5160 = vpack.c.b16 %v5131, %v5130
    %v5161 = vpack.c.b16 %v5133, %v5132
    %v5162 = vpack.c.b16 %v5135, %v5134
    %v5163 = vpack.c.b16 %v5137, %v5136
    %v5164 = vpack.c.b16 %v5139, %v5138
    %v5165 = vpack.c.b16 %v5141, %v5140
    %v5166 = vpack.c.b16 %v5143, %v5142
    %v5167 = vpack.c.b16 %v5145, %v5144
    %v5168 = vpack.c.b16 %v5147, %v5146
    %v5169 = vpack.c.b16 %v5149, %v5148
    %v5170 = vpack.c.b16 %v5151, %v5150
    %v5171 = vpack.c.b16 %v5153, %v5152
    %v5172 = vpack.c.b16 %v5155, %v5154
    %v5173 = vpack.c.b16 %v5157, %v5156
    %5190 = vmatprep.subr.bf16.mxu0 0
    %5191 = vmatpush1.bf16.msra.mxu0 %v5158
    %5192 = vmatprep.subr.bf16.mxu0 0
    %5193 = vmatpush1.bf16.msra.mxu0 %v5159
    %5194 = vmatprep.subr.bf16.mxu0 0
    %5195 = vmatpush1.bf16.msra.mxu0 %v5160
    %5196 = vmatprep.subr.bf16.mxu0 0
    %5197 = vmatpush1.bf16.msra.mxu0 %v5161
    %5198 = vmatprep.subr.bf16.mxu0 0
    %5199 = vmatpush1.bf16.msra.mxu0 %v5162
    %5200 = vmatprep.subr.bf16.mxu0 0
    %5201 = vmatpush1.bf16.msra.mxu0 %v5163
    %5202 = vmatprep.subr.bf16.mxu0 0
    %5203 = vmatpush1.bf16.msra.mxu0 %v5164
    %5204 = vmatprep.subr.bf16.mxu0 0
    %5205 = vmatpush1.bf16.msra.mxu0 %v5165
    %5206 = vmatprep.subr.bf16.mxu0 0
    %5207 = vmatpush1.bf16.msra.mxu0 %v5166
    %5208 = vmatprep.subr.bf16.mxu0 0
    %5209 = vmatpush1.bf16.msra.mxu0 %v5167
    %5210 = vmatprep.subr.bf16.mxu0 0
    %5211 = vmatpush1.bf16.msra.mxu0 %v5168
    %5212 = vmatprep.subr.bf16.mxu0 0
    %5213 = vmatpush1.bf16.msra.mxu0 %v5169
    %5214 = vmatprep.subr.bf16.mxu0 0
    %5215 = vmatpush1.bf16.msra.mxu0 %v5170
    %5216 = vmatprep.subr.bf16.mxu0 0
    %5217 = vmatpush1.bf16.msra.mxu0 %v5171
    %5218 = vmatprep.subr.bf16.mxu0 0
    %5219 = vmatpush1.bf16.msra.mxu0 %v5172
    %5220 = vmatprep.subr.bf16.mxu0 0
    %5221 = vmatpush1.bf16.msra.mxu0 %v5173
    %5222 = vmatprep.mubr.bf16.mxu0 %v5087
    %5223 = vmatmul.mubr.bf16.gmra.mrb[0].mxu0 %v5086
    %v5224 = vpop.f32.mrb[0].mxu0
    %v5225 = vadd.f32 %v5093, %v5224
    %v5226 = vpop.f32.mrb[0].mxu0
    %v5227 = vpop.f32.mrb[0].mxu0
    %v5228 = vpop.f32.mrb[0].mxu0
    %5229 = vdwg.mxu0
    %v5230 = vmax.f32 %v5225, 0.0
    %5231 = vst [vmem:[#allocation2] sm:$0xff] %v5230
    %v5232 = vld [vmem:[#allocation2] sm:$0xff]
    %v5233 = vld [vmem:[#allocation26] sm:$0xf]
    %v5234 = vld [vmem:[#allocation26 + $0x4] sm:$0xf]
    %v5235 = vld [vmem:[#allocation26 + $0x8] sm:$0xf]
    %v5236 = vld [vmem:[#allocation26 + $0xc] sm:$0xf]
    %v5237 = vld [vmem:[#allocation26 + $0x10] sm:$0xf]
    %v5238 = vld [vmem:[#allocation26 + $0x14] sm:$0xf]
    %v5239 = vld [vmem:[#allocation26 + $0x18] sm:$0xf]
    %v5240 = vld [vmem:[#allocation26 + $0x1c] sm:$0xf]
    %v5241 = vld [vmem:[#allocation26 + $0x20] sm:$0xf]
    %v5242 = vld [vmem:[#allocation26 + $0x24] sm:$0xf]
    %v5243 = vld [vmem:[#allocation26 + $0x28] sm:$0xf]
    %v5244 = vld [vmem:[#allocation26 + $0x2c] sm:$0xf]
    %v5245 = vld [vmem:[#allocation26 + $0x30] sm:$0xf]
    %v5246 = vld [vmem:[#allocation26 + $0x34] sm:$0xf]
    %v5247 = vld [vmem:[#allocation26 + $0x38] sm:$0xf]
    %v5248 = vld [vmem:[#allocation26 + $0x3c] sm:$0xf]
    %v5249 = vpack.c.bf16 %v5232, %v5232
    %v5250 = vld [vmem:[%s15 + $0x1e] sm:$0x1]
    %v5251 = vunpack.c.l.bf16 %v5250
    %v5252 = vlaneseq
    %v5253 = vshrl.u32 %v5252, 7
    %v5254 = vsub.s32 0, %v5253
    %v5255 = vrot.slane %v5251, %v5254
    %v5272 = vunpack.c.l.b16 %v5233
    %v5273 = vunpack.c.l.b16 %v5234
    %v5274 = vunpack.c.l.b16 %v5235
    %v5275 = vunpack.c.l.b16 %v5236
    %v5276 = vunpack.c.l.b16 %v5237
    %v5277 = vunpack.c.l.b16 %v5238
    %v5278 = vunpack.c.l.b16 %v5239
    %v5279 = vunpack.c.l.b16 %v5240
    %v5280 = vunpack.c.l.b16 %v5241
    %v5281 = vunpack.c.l.b16 %v5242
    %v5282 = vunpack.c.l.b16 %v5243
    %v5283 = vunpack.c.l.b16 %v5244
    %v5284 = vunpack.c.l.b16 %v5245
    %v5285 = vunpack.c.l.b16 %v5246
    %v5286 = vunpack.c.l.b16 %v5247
    %v5287 = vunpack.c.l.b16 %v5248
    %v5288 = vpack.c.b16 %v5273, %v5272
    %v5289 = vpack.c.b16 %v5275, %v5274
    %v5290 = vpack.c.b16 %v5277, %v5276
    %v5291 = vpack.c.b16 %v5279, %v5278
    %v5292 = vpack.c.b16 %v5281, %v5280
    %v5293 = vpack.c.b16 %v5283, %v5282
    %v5294 = vpack.c.b16 %v5285, %v5284
    %v5295 = vpack.c.b16 %v5287, %v5286
    %5304 = vmatprep.subr.bf16.mxu0 0
    %5305 = vmatpush1.bf16.msra.mxu0 %v5288
    %5306 = vmatprep.subr.bf16.mxu0 0
    %5307 = vmatpush1.bf16.msra.mxu0 %v5289
    %5308 = vmatprep.subr.bf16.mxu0 0
    %5309 = vmatpush1.bf16.msra.mxu0 %v5290
    %5310 = vmatprep.subr.bf16.mxu0 0
    %5311 = vmatpush1.bf16.msra.mxu0 %v5291
    %5312 = vmatprep.subr.bf16.mxu0 0
    %5313 = vmatpush1.bf16.msra.mxu0 %v5292
    %5314 = vmatprep.subr.bf16.mxu0 0
    %5315 = vmatpush1.bf16.msra.mxu0 %v5293
    %5316 = vmatprep.subr.bf16.mxu0 0
    %5317 = vmatpush1.bf16.msra.mxu0 %v5294
    %5318 = vmatprep.subr.bf16.mxu0 0
    %5319 = vmatpush1.bf16.msra.mxu0 %v5295
    %5320 = vmatprep.subr.bf16.mxu0 0
    %5321 = vmatpush1.bf16.msra.mxu0 0
    %5322 = vmatprep.subr.bf16.mxu0 0
    %5323 = vmatpush1.bf16.msra.mxu0 0
    %5324 = vmatprep.subr.bf16.mxu0 0
    %5325 = vmatpush1.bf16.msra.mxu0 0
    %5326 = vmatprep.subr.bf16.mxu0 0
    %5327 = vmatpush1.bf16.msra.mxu0 0
    %5328 = vmatprep.subr.bf16.mxu0 0
    %5329 = vmatpush1.bf16.msra.mxu0 0
    %5330 = vmatprep.subr.bf16.mxu0 0
    %5331 = vmatpush1.bf16.msra.mxu0 0
    %5332 = vmatprep.subr.bf16.mxu0 0
    %5333 = vmatpush1.bf16.msra.mxu0 0
    %5334 = vmatprep.subr.bf16.mxu0 0
    %5335 = vmatpush1.bf16.msra.mxu0 0
    %5336 = vmatprep.mubr.bf16.mxu0 0
    %5337 = vmatmul.mubr.bf16.gmra.mrb[0].mxu0 %v5249
    %v5338 = vpop.f32.mrb[0].mxu0
    %v5339 = vadd.f32 %v5255, %v5338
    %v5340 = vpop.f32.mrb[0].mxu0
    %v5341 = vpop.f32.mrb[0].mxu0
    %v5342 = vpop.f32.mrb[0].mxu0
    %5343 = vdwg.mxu0
    %5344 = vst [vmem:[#allocation27] sm:$0xff] %v5339
    // Predicated region
    $region126: #{net_forward.1} parent=1 // pred_check
      _
    $region127: #{net_forward.1} parent=1 // pred_check_branch
      %5346 = sbr.rel (0) target = $region129
    $region128: #{net_forward.1} parent=1 // pred_region
      %s5348 = ssub.s32 128, 128
      %5349 = vsyncadd [#allocation5], %s5348
      %s5351 = sshll.u32 [#allocation27], 4
      %s5352 = int_to_ptr.vmem [resolvable:$true] %s5351
      %5354 = dma.vmem_to_hbm [thread:$0]  %s5352, 128, %s16, [#allocation5]
    $region129: #{net_forward.1} parent=1 // pred_fallthru
      _
    // Predicated region
    $region130: #{net_forward.1} parent=1 // pred_check
      _
    $region131: #{net_forward.1} parent=1 // pred_check_branch
      %5356 = sbr.rel (0) target = $region133
    $region132: #{net_forward.1} parent=1 // pred_region
      %5357 = dma.done [#allocation5], 128
    $region133: #{net_forward.1} parent=1 // pred_fallthru
      _
    %5358 = vsyncpa [#allocation4], 1
    %5359 = vsyncpa [#allocation7], 1
    %5360 = vsyncpa [#allocation10], 1
    %5361 = vsyncpa [#allocation13], 1
    %5362 = vsyncpa [#allocation16], 1
    %5363 = vsyncpa [#allocation19], 1
    %5364 = vsyncpa [#allocation22], 1
    %5365 = vsyncpa [#allocation25], 1
    %5366 = vsyncpa [#allocation5], 1

</llo_original>
